<compile_context>
chip_gen: v6e
topology: v6e:2x2x1
jax: 0.10.0
libtpu: 0.0.40
codegen_flags: <defaults>
</compile_context>

<pallas_src>
import math

import jax
import jax.numpy as jnp
from jax.experimental import pallas as pl
from jax.experimental.pallas import tpu as pltpu

# ---------------- problem sizes (small, consistent with the module) ----------------
B = 2           # batch
T = 8           # target sequence length
S = 8           # source (encoder) sequence length
D = 32          # d_model (true feature width)
H = 4           # heads
DK = D // H     # 8
D_FF = 64
DP = 128        # lane-padded d_model
FP = 128        # lane-padded d_ff
EPS = 1e-6
SCALE = 1.0 / math.sqrt(DK)
NEG = -1e30     # additive mask bias for "blocked" positions

# Column offsets of the 128-aligned blocks inside the packed (128, 896) weight slab.
OFF_QKV_S = 0 * DP    # cols 0:32 Wq_s | 32:64 Wk_s | 64:96 Wv_s | 96:128 zero
OFF_WO_S  = 1 * DP
OFF_Q_C   = 2 * DP
OFF_KV_C  = 3 * DP    # cols 0:32 Wk_c | 32:64 Wv_c | rest zero
OFF_WO_C  = 4 * DP
OFF_W1    = 5 * DP
OFF_W2    = 6 * DP
W_SLAB_COLS = 7 * DP

# Row indices inside the packed (16, 128) vector slab.
ROW_A0, ROW_BE0, ROW_A1, ROW_BE1, ROW_A2, ROW_BE2, ROW_B1, ROW_B2, ROW_LMASK = range(9)
V_SLAB_ROWS = 16


def decoder_block_kernel(x_ref, enc_ref, tbias_ref, sbias_ref, w_ref, v_ref, out_ref):
    f32 = jnp.float32
    x = x_ref[...]        # (B*T, DP), lanes >= D are exactly zero
    enc = enc_ref[...]    # (B*S, DP)
    lmask = v_ref[ROW_LMASK:ROW_LMASK + 1, :]   # (1, DP), 1.0 for lanes < D

    def layernorm(h, a_row, b_row):
        # Matches LayerNormalization: mean / unbiased std (N-1), divide by (std + eps).
        alpha = v_ref[a_row:a_row + 1, :]
        beta = v_ref[b_row:b_row + 1, :]
        mean = jnp.sum(h, axis=-1, keepdims=True) * (1.0 / D)   # padded lanes are zero
        diff = (h - mean) * lmask                               # zero the padded lanes
        var = jnp.sum(diff * diff, axis=-1, keepdims=True) * (1.0 / (D - 1))
        inv = pl.reciprocal(jnp.sqrt(var) + EPS)                # exact reciprocal (EUP)
        return alpha * (diff * inv) + beta                      # padded lanes stay zero

    def softmax(s):
        m = jnp.max(s, axis=-1, keepdims=True)
        e = jnp.exp(s - m)
        return e * pl.reciprocal(jnp.sum(e, axis=-1, keepdims=True))

    def split_heads(blk, col0):
        # blk: (B, t, DP) projection value -> (H*B, t, DK) with head-major batch.
        return jnp.concatenate(
            [blk[:, :, col0 + h * DK: col0 + (h + 1) * DK] for h in range(H)], axis=0)

    def attention(q_bh, k_bh, v_bh, bias, t_q):
        # NOTE: a fully-masked row degenerates to uniform attention (latent difference
        # vs. masked_fill(-inf)); unreachable with causal / all-ones masks here.
        s = jnp.einsum('bqd,bkd->bqk', q_bh, k_bh,
                       preferred_element_type=f32) * SCALE + bias     # (H*B, t_q, t_kv)
        p = softmax(s)
        c = jnp.einsum('bqk,bkd->bqd', p, v_bh, preferred_element_type=f32)  # (H*B, t_q, DK)
        # Rebuild (B, t_q, DP): heads concatenated in order h=0..H-1, then zero-pad
        # lanes D..DP so the Wo matmul input is already lane-padded.
        zpad = jnp.zeros((B, t_q, DP - D), f32)
        ctx = jnp.concatenate([c[h * B:(h + 1) * B] for h in range(H)] + [zpad], axis=-1)
        return ctx.reshape(B * t_q, DP)

    def proj(h2, off, width=DP):
        return jnp.dot(h2, w_ref[:, off:off + width], preferred_element_type=f32)

    # ---- residual 1: masked self-attention (dropout = identity in eval) ----
    n0 = layernorm(x, ROW_A0, ROW_BE0)
    qkv = proj(n0, OFF_QKV_S).reshape(B, T, DP)          # one fused Q|K|V matmul
    ctx = attention(split_heads(qkv, 0), split_heads(qkv, D), split_heads(qkv, 2 * D),
                    tbias_ref[...], T)
    x = x + proj(ctx, OFF_WO_S)

    # ---- residual 2: cross-attention over encoder output ----
    n1 = layernorm(x, ROW_A1, ROW_BE1)
    qc = proj(n1, OFF_Q_C).reshape(B, T, DP)
    kv = proj(enc, OFF_KV_C).reshape(B, S, DP)           # one fused K|V matmul
    ctx = attention(split_heads(qc, 0), split_heads(kv, 0), split_heads(kv, D),
                    sbias_ref[...], T)
    x = x + proj(ctx, OFF_WO_C)

    # ---- residual 3: feed-forward ----
    n2 = layernorm(x, ROW_A2, ROW_BE2)
    hid = jnp.maximum(proj(n2, OFF_W1, FP) + v_ref[ROW_B1:ROW_B1 + 1, :], 0.0)
    x = x + proj(hid, OFF_W2) + v_ref[ROW_B2:ROW_B2 + 1, :]

    out_ref[...] = x                                      # lane-dense (B*T, 128) store


# ---------------- wrapper: packing, padding, mask->bias, un-pad (one jit) ----------------
def _pad2(w, rows=DP, cols=DP):
    r, c = w.shape
    return jnp.pad(w.astype(jnp.float32), ((0, rows - r), (0, cols - c)))


def _vrow(v):
    v = v.astype(jnp.float32).reshape(1, -1)
    return jnp.pad(v, ((0, 0), (0, DP - v.shape[1])))


@jax.jit
def decoder_block(x, enc, tgt_mask, src_mask, params):
    b, t, d = x.shape
    s = enc.shape[1]

    # Lane-pad activations to 128 (zero padding is preserved exactly by the kernel).
    x2 = jnp.pad(x.reshape(b * t, d).astype(jnp.float32), ((0, 0), (0, DP - d)))
    enc2 = jnp.pad(enc.reshape(b * s, d).astype(jnp.float32), ((0, 0), (0, DP - d)))

    # 0/1 masks -> additive f32 biases, pre-broadcast to the (H*B, t_q, t_kv) head batch.
    def bias_of(mask, tkv):
        bias = jnp.where(mask == 0, jnp.float32(NEG), jnp.float32(0.0))   # (B, t, tkv)
        return jnp.broadcast_to(bias[None], (H, b, t, tkv)).reshape(H * b, t, tkv)

    tbias = bias_of(tgt_mask, t)
    sbias = bias_of(src_mask, s)

    # Packed weight slab: 7 column blocks of (128, 128), zero row/col padded.
    # (In a real model this would be pre-packed once outside the step function.)
    p = params
    w_slab = jnp.concatenate([
        _pad2(jnp.concatenate([p['wq_s'], p['wk_s'], p['wv_s']], axis=1)),
        _pad2(p['wo_s']),
        _pad2(p['wq_c']),
        _pad2(jnp.concatenate([p['wk_c'], p['wv_c']], axis=1)),
        _pad2(p['wo_c']),
        _pad2(p['w1']),
        _pad2(p['w2']),
    ], axis=1)                                            # (128, 896)

    # Packed vector slab: LN params, FFN biases, LayerNorm lane mask.
    lane_mask = (jnp.arange(DP) < d).astype(jnp.float32)
    v_slab = jnp.concatenate([
        _vrow(p['a0']), _vrow(p['be0']), _vrow(p['a1']), _vrow(p['be1']),
        _vrow(p['a2']), _vrow(p['be2']), _vrow(p['b1']), _vrow(p['b2']),
        _vrow(lane_mask),
    ], axis=0)
    v_slab = jnp.pad(v_slab, ((0, V_SLAB_ROWS - v_slab.shape[0]), (0, 0)))  # (16, 128)

    vmem = pl.BlockSpec(memory_space=pltpu.MemorySpace.VMEM)
    cost = pl.CostEstimate(
        flops=7 * 2 * (b * t) * DP * DP + 4 * 2 * (H * b) * t * t * DK,
        transcendentals=2 * (H * b) * t * t + 8 * (b * t),
        bytes_accessed=4 * (2 * b * t * DP + b * s * DP + 2 * H * b * t * t
                            + DP * W_SLAB_COLS + V_SLAB_ROWS * DP),
    )

    out2 = pl.pallas_call(
        decoder_block_kernel,
        out_shape=jax.ShapeDtypeStruct((b * t, DP), jnp.float32),
        in_specs=[vmem] * 6,
        out_specs=vmem,
        cost_estimate=cost,
    )(x2, enc2, tbias, sbias, w_slab, v_slab)

    return out2[:, :d].reshape(b, t, d)


# ---------------- parameter init (weights stored (in, out): y = x @ W) ----------------
def init_params(key):
    ks = jax.random.split(key, 12)

    def lin(k, fan_in, fan_out):
        return (jax.random.normal(k, (fan_in, fan_out), jnp.float32)
                / math.sqrt(fan_in))

    return {
        # self-attention projections (no bias)
        "wq_s": lin(ks[0], D, D), "wk_s": lin(ks[1], D, D),
        "wv_s": lin(ks[2], D, D), "wo_s": lin(ks[3], D, D),
        # cross-attention projections
        "wq_c": lin(ks[4], D, D), "wk_c": lin(ks[5], D, D),
        "wv_c": lin(ks[6], D, D), "wo_c": lin(ks[7], D, D),
        # feed-forward
        "w1": lin(ks[8], D, D_FF),
        "b1": jax.random.normal(ks[9], (1, D_FF), jnp.float32) * 0.01,
        "w2": lin(ks[10], D_FF, D),
        "b2": jax.random.normal(ks[11], (1, D), jnp.float32) * 0.01,
        # layer norms (nn.Parameter(ones)/(zeros))
        "a0": jnp.ones((1, D), jnp.float32), "be0": jnp.zeros((1, D), jnp.float32),
        "a1": jnp.ones((1, D), jnp.float32), "be1": jnp.zeros((1, D), jnp.float32),
        "a2": jnp.ones((1, D), jnp.float32), "be2": jnp.zeros((1, D), jnp.float32),
    }


if __name__ == "__main__":
    key = jax.random.PRNGKey(0)
    kx, kenc, kp = jax.random.split(key, 3)

    x = jax.random.normal(kx, (B, T, D), jnp.float32)
    enc_out = jax.random.normal(kenc, (B, S, D), jnp.float32)

    # causal target mask, all-ones source mask (1 = attend, 0 = blocked)
    tgt_mask = jnp.broadcast_to(jnp.tril(jnp.ones((T, T), jnp.float32)), (B, T, T))
    src_mask = jnp.ones((B, T, S), jnp.float32)

    params = init_params(kp)

    out = decoder_block(x, enc_out, tgt_mask, src_mask, params)
    out = jax.block_until_ready(out)
    assert out.shape == (B, T, D)
    assert bool(jnp.all(jnp.isfinite(out)))
    print("KERNEL_OK")
</pallas_src>

<mosaic_0001>
module attributes {stable_mosaic.version = 11 : i64} {
  func.func @decoder_block_kernel(%arg0: memref<16x128xf32, #tpu.memory_space<vmem>>, %arg1: memref<16x128xf32, #tpu.memory_space<vmem>>, %arg2: memref<8x8x8xf32, #tpu.memory_space<vmem>>, %arg3: memref<8x8x8xf32, #tpu.memory_space<vmem>>, %arg4: memref<128x896xf32, #tpu.memory_space<vmem>>, %arg5: memref<16x128xf32, #tpu.memory_space<vmem>>, %arg6: memref<16x128xf32, #tpu.memory_space<vmem>>) attributes {dimension_semantics = [], scalar_prefetch = 0 : i64, scratch_operands = 0 : i64, tpu.core_type = #tpu.core_type<tc>} {
    %c0 = arith.constant 0 : index
    %c0_0 = arith.constant 0 : index
    %0 = vector.load %arg0[%c0, %c0_0] : memref<16x128xf32, #tpu.memory_space<vmem>>, vector<16x128xf32>
    %c0_1 = arith.constant 0 : index
    %c0_2 = arith.constant 0 : index
    %1 = vector.load %arg1[%c0_1, %c0_2] : memref<16x128xf32, #tpu.memory_space<vmem>>, vector<16x128xf32>
    %c8 = arith.constant 8 : index
    %c0_3 = arith.constant 0 : index
    %2 = vector.load %arg5[%c8, %c0_3] : memref<16x128xf32, #tpu.memory_space<vmem>>, vector<1x128xf32>
    %c0_4 = arith.constant 0 : index
    %c0_5 = arith.constant 0 : index
    %3 = vector.load %arg5[%c0_4, %c0_5] : memref<16x128xf32, #tpu.memory_space<vmem>>, vector<1x128xf32>
    %c1 = arith.constant 1 : index
    %c0_6 = arith.constant 0 : index
    %4 = vector.load %arg5[%c1, %c0_6] : memref<16x128xf32, #tpu.memory_space<vmem>>, vector<1x128xf32>
    %cst = arith.constant dense<0.000000e+00> : vector<16xf32>
    %5 = vector.multi_reduction <add>, %0, %cst [1] : vector<16x128xf32> to vector<16xf32>
    %6 = vector.shape_cast %5 : vector<16xf32> to vector<16x1xf32>
    %cst_7 = arith.constant 3.125000e-02 : f32
    %7 = vector.broadcast %cst_7 : f32 to vector<16x1xf32>
    %8 = arith.mulf %6, %7 : vector<16x1xf32>
    %9 = vector.broadcast %8 : vector<16x1xf32> to vector<16x128xf32>
    %10 = arith.subf %0, %9 : vector<16x128xf32>
    %11 = vector.broadcast %2 : vector<1x128xf32> to vector<16x128xf32>
    %12 = arith.mulf %10, %11 : vector<16x128xf32>
    %13 = arith.mulf %12, %12 : vector<16x128xf32>
    %cst_8 = arith.constant dense<0.000000e+00> : vector<16xf32>
    %14 = vector.multi_reduction <add>, %13, %cst_8 [1] : vector<16x128xf32> to vector<16xf32>
    %15 = vector.shape_cast %14 : vector<16xf32> to vector<16x1xf32>
    %cst_9 = arith.constant 0.0322580636 : f32
    %16 = vector.broadcast %cst_9 : f32 to vector<16x1xf32>
    %17 = arith.mulf %15, %16 : vector<16x1xf32>
    %18 = math.sqrt %17 : vector<16x1xf32>
    %cst_10 = arith.constant 9.99999997E-7 : f32
    %19 = vector.broadcast %cst_10 : f32 to vector<16x1xf32>
    %20 = arith.addf %18, %19 : vector<16x1xf32>
    %21 = tpu.reciprocal %20 : vector<16x1xf32> -> vector<16x1xf32>
    %22 = vector.broadcast %21 : vector<16x1xf32> to vector<16x128xf32>
    %23 = arith.mulf %12, %22 : vector<16x128xf32>
    %24 = vector.broadcast %3 : vector<1x128xf32> to vector<16x128xf32>
    %25 = arith.mulf %24, %23 : vector<16x128xf32>
    %26 = vector.broadcast %4 : vector<1x128xf32> to vector<16x128xf32>
    %27 = arith.addf %25, %26 : vector<16x128xf32>
    %c0_11 = arith.constant 0 : index
    %c0_12 = arith.constant 0 : index
    %28 = vector.load %arg4[%c0_11, %c0_12] : memref<128x896xf32, #tpu.memory_space<vmem>>, vector<128x128xf32>
    %cst_13 = arith.constant dense<0.000000e+00> : vector<16x128xf32>
    %29 = tpu.matmul %27, %28, %cst_13 {dimension_numbers = #tpu.dot_dimension_numbers<[1], [0], [0], [1], [0, 0, 1, 1], [], []>} : vector<16x128xf32>, vector<128x128xf32>, vector<16x128xf32> -> vector<16x128xf32>
    %30 = vector.shape_cast %29 : vector<16x128xf32> to vector<2x8x128xf32>
    %31 = vector.extract_strided_slice %30 {offsets = [0, 0, 0], sizes = [2, 8, 8], strides = [1, 1, 1]} : vector<2x8x128xf32> to vector<2x8x8xf32>
    %32 = vector.extract_strided_slice %30 {offsets = [0, 0, 8], sizes = [2, 8, 8], strides = [1, 1, 1]} : vector<2x8x128xf32> to vector<2x8x8xf32>
    %33 = vector.extract_strided_slice %30 {offsets = [0, 0, 16], sizes = [2, 8, 8], strides = [1, 1, 1]} : vector<2x8x128xf32> to vector<2x8x8xf32>
    %34 = vector.extract_strided_slice %30 {offsets = [0, 0, 24], sizes = [2, 8, 8], strides = [1, 1, 1]} : vector<2x8x128xf32> to vector<2x8x8xf32>
    %35 = tpu.concatenate %31, %32, %33, %34 in 0 : vector<2x8x8xf32>, vector<2x8x8xf32>, vector<2x8x8xf32>, vector<2x8x8xf32> -> vector<8x8x8xf32>
    %36 = vector.extract_strided_slice %30 {offsets = [0, 0, 32], sizes = [2, 8, 8], strides = [1, 1, 1]} : vector<2x8x128xf32> to vector<2x8x8xf32>
    %37 = vector.extract_strided_slice %30 {offsets = [0, 0, 40], sizes = [2, 8, 8], strides = [1, 1, 1]} : vector<2x8x128xf32> to vector<2x8x8xf32>
    %38 = vector.extract_strided_slice %30 {offsets = [0, 0, 48], sizes = [2, 8, 8], strides = [1, 1, 1]} : vector<2x8x128xf32> to vector<2x8x8xf32>
    %39 = vector.extract_strided_slice %30 {offsets = [0, 0, 56], sizes = [2, 8, 8], strides = [1, 1, 1]} : vector<2x8x128xf32> to vector<2x8x8xf32>
    %40 = tpu.concatenate %36, %37, %38, %39 in 0 : vector<2x8x8xf32>, vector<2x8x8xf32>, vector<2x8x8xf32>, vector<2x8x8xf32> -> vector<8x8x8xf32>
    %41 = vector.extract_strided_slice %30 {offsets = [0, 0, 64], sizes = [2, 8, 8], strides = [1, 1, 1]} : vector<2x8x128xf32> to vector<2x8x8xf32>
    %42 = vector.extract_strided_slice %30 {offsets = [0, 0, 72], sizes = [2, 8, 8], strides = [1, 1, 1]} : vector<2x8x128xf32> to vector<2x8x8xf32>
    %43 = vector.extract_strided_slice %30 {offsets = [0, 0, 80], sizes = [2, 8, 8], strides = [1, 1, 1]} : vector<2x8x128xf32> to vector<2x8x8xf32>
    %44 = vector.extract_strided_slice %30 {offsets = [0, 0, 88], sizes = [2, 8, 8], strides = [1, 1, 1]} : vector<2x8x128xf32> to vector<2x8x8xf32>
    %45 = tpu.concatenate %41, %42, %43, %44 in 0 : vector<2x8x8xf32>, vector<2x8x8xf32>, vector<2x8x8xf32>, vector<2x8x8xf32> -> vector<8x8x8xf32>
    %c0_14 = arith.constant 0 : index
    %c0_15 = arith.constant 0 : index
    %c0_16 = arith.constant 0 : index
    %46 = vector.load %arg2[%c0_14, %c0_15, %c0_16] : memref<8x8x8xf32, #tpu.memory_space<vmem>>, vector<8x8x8xf32>
    "tpu.trace_start"() <{level = 10 : i32, message = "bqd,bkd->bqk"}> : () -> ()
    %cst_17 = arith.constant dense<0.000000e+00> : vector<8x8x8xf32>
    %47 = tpu.matmul %35, %40, %cst_17 {dimension_numbers = #tpu.dot_dimension_numbers<[2], [2], [1], [1], [0, 0, 0, 1, 1, 1], [0], [0]>} : vector<8x8x8xf32>, vector<8x8x8xf32>, vector<8x8x8xf32> -> vector<8x8x8xf32>
    "tpu.trace_stop"() : () -> ()
    %cst_18 = arith.constant 0.353553385 : f32
    %48 = vector.broadcast %cst_18 : f32 to vector<8x8x8xf32>
    %49 = arith.mulf %47, %48 : vector<8x8x8xf32>
    %50 = arith.addf %49, %46 : vector<8x8x8xf32>
    %cst_19 = arith.constant dense<0xFF800000> : vector<8x8xf32>
    %51 = vector.multi_reduction <maximumf>, %50, %cst_19 [2] : vector<8x8x8xf32> to vector<8x8xf32>
    %52 = vector.shape_cast %51 : vector<8x8xf32> to vector<8x8x1xf32>
    %53 = vector.broadcast %52 : vector<8x8x1xf32> to vector<8x8x8xf32>
    %54 = arith.subf %50, %53 : vector<8x8x8xf32>
    %55 = math.exp %54 : vector<8x8x8xf32>
    %cst_20 = arith.constant dense<0.000000e+00> : vector<8x8xf32>
    %56 = vector.multi_reduction <add>, %55, %cst_20 [2] : vector<8x8x8xf32> to vector<8x8xf32>
    %57 = vector.shape_cast %56 : vector<8x8xf32> to vector<8x8x1xf32>
    %58 = tpu.reciprocal %57 : vector<8x8x1xf32> -> vector<8x8x1xf32>
    %59 = vector.broadcast %58 : vector<8x8x1xf32> to vector<8x8x8xf32>
    %60 = arith.mulf %55, %59 : vector<8x8x8xf32>
    "tpu.trace_start"() <{level = 10 : i32, message = "bqk,bkd->bqd"}> : () -> ()
    %cst_21 = arith.constant dense<0.000000e+00> : vector<8x8x8xf32>
    %61 = tpu.matmul %60, %45, %cst_21 {dimension_numbers = #tpu.dot_dimension_numbers<[2], [1], [1], [2], [0, 0, 0, 1, 1, 2], [0], [0]>} : vector<8x8x8xf32>, vector<8x8x8xf32>, vector<8x8x8xf32> -> vector<8x8x8xf32>
    %cst_22 = arith.constant 0.000000e+00 : f32
    "tpu.trace_stop"() : () -> ()
    %62 = vector.broadcast %cst_22 : f32 to vector<2x8x96xf32>
    %63 = vector.extract_strided_slice %61 {offsets = [0, 0, 0], sizes = [2, 8, 8], strides = [1, 1, 1]} : vector<8x8x8xf32> to vector<2x8x8xf32>
    %64 = vector.extract_strided_slice %61 {offsets = [2, 0, 0], sizes = [2, 8, 8], strides = [1, 1, 1]} : vector<8x8x8xf32> to vector<2x8x8xf32>
    %65 = vector.extract_strided_slice %61 {offsets = [4, 0, 0], sizes = [2, 8, 8], strides = [1, 1, 1]} : vector<8x8x8xf32> to vector<2x8x8xf32>
    %66 = vector.extract_strided_slice %61 {offsets = [6, 0, 0], sizes = [2, 8, 8], strides = [1, 1, 1]} : vector<8x8x8xf32> to vector<2x8x8xf32>
    %67 = tpu.concatenate %63, %64, %65, %66, %62 in 2 : vector<2x8x8xf32>, vector<2x8x8xf32>, vector<2x8x8xf32>, vector<2x8x8xf32>, vector<2x8x96xf32> -> vector<2x8x128xf32>
    %68 = vector.shape_cast %67 : vector<2x8x128xf32> to vector<16x128xf32>
    %c0_23 = arith.constant 0 : index
    %c128 = arith.constant 128 : index
    %69 = vector.load %arg4[%c0_23, %c128] : memref<128x896xf32, #tpu.memory_space<vmem>>, vector<128x128xf32>
    %cst_24 = arith.constant dense<0.000000e+00> : vector<16x128xf32>
    %70 = tpu.matmul %68, %69, %cst_24 {dimension_numbers = #tpu.dot_dimension_numbers<[1], [0], [0], [1], [0, 0, 1, 1], [], []>} : vector<16x128xf32>, vector<128x128xf32>, vector<16x128xf32> -> vector<16x128xf32>
    %71 = arith.addf %0, %70 : vector<16x128xf32>
    %c2 = arith.constant 2 : index
    %c0_25 = arith.constant 0 : index
    %72 = vector.load %arg5[%c2, %c0_25] : memref<16x128xf32, #tpu.memory_space<vmem>>, vector<1x128xf32>
    %c3 = arith.constant 3 : index
    %c0_26 = arith.constant 0 : index
    %73 = vector.load %arg5[%c3, %c0_26] : memref<16x128xf32, #tpu.memory_space<vmem>>, vector<1x128xf32>
    %cst_27 = arith.constant dense<0.000000e+00> : vector<16xf32>
    %74 = vector.multi_reduction <add>, %71, %cst_27 [1] : vector<16x128xf32> to vector<16xf32>
    %75 = vector.shape_cast %74 : vector<16xf32> to vector<16x1xf32>
    %cst_28 = arith.constant 3.125000e-02 : f32
    %76 = vector.broadcast %cst_28 : f32 to vector<16x1xf32>
    %77 = arith.mulf %75, %76 : vector<16x1xf32>
    %78 = vector.broadcast %77 : vector<16x1xf32> to vector<16x128xf32>
    %79 = arith.subf %71, %78 : vector<16x128xf32>
    %80 = vector.broadcast %2 : vector<1x128xf32> to vector<16x128xf32>
    %81 = arith.mulf %79, %80 : vector<16x128xf32>
    %82 = arith.mulf %81, %81 : vector<16x128xf32>
    %cst_29 = arith.constant dense<0.000000e+00> : vector<16xf32>
    %83 = vector.multi_reduction <add>, %82, %cst_29 [1] : vector<16x128xf32> to vector<16xf32>
    %84 = vector.shape_cast %83 : vector<16xf32> to vector<16x1xf32>
    %cst_30 = arith.constant 0.0322580636 : f32
    %85 = vector.broadcast %cst_30 : f32 to vector<16x1xf32>
    %86 = arith.mulf %84, %85 : vector<16x1xf32>
    %87 = math.sqrt %86 : vector<16x1xf32>
    %cst_31 = arith.constant 9.99999997E-7 : f32
    %88 = vector.broadcast %cst_31 : f32 to vector<16x1xf32>
    %89 = arith.addf %87, %88 : vector<16x1xf32>
    %90 = tpu.reciprocal %89 : vector<16x1xf32> -> vector<16x1xf32>
    %91 = vector.broadcast %90 : vector<16x1xf32> to vector<16x128xf32>
    %92 = arith.mulf %81, %91 : vector<16x128xf32>
    %93 = vector.broadcast %72 : vector<1x128xf32> to vector<16x128xf32>
    %94 = arith.mulf %93, %92 : vector<16x128xf32>
    %95 = vector.broadcast %73 : vector<1x128xf32> to vector<16x128xf32>
    %96 = arith.addf %94, %95 : vector<16x128xf32>
    %c0_32 = arith.constant 0 : index
    %c256 = arith.constant 256 : index
    %97 = vector.load %arg4[%c0_32, %c256] : memref<128x896xf32, #tpu.memory_space<vmem>>, vector<128x128xf32>
    %cst_33 = arith.constant dense<0.000000e+00> : vector<16x128xf32>
    %98 = tpu.matmul %96, %97, %cst_33 {dimension_numbers = #tpu.dot_dimension_numbers<[1], [0], [0], [1], [0, 0, 1, 1], [], []>} : vector<16x128xf32>, vector<128x128xf32>, vector<16x128xf32> -> vector<16x128xf32>
    %99 = vector.shape_cast %98 : vector<16x128xf32> to vector<2x8x128xf32>
    %c0_34 = arith.constant 0 : index
    %c384 = arith.constant 384 : index
    %100 = vector.load %arg4[%c0_34, %c384] : memref<128x896xf32, #tpu.memory_space<vmem>>, vector<128x128xf32>
    %cst_35 = arith.constant dense<0.000000e+00> : vector<16x128xf32>
    %101 = tpu.matmul %1, %100, %cst_35 {dimension_numbers = #tpu.dot_dimension_numbers<[1], [0], [0], [1], [0, 0, 1, 1], [], []>} : vector<16x128xf32>, vector<128x128xf32>, vector<16x128xf32> -> vector<16x128xf32>
    %102 = vector.shape_cast %101 : vector<16x128xf32> to vector<2x8x128xf32>
    %103 = vector.extract_strided_slice %99 {offsets = [0, 0, 0], sizes = [2, 8, 8], strides = [1, 1, 1]} : vector<2x8x128xf32> to vector<2x8x8xf32>
    %104 = vector.extract_strided_slice %99 {offsets = [0, 0, 8], sizes = [2, 8, 8], strides = [1, 1, 1]} : vector<2x8x128xf32> to vector<2x8x8xf32>
    %105 = vector.extract_strided_slice %99 {offsets = [0, 0, 16], sizes = [2, 8, 8], strides = [1, 1, 1]} : vector<2x8x128xf32> to vector<2x8x8xf32>
    %106 = vector.extract_strided_slice %99 {offsets = [0, 0, 24], sizes = [2, 8, 8], strides = [1, 1, 1]} : vector<2x8x128xf32> to vector<2x8x8xf32>
    %107 = tpu.concatenate %103, %104, %105, %106 in 0 : vector<2x8x8xf32>, vector<2x8x8xf32>, vector<2x8x8xf32>, vector<2x8x8xf32> -> vector<8x8x8xf32>
    %108 = vector.extract_strided_slice %102 {offsets = [0, 0, 0], sizes = [2, 8, 8], strides = [1, 1, 1]} : vector<2x8x128xf32> to vector<2x8x8xf32>
    %109 = vector.extract_strided_slice %102 {offsets = [0, 0, 8], sizes = [2, 8, 8], strides = [1, 1, 1]} : vector<2x8x128xf32> to vector<2x8x8xf32>
    %110 = vector.extract_strided_slice %102 {offsets = [0, 0, 16], sizes = [2, 8, 8], strides = [1, 1, 1]} : vector<2x8x128xf32> to vector<2x8x8xf32>
    %111 = vector.extract_strided_slice %102 {offsets = [0, 0, 24], sizes = [2, 8, 8], strides = [1, 1, 1]} : vector<2x8x128xf32> to vector<2x8x8xf32>
    %112 = tpu.concatenate %108, %109, %110, %111 in 0 : vector<2x8x8xf32>, vector<2x8x8xf32>, vector<2x8x8xf32>, vector<2x8x8xf32> -> vector<8x8x8xf32>
    %113 = vector.extract_strided_slice %102 {offsets = [0, 0, 32], sizes = [2, 8, 8], strides = [1, 1, 1]} : vector<2x8x128xf32> to vector<2x8x8xf32>
    %114 = vector.extract_strided_slice %102 {offsets = [0, 0, 40], sizes = [2, 8, 8], strides = [1, 1, 1]} : vector<2x8x128xf32> to vector<2x8x8xf32>
    %115 = vector.extract_strided_slice %102 {offsets = [0, 0, 48], sizes = [2, 8, 8], strides = [1, 1, 1]} : vector<2x8x128xf32> to vector<2x8x8xf32>
    %116 = vector.extract_strided_slice %102 {offsets = [0, 0, 56], sizes = [2, 8, 8], strides = [1, 1, 1]} : vector<2x8x128xf32> to vector<2x8x8xf32>
    %117 = tpu.concatenate %113, %114, %115, %116 in 0 : vector<2x8x8xf32>, vector<2x8x8xf32>, vector<2x8x8xf32>, vector<2x8x8xf32> -> vector<8x8x8xf32>
    %c0_36 = arith.constant 0 : index
    %c0_37 = arith.constant 0 : index
    %c0_38 = arith.constant 0 : index
    %118 = vector.load %arg3[%c0_36, %c0_37, %c0_38] : memref<8x8x8xf32, #tpu.memory_space<vmem>>, vector<8x8x8xf32>
    "tpu.trace_start"() <{level = 10 : i32, message = "bqd,bkd->bqk"}> : () -> ()
    %cst_39 = arith.constant dense<0.000000e+00> : vector<8x8x8xf32>
    %119 = tpu.matmul %107, %112, %cst_39 {dimension_numbers = #tpu.dot_dimension_numbers<[2], [2], [1], [1], [0, 0, 0, 1, 1, 1], [0], [0]>} : vector<8x8x8xf32>, vector<8x8x8xf32>, vector<8x8x8xf32> -> vector<8x8x8xf32>
    "tpu.trace_stop"() : () -> ()
    %cst_40 = arith.constant 0.353553385 : f32
    %120 = vector.broadcast %cst_40 : f32 to vector<8x8x8xf32>
    %121 = arith.mulf %119, %120 : vector<8x8x8xf32>
    %122 = arith.addf %121, %118 : vector<8x8x8xf32>
    %cst_41 = arith.constant dense<0xFF800000> : vector<8x8xf32>
    %123 = vector.multi_reduction <maximumf>, %122, %cst_41 [2] : vector<8x8x8xf32> to vector<8x8xf32>
    %124 = vector.shape_cast %123 : vector<8x8xf32> to vector<8x8x1xf32>
    %125 = vector.broadcast %124 : vector<8x8x1xf32> to vector<8x8x8xf32>
    %126 = arith.subf %122, %125 : vector<8x8x8xf32>
    %127 = math.exp %126 : vector<8x8x8xf32>
    %cst_42 = arith.constant dense<0.000000e+00> : vector<8x8xf32>
    %128 = vector.multi_reduction <add>, %127, %cst_42 [2] : vector<8x8x8xf32> to vector<8x8xf32>
    %129 = vector.shape_cast %128 : vector<8x8xf32> to vector<8x8x1xf32>
    %130 = tpu.reciprocal %129 : vector<8x8x1xf32> -> vector<8x8x1xf32>
    %131 = vector.broadcast %130 : vector<8x8x1xf32> to vector<8x8x8xf32>
    %132 = arith.mulf %127, %131 : vector<8x8x8xf32>
    "tpu.trace_start"() <{level = 10 : i32, message = "bqk,bkd->bqd"}> : () -> ()
    %cst_43 = arith.constant dense<0.000000e+00> : vector<8x8x8xf32>
    %133 = tpu.matmul %132, %117, %cst_43 {dimension_numbers = #tpu.dot_dimension_numbers<[2], [1], [1], [2], [0, 0, 0, 1, 1, 2], [0], [0]>} : vector<8x8x8xf32>, vector<8x8x8xf32>, vector<8x8x8xf32> -> vector<8x8x8xf32>
    %cst_44 = arith.constant 0.000000e+00 : f32
    "tpu.trace_stop"() : () -> ()
    %134 = vector.broadcast %cst_44 : f32 to vector<2x8x96xf32>
    %135 = vector.extract_strided_slice %133 {offsets = [0, 0, 0], sizes = [2, 8, 8], strides = [1, 1, 1]} : vector<8x8x8xf32> to vector<2x8x8xf32>
    %136 = vector.extract_strided_slice %133 {offsets = [2, 0, 0], sizes = [2, 8, 8], strides = [1, 1, 1]} : vector<8x8x8xf32> to vector<2x8x8xf32>
    %137 = vector.extract_strided_slice %133 {offsets = [4, 0, 0], sizes = [2, 8, 8], strides = [1, 1, 1]} : vector<8x8x8xf32> to vector<2x8x8xf32>
    %138 = vector.extract_strided_slice %133 {offsets = [6, 0, 0], sizes = [2, 8, 8], strides = [1, 1, 1]} : vector<8x8x8xf32> to vector<2x8x8xf32>
    %139 = tpu.concatenate %135, %136, %137, %138, %134 in 2 : vector<2x8x8xf32>, vector<2x8x8xf32>, vector<2x8x8xf32>, vector<2x8x8xf32>, vector<2x8x96xf32> -> vector<2x8x128xf32>
    %140 = vector.shape_cast %139 : vector<2x8x128xf32> to vector<16x128xf32>
    %c0_45 = arith.constant 0 : index
    %c512 = arith.constant 512 : index
    %141 = vector.load %arg4[%c0_45, %c512] : memref<128x896xf32, #tpu.memory_space<vmem>>, vector<128x128xf32>
    %cst_46 = arith.constant dense<0.000000e+00> : vector<16x128xf32>
    %142 = tpu.matmul %140, %141, %cst_46 {dimension_numbers = #tpu.dot_dimension_numbers<[1], [0], [0], [1], [0, 0, 1, 1], [], []>} : vector<16x128xf32>, vector<128x128xf32>, vector<16x128xf32> -> vector<16x128xf32>
    %143 = arith.addf %71, %142 : vector<16x128xf32>
    %c4 = arith.constant 4 : index
    %c0_47 = arith.constant 0 : index
    %144 = vector.load %arg5[%c4, %c0_47] : memref<16x128xf32, #tpu.memory_space<vmem>>, vector<1x128xf32>
    %c5 = arith.constant 5 : index
    %c0_48 = arith.constant 0 : index
    %145 = vector.load %arg5[%c5, %c0_48] : memref<16x128xf32, #tpu.memory_space<vmem>>, vector<1x128xf32>
    %cst_49 = arith.constant dense<0.000000e+00> : vector<16xf32>
    %146 = vector.multi_reduction <add>, %143, %cst_49 [1] : vector<16x128xf32> to vector<16xf32>
    %147 = vector.shape_cast %146 : vector<16xf32> to vector<16x1xf32>
    %cst_50 = arith.constant 3.125000e-02 : f32
    %148 = vector.broadcast %cst_50 : f32 to vector<16x1xf32>
    %149 = arith.mulf %147, %148 : vector<16x1xf32>
    %150 = vector.broadcast %149 : vector<16x1xf32> to vector<16x128xf32>
    %151 = arith.subf %143, %150 : vector<16x128xf32>
    %152 = vector.broadcast %2 : vector<1x128xf32> to vector<16x128xf32>
    %153 = arith.mulf %151, %152 : vector<16x128xf32>
    %154 = arith.mulf %153, %153 : vector<16x128xf32>
    %cst_51 = arith.constant dense<0.000000e+00> : vector<16xf32>
    %155 = vector.multi_reduction <add>, %154, %cst_51 [1] : vector<16x128xf32> to vector<16xf32>
    %156 = vector.shape_cast %155 : vector<16xf32> to vector<16x1xf32>
    %cst_52 = arith.constant 0.0322580636 : f32
    %157 = vector.broadcast %cst_52 : f32 to vector<16x1xf32>
    %158 = arith.mulf %156, %157 : vector<16x1xf32>
    %159 = math.sqrt %158 : vector<16x1xf32>
    %cst_53 = arith.constant 9.99999997E-7 : f32
    %160 = vector.broadcast %cst_53 : f32 to vector<16x1xf32>
    %161 = arith.addf %159, %160 : vector<16x1xf32>
    %162 = tpu.reciprocal %161 : vector<16x1xf32> -> vector<16x1xf32>
    %163 = vector.broadcast %162 : vector<16x1xf32> to vector<16x128xf32>
    %164 = arith.mulf %153, %163 : vector<16x128xf32>
    %165 = vector.broadcast %144 : vector<1x128xf32> to vector<16x128xf32>
    %166 = arith.mulf %165, %164 : vector<16x128xf32>
    %167 = vector.broadcast %145 : vector<1x128xf32> to vector<16x128xf32>
    %168 = arith.addf %166, %167 : vector<16x128xf32>
    %c0_54 = arith.constant 0 : index
    %c640 = arith.constant 640 : index
    %169 = vector.load %arg4[%c0_54, %c640] : memref<128x896xf32, #tpu.memory_space<vmem>>, vector<128x128xf32>
    %cst_55 = arith.constant dense<0.000000e+00> : vector<16x128xf32>
    %170 = tpu.matmul %168, %169, %cst_55 {dimension_numbers = #tpu.dot_dimension_numbers<[1], [0], [0], [1], [0, 0, 1, 1], [], []>} : vector<16x128xf32>, vector<128x128xf32>, vector<16x128xf32> -> vector<16x128xf32>
    %c6 = arith.constant 6 : index
    %c0_56 = arith.constant 0 : index
    %171 = vector.load %arg5[%c6, %c0_56] : memref<16x128xf32, #tpu.memory_space<vmem>>, vector<1x128xf32>
    %172 = vector.broadcast %171 : vector<1x128xf32> to vector<16x128xf32>
    %173 = arith.addf %170, %172 : vector<16x128xf32>
    %cst_57 = arith.constant 0.000000e+00 : f32
    %174 = vector.broadcast %cst_57 : f32 to vector<16x128xf32>
    %175 = arith.maximumf %173, %174 : vector<16x128xf32>
    %c0_58 = arith.constant 0 : index
    %c768 = arith.constant 768 : index
    %176 = vector.load %arg4[%c0_58, %c768] : memref<128x896xf32, #tpu.memory_space<vmem>>, vector<128x128xf32>
    %cst_59 = arith.constant dense<0.000000e+00> : vector<16x128xf32>
    %177 = tpu.matmul %175, %176, %cst_59 {dimension_numbers = #tpu.dot_dimension_numbers<[1], [0], [0], [1], [0, 0, 1, 1], [], []>} : vector<16x128xf32>, vector<128x128xf32>, vector<16x128xf32> -> vector<16x128xf32>
    %178 = arith.addf %143, %177 : vector<16x128xf32>
    %c7 = arith.constant 7 : index
    %c0_60 = arith.constant 0 : index
    %179 = vector.load %arg5[%c7, %c0_60] : memref<16x128xf32, #tpu.memory_space<vmem>>, vector<1x128xf32>
    %180 = vector.broadcast %179 : vector<1x128xf32> to vector<16x128xf32>
    %181 = arith.addf %178, %180 : vector<16x128xf32>
    %c0_61 = arith.constant 0 : index
    %c0_62 = arith.constant 0 : index
    %182 = vector.load %arg6[%c0_61, %c0_62] : memref<16x128xf32, #tpu.memory_space<vmem>>, vector<16x128xf32>
    tpu.vector_store %arg6[%c0_61, %c0_62], %181 {strides = array<i32>} : memref<16x128xf32, #tpu.memory_space<vmem>>, vector<16x128xf32>,
    return
  }
}

</mosaic_0001>

<llo_original>
// kernel: decoder_block.1
$region0: #{decoder_block.1}
  #allocation0 [shape = 'u32[]', space=smem, size = 0x4, offset = 0x4, fixed_abs, tag = 'smem constant byte address 0x4 - core index']
  #allocation1 [shape = 'u32[144,128]{1,0:T(1,128)}', space=vmem, size = 0x12000, scoped, tag = 'internal scratch']
  %s0 = inlined_call_operand.vmem [shape: f32[16,128], index: 0, kind: input, shape index: {}]
  %s1 = inlined_call_operand.vmem [shape: f32[16,128], index: 1, kind: input, shape index: {}]
  %s2 = inlined_call_operand.vmem [shape: f32[8,8,8], index: 2, kind: input, shape index: {}]
  %s3 = inlined_call_operand.vmem [shape: f32[8,8,8], index: 3, kind: input, shape index: {}]
  %s4 = inlined_call_operand.vmem [shape: f32[128,896], index: 4, kind: input, shape index: {}]
  %s5 = inlined_call_operand.vmem [shape: f32[16,128], index: 5, kind: input, shape index: {}]
  %s6 = inlined_call_operand.vmem [shape: f32[16,128], index: 6, kind: output, shape index: {}]
  %s7 = sld [smem:[#allocation0]]
  $region34: #{decoder_block.1} parent=0
    _
  %s9 = ssub.s32 1, %s7
  %s10 = scalar_select 0, %s9, %s7
  // Predicated region
  $region2: #{decoder_block.1} parent=0 // pred_check
    _
  $region3: #{decoder_block.1} parent=0 // pred_check_branch
    %12 = sbr.rel (0) target = $region5
  $region4: #{decoder_block.1} parent=0 // pred_region
    _
  $region5: #{decoder_block.1} parent=0 // pred_fallthru
    _
  // Predicated region
  $region6: #{decoder_block.1} parent=0 // pred_check
    _
  $region7: #{decoder_block.1} parent=0 // pred_check_branch
    %14 = sbr.rel (0) target = $region9
  $region8: #{decoder_block.1} parent=0 // pred_region
    _
  $region9: #{decoder_block.1} parent=0 // pred_fallthru
    _
  // Predicated region
  $region10: #{decoder_block.1} parent=0 // pred_check
    _
  $region11: #{decoder_block.1} parent=0 // pred_check_branch
    %16 = sbr.rel (0) target = $region13
  $region12: #{decoder_block.1} parent=0 // pred_region
    _
  $region13: #{decoder_block.1} parent=0 // pred_fallthru
    _
  // Predicated region
  $region14: #{decoder_block.1} parent=0 // pred_check
    _
  $region15: #{decoder_block.1} parent=0 // pred_check_branch
    %18 = sbr.rel (0) target = $region17
  $region16: #{decoder_block.1} parent=0 // pred_region
    _
  $region17: #{decoder_block.1} parent=0 // pred_fallthru
    _
  // Predicated region
  $region18: #{decoder_block.1} parent=0 // pred_check
    _
  $region19: #{decoder_block.1} parent=0 // pred_check_branch
    %20 = sbr.rel (0) target = $region21
  $region20: #{decoder_block.1} parent=0 // pred_region
    _
  $region21: #{decoder_block.1} parent=0 // pred_fallthru
    _
  // Predicated region
  $region22: #{decoder_block.1} parent=0 // pred_check
    _
  $region23: #{decoder_block.1} parent=0 // pred_check_branch
    %22 = sbr.rel (0) target = $region25
  $region24: #{decoder_block.1} parent=0 // pred_region
    _
  $region25: #{decoder_block.1} parent=0 // pred_fallthru
    _
  %v23 = vld [vmem:[%s0] sm:$0xff]
  %v24 = vld [vmem:[%s0 + $0x8] sm:$0xff]
  %v25 = vld [vmem:[%s1] sm:$0xff]
  %v26 = vld [vmem:[%s1 + $0x8] sm:$0xff]
  %v27 = vld [vmem:[%s5 + $0x8] sm:$0x1]
  %v28 = vld [vmem:[%s5] sm:$0x1]
  %v29 = vld [vmem:[%s5 + $0x1] sm:$0x1]
  %30 = vadd.xlane.f32.xlu0 %v23
  %v31 = vpop.xlane.xlu0 %30
  %32 = vadd.xlane.f32.xlu0 %v24
  %v33 = vpop.xlane.xlu0 %32
  %v34 = vmul.f32 %v31, 0.03125
  %v35 = vmul.f32 %v33, 0.03125
  %v36 = vsub.f32 %v23, %v34
  %v37 = vsub.f32 %v24, %v35
  %v38 = vlaneseq
  %v39 = vshrl.u32 %v38, 7
  %v40 = vsub.s32 0, %v39
  %v41 = vrot.slane %v27, %v40
  %v42 = vmul.f32 %v36, %v41
  %v43 = vmul.f32 %v37, %v41
  %v44 = vmul.f32 %v42, %v42
  %v45 = vmul.f32 %v43, %v43
  %46 = vadd.xlane.f32.xlu0 %v44
  %v47 = vpop.xlane.xlu0 %46
  %48 = vadd.xlane.f32.xlu0 %v45
  %v49 = vpop.xlane.xlu0 %48
  %v50 = vmul.f32 %v47, 0.032258064
  %v51 = vmul.f32 %v49, 0.032258064
  %v52 = vrsqrt.pop %v50
  %v53 = vmul.f32 %v50, %v52
  %vm54 = vcmp.eq.f32.partialorder %v50, inf
  %v55 = vsel %vm54, %v50, %v53
  %vm56 = vcmp.eq.f32.partialorder %v50, 0.0
  %v57 = vand.u32 %v50, 2147483648
  %v58 = vsel %vm56, %v57, %v55
  %v59 = vrsqrt.pop %v51
  %v60 = vmul.f32 %v51, %v59
  %vm61 = vcmp.eq.f32.partialorder %v51, inf
  %v62 = vsel %vm61, %v51, %v60
  %vm63 = vcmp.eq.f32.partialorder %v51, 0.0
  %v64 = vand.u32 %v51, 2147483648
  %v65 = vsel %vm63, %v64, %v62
  %v66 = vadd.f32 %v58, 1e-06
  %v67 = vadd.f32 %v65, 1e-06
  %v68 = vrcp.pop %v66
  %v69 = vrcp.pop %v67
  %v70 = vmul.f32 %v42, %v68
  %v71 = vmul.f32 %v43, %v69
  %v72 = vlaneseq
  %v73 = vshrl.u32 %v72, 7
  %v74 = vsub.s32 0, %v73
  %v75 = vrot.slane %v28, %v74
  %v76 = vmul.f32 %v75, %v70
  %v77 = vmul.f32 %v75, %v71
  %v78 = vlaneseq
  %v79 = vshrl.u32 %v78, 7
  %v80 = vsub.s32 0, %v79
  %v81 = vrot.slane %v29, %v80
  %v82 = vadd.f32 %v76, %v81
  %v83 = vadd.f32 %v77, %v81
  %v84 = vld [vmem:[%s4] sm:$0xff]
  %v85 = vld [vmem:[%s4 + $0x38] sm:$0xff]
  %v86 = vld [vmem:[%s4 + $0x70] sm:$0xff]
  %v87 = vld [vmem:[%s4 + $0xa8] sm:$0xff]
  %v88 = vld [vmem:[%s4 + $0xe0] sm:$0xff]
  %v89 = vld [vmem:[%s4 + $0x118] sm:$0xff]
  %v90 = vld [vmem:[%s4 + $0x150] sm:$0xff]
  %v91 = vld [vmem:[%s4 + $0x188] sm:$0xff]
  %v92 = vld [vmem:[%s4 + $0x1c0] sm:$0xff]
  %v93 = vld [vmem:[%s4 + $0x1f8] sm:$0xff]
  %v94 = vld [vmem:[%s4 + $0x230] sm:$0xff]
  %v95 = vld [vmem:[%s4 + $0x268] sm:$0xff]
  %v96 = vld [vmem:[%s4 + $0x2a0] sm:$0xff]
  %v97 = vld [vmem:[%s4 + $0x2d8] sm:$0xff]
  %v98 = vld [vmem:[%s4 + $0x310] sm:$0xff]
  %v99 = vld [vmem:[%s4 + $0x348] sm:$0xff]
  %100 = vmatprep.subr.mxu0 0.0
  %101 = vmatpush1.msra.mxu0 %v99
  %102 = vmatprep.subr.mxu0 0.0
  %103 = vmatpush1.msra.mxu0 %v98
  %104 = vmatprep.subr.mxu0 0.0
  %105 = vmatpush1.msra.mxu0 %v97
  %106 = vmatprep.subr.mxu0 0.0
  %107 = vmatpush1.msra.mxu0 %v96
  %108 = vmatprep.subr.mxu0 0.0
  %109 = vmatpush1.msra.mxu0 %v95
  %110 = vmatprep.subr.mxu0 0.0
  %111 = vmatpush1.msra.mxu0 %v94
  %112 = vmatprep.subr.mxu0 0.0
  %113 = vmatpush1.msra.mxu0 %v93
  %114 = vmatprep.subr.mxu0 0.0
  %115 = vmatpush1.msra.mxu0 %v92
  %116 = vmatprep.subr.mxu0 0.0
  %117 = vmatpush1.msra.mxu0 %v91
  %118 = vmatprep.subr.mxu0 0.0
  %119 = vmatpush1.msra.mxu0 %v90
  %120 = vmatprep.subr.mxu0 0.0
  %121 = vmatpush1.msra.mxu0 %v89
  %122 = vmatprep.subr.mxu0 0.0
  %123 = vmatpush1.msra.mxu0 %v88
  %124 = vmatprep.subr.mxu0 0.0
  %125 = vmatpush1.msra.mxu0 %v87
  %126 = vmatprep.subr.mxu0 0.0
  %127 = vmatpush1.msra.mxu0 %v86
  %128 = vmatprep.subr.mxu0 0.0
  %129 = vmatpush1.msra.mxu0 %v85
  %130 = vmatprep.subr.mxu0 0.0
  %131 = vmatpush1.msra.mxu0 %v84
  %132 = vmatprep.subr.mxu0 0.0
  %133 = vmatpush2.msra.mxu0 0.0
  %134 = vmatprep.subr.mxu0 0.0
  %135 = vmatpush2.msra.mxu0 0.0
  %136 = vmatprep.subr.mxu0 0.0
  %137 = vmatpush2.msra.mxu0 0.0
  %138 = vmatprep.subr.mxu0 0.0
  %139 = vmatpush2.msra.mxu0 0.0
  %140 = vmatprep.subr.mxu0 0.0
  %141 = vmatpush2.msra.mxu0 0.0
  %142 = vmatprep.subr.mxu0 0.0
  %143 = vmatpush2.msra.mxu0 0.0
  %144 = vmatprep.subr.mxu0 0.0
  %145 = vmatpush2.msra.mxu0 0.0
  %146 = vmatprep.subr.mxu0 0.0
  %147 = vmatpush2.msra.mxu0 0.0
  %148 = vmatprep.subr.mxu0 0.0
  %149 = vmatpush2.msra.mxu0 0.0
  %150 = vmatprep.subr.mxu0 0.0
  %151 = vmatpush2.msra.mxu0 0.0
  %152 = vmatprep.subr.mxu0 0.0
  %153 = vmatpush2.msra.mxu0 0.0
  %154 = vmatprep.subr.mxu0 0.0
  %155 = vmatpush2.msra.mxu0 0.0
  %156 = vmatprep.subr.mxu0 0.0
  %157 = vmatpush2.msra.mxu0 0.0
  %158 = vmatprep.subr.mxu0 0.0
  %159 = vmatpush2.msra.mxu0 0.0
  %160 = vmatprep.subr.mxu0 0.0
  %161 = vmatpush2.msra.mxu0 0.0
  %162 = vmatprep.subr.mxu0 0.0
  %163 = vmatpush2.msra.mxu0 0.0
  %164 = vmatprep.mubr.f32.mxu0 0.0
  %165 = vmatmul.mubr.f32.gmra.mxu0 %v82
  %v166 = vpop.f32.mrf.mxu0
  %v167 = vadd.f32 0.0, %v166
  %v168 = vpop.f32.mrf.mxu0
  %169 = vmatprep.mubr.f32.mxu0 0.0
  %170 = vmatmul.mubr.f32.gmra.mxu0 %v83
  %v171 = vpop.f32.mrf.mxu0
  %v172 = vadd.f32 0.0, %v171
  %v173 = vpop.f32.mrf.mxu0
  %174 = vdwg.mxu0
  %177 = vrot.lane.b32.xlu0 %v167, 120
  %v178 = vpop.permute.xlu0 %177
  %179 = vrot.lane.b32.xlu0 %v172, 120
  %v180 = vpop.permute.xlu0 %179
  %181 = vrot.lane.b32.xlu0 %v167, 112
  %v182 = vpop.permute.xlu0 %181
  %183 = vrot.lane.b32.xlu0 %v172, 112
  %v184 = vpop.permute.xlu0 %183
  %185 = vrot.lane.b32.xlu0 %v167, 104
  %v186 = vpop.permute.xlu0 %185
  %187 = vrot.lane.b32.xlu0 %v172, 104
  %v188 = vpop.permute.xlu0 %187
  %v189 = vld [vmem:[%s2] sm:$0xff]
  %v190 = vld [vmem:[%s2 + $0x8] sm:$0xff]
  %v191 = vld [vmem:[%s2 + $0x10] sm:$0xff]
  %v192 = vld [vmem:[%s2 + $0x18] sm:$0xff]
  %v193 = vld [vmem:[%s2 + $0x20] sm:$0xff]
  %v194 = vld [vmem:[%s2 + $0x28] sm:$0xff]
  %v195 = vld [vmem:[%s2 + $0x30] sm:$0xff]
  %v196 = vld [vmem:[%s2 + $0x38] sm:$0xff]
  %197 = vrot.lane.b32.xlu0 %v167, 96
  %v198 = vpop.permute.xlu0 %197
  %vm199 = vcmask 64512
  %v200 = vsel %vm199, %v167, 0
  %v202 = vsel %vm199, %v198, 0
  %204 = vmatprep.subr.mxu0 0.0
  %205 = vmatpush1.xpose.msra.mxu0 0.0
  %206 = vmatprep.subr.mxu0 0.0
  %207 = vmatpush1.xpose.msra.mxu0 0.0
  %208 = vmatprep.subr.mxu0 0.0
  %209 = vmatpush1.xpose.msra.mxu0 0.0
  %210 = vmatprep.subr.mxu0 0.0
  %211 = vmatpush1.xpose.msra.mxu0 0.0
  %212 = vmatprep.subr.mxu0 0.0
  %213 = vmatpush1.xpose.msra.mxu0 0.0
  %214 = vmatprep.subr.mxu0 0.0
  %215 = vmatpush1.xpose.msra.mxu0 0.0
  %216 = vmatprep.subr.mxu0 0.0
  %217 = vmatpush1.xpose.msra.mxu0 0.0
  %218 = vmatprep.subr.mxu0 0.0
  %219 = vmatpush1.xpose.msra.mxu0 0.0
  %220 = vmatprep.subr.mxu0 0.0
  %221 = vmatpush1.xpose.msra.mxu0 0.0
  %222 = vmatprep.subr.mxu0 0.0
  %223 = vmatpush1.xpose.msra.mxu0 0.0
  %224 = vmatprep.subr.mxu0 0.0
  %225 = vmatpush1.xpose.msra.mxu0 0.0
  %226 = vmatprep.subr.mxu0 0.0
  %227 = vmatpush1.xpose.msra.mxu0 0.0
  %228 = vmatprep.subr.mxu0 0.0
  %229 = vmatpush1.xpose.msra.mxu0 0.0
  %230 = vmatprep.subr.mxu0 0.0
  %231 = vmatpush1.xpose.msra.mxu0 0.0
  %232 = vmatprep.subr.mxu0 0.0
  %233 = vmatpush1.xpose.msra.mxu0 0.0
  %234 = vmatprep.subr.mxu0 0.0
  %235 = vmatpush1.xpose.msra.mxu0 %v202
  %236 = vmatprep.subr.mxu0 0.0
  %237 = vmatpush2.xpose.msra.mxu0 0.0
  %238 = vmatprep.subr.mxu0 0.0
  %239 = vmatpush2.xpose.msra.mxu0 0.0
  %240 = vmatprep.subr.mxu0 0.0
  %241 = vmatpush2.xpose.msra.mxu0 0.0
  %242 = vmatprep.subr.mxu0 0.0
  %243 = vmatpush2.xpose.msra.mxu0 0.0
  %244 = vmatprep.subr.mxu0 0.0
  %245 = vmatpush2.xpose.msra.mxu0 0.0
  %246 = vmatprep.subr.mxu0 0.0
  %247 = vmatpush2.xpose.msra.mxu0 0.0
  %248 = vmatprep.subr.mxu0 0.0
  %249 = vmatpush2.xpose.msra.mxu0 0.0
  %250 = vmatprep.subr.mxu0 0.0
  %251 = vmatpush2.xpose.msra.mxu0 0.0
  %252 = vmatprep.subr.mxu0 0.0
  %253 = vmatpush2.xpose.msra.mxu0 0.0
  %254 = vmatprep.subr.mxu0 0.0
  %255 = vmatpush2.xpose.msra.mxu0 0.0
  %256 = vmatprep.subr.mxu0 0.0
  %257 = vmatpush2.xpose.msra.mxu0 0.0
  %258 = vmatprep.subr.mxu0 0.0
  %259 = vmatpush2.xpose.msra.mxu0 0.0
  %260 = vmatprep.subr.mxu0 0.0
  %261 = vmatpush2.xpose.msra.mxu0 0.0
  %262 = vmatprep.subr.mxu0 0.0
  %263 = vmatpush2.xpose.msra.mxu0 0.0
  %264 = vmatprep.subr.mxu0 0.0
  %265 = vmatpush2.xpose.msra.mxu0 0.0
  %266 = vmatprep.subr.mxu0 0.0
  %267 = vmatpush2.xpose.msra.mxu0 0.0
  %268 = vmatprep.mubr.f32.mxu0 0.0
  %269 = vmatmul.mubr.f32.gmra.mxu0 %v200
  %v270 = vpop.f32.mrf.mxu0
  %v271 = vadd.f32 0.0, %v270
  %v272 = vpop.f32.mrf.mxu0
  %273 = vdwg.mxu0
  %274 = vrot.lane.b32.xlu0 %v172, 96
  %v275 = vpop.permute.xlu0 %274
  %v276 = vsel %vm199, %v172, 0
  %v278 = vsel %vm199, %v275, 0
  %280 = vmatprep.subr.mxu0 0.0
  %281 = vmatpush1.xpose.msra.mxu0 0.0
  %282 = vmatprep.subr.mxu0 0.0
  %283 = vmatpush1.xpose.msra.mxu0 0.0
  %284 = vmatprep.subr.mxu0 0.0
  %285 = vmatpush1.xpose.msra.mxu0 0.0
  %286 = vmatprep.subr.mxu0 0.0
  %287 = vmatpush1.xpose.msra.mxu0 0.0
  %288 = vmatprep.subr.mxu0 0.0
  %289 = vmatpush1.xpose.msra.mxu0 0.0
  %290 = vmatprep.subr.mxu0 0.0
  %291 = vmatpush1.xpose.msra.mxu0 0.0
  %292 = vmatprep.subr.mxu0 0.0
  %293 = vmatpush1.xpose.msra.mxu0 0.0
  %294 = vmatprep.subr.mxu0 0.0
  %295 = vmatpush1.xpose.msra.mxu0 0.0
  %296 = vmatprep.subr.mxu0 0.0
  %297 = vmatpush1.xpose.msra.mxu0 0.0
  %298 = vmatprep.subr.mxu0 0.0
  %299 = vmatpush1.xpose.msra.mxu0 0.0
  %300 = vmatprep.subr.mxu0 0.0
  %301 = vmatpush1.xpose.msra.mxu0 0.0
  %302 = vmatprep.subr.mxu0 0.0
  %303 = vmatpush1.xpose.msra.mxu0 0.0
  %304 = vmatprep.subr.mxu0 0.0
  %305 = vmatpush1.xpose.msra.mxu0 0.0
  %306 = vmatprep.subr.mxu0 0.0
  %307 = vmatpush1.xpose.msra.mxu0 0.0
  %308 = vmatprep.subr.mxu0 0.0
  %309 = vmatpush1.xpose.msra.mxu0 0.0
  %310 = vmatprep.subr.mxu0 0.0
  %311 = vmatpush1.xpose.msra.mxu0 %v278
  %312 = vmatprep.subr.mxu0 0.0
  %313 = vmatpush2.xpose.msra.mxu0 0.0
  %314 = vmatprep.subr.mxu0 0.0
  %315 = vmatpush2.xpose.msra.mxu0 0.0
  %316 = vmatprep.subr.mxu0 0.0
  %317 = vmatpush2.xpose.msra.mxu0 0.0
  %318 = vmatprep.subr.mxu0 0.0
  %319 = vmatpush2.xpose.msra.mxu0 0.0
  %320 = vmatprep.subr.mxu0 0.0
  %321 = vmatpush2.xpose.msra.mxu0 0.0
  %322 = vmatprep.subr.mxu0 0.0
  %323 = vmatpush2.xpose.msra.mxu0 0.0
  %324 = vmatprep.subr.mxu0 0.0
  %325 = vmatpush2.xpose.msra.mxu0 0.0
  %326 = vmatprep.subr.mxu0 0.0
  %327 = vmatpush2.xpose.msra.mxu0 0.0
  %328 = vmatprep.subr.mxu0 0.0
  %329 = vmatpush2.xpose.msra.mxu0 0.0
  %330 = vmatprep.subr.mxu0 0.0
  %331 = vmatpush2.xpose.msra.mxu0 0.0
  %332 = vmatprep.subr.mxu0 0.0
  %333 = vmatpush2.xpose.msra.mxu0 0.0
  %334 = vmatprep.subr.mxu0 0.0
  %335 = vmatpush2.xpose.msra.mxu0 0.0
  %336 = vmatprep.subr.mxu0 0.0
  %337 = vmatpush2.xpose.msra.mxu0 0.0
  %338 = vmatprep.subr.mxu0 0.0
  %339 = vmatpush2.xpose.msra.mxu0 0.0
  %340 = vmatprep.subr.mxu0 0.0
  %341 = vmatpush2.xpose.msra.mxu0 0.0
  %342 = vmatprep.subr.mxu0 0.0
  %343 = vmatpush2.xpose.msra.mxu0 0.0
  %344 = vmatprep.mubr.f32.mxu0 0.0
  %345 = vmatmul.mubr.f32.gmra.mxu0 %v276
  %v346 = vpop.f32.mrf.mxu0
  %v347 = vadd.f32 0.0, %v346
  %v348 = vpop.f32.mrf.mxu0
  %349 = vdwg.mxu0
  %350 = vrot.lane.b32.xlu0 %v178, 96
  %v351 = vpop.permute.xlu0 %350
  %v352 = vsel %vm199, %v178, 0
  %v354 = vsel %vm199, %v351, 0
  %356 = vmatprep.subr.mxu0 0.0
  %357 = vmatpush1.xpose.msra.mxu0 0.0
  %358 = vmatprep.subr.mxu0 0.0
  %359 = vmatpush1.xpose.msra.mxu0 0.0
  %360 = vmatprep.subr.mxu0 0.0
  %361 = vmatpush1.xpose.msra.mxu0 0.0
  %362 = vmatprep.subr.mxu0 0.0
  %363 = vmatpush1.xpose.msra.mxu0 0.0
  %364 = vmatprep.subr.mxu0 0.0
  %365 = vmatpush1.xpose.msra.mxu0 0.0
  %366 = vmatprep.subr.mxu0 0.0
  %367 = vmatpush1.xpose.msra.mxu0 0.0
  %368 = vmatprep.subr.mxu0 0.0
  %369 = vmatpush1.xpose.msra.mxu0 0.0
  %370 = vmatprep.subr.mxu0 0.0
  %371 = vmatpush1.xpose.msra.mxu0 0.0
  %372 = vmatprep.subr.mxu0 0.0
  %373 = vmatpush1.xpose.msra.mxu0 0.0
  %374 = vmatprep.subr.mxu0 0.0
  %375 = vmatpush1.xpose.msra.mxu0 0.0
  %376 = vmatprep.subr.mxu0 0.0
  %377 = vmatpush1.xpose.msra.mxu0 0.0
  %378 = vmatprep.subr.mxu0 0.0
  %379 = vmatpush1.xpose.msra.mxu0 0.0
  %380 = vmatprep.subr.mxu0 0.0
  %381 = vmatpush1.xpose.msra.mxu0 0.0
  %382 = vmatprep.subr.mxu0 0.0
  %383 = vmatpush1.xpose.msra.mxu0 0.0
  %384 = vmatprep.subr.mxu0 0.0
  %385 = vmatpush1.xpose.msra.mxu0 0.0
  %386 = vmatprep.subr.mxu0 0.0
  %387 = vmatpush1.xpose.msra.mxu0 %v354
  %388 = vmatprep.subr.mxu0 0.0
  %389 = vmatpush2.xpose.msra.mxu0 0.0
  %390 = vmatprep.subr.mxu0 0.0
  %391 = vmatpush2.xpose.msra.mxu0 0.0
  %392 = vmatprep.subr.mxu0 0.0
  %393 = vmatpush2.xpose.msra.mxu0 0.0
  %394 = vmatprep.subr.mxu0 0.0
  %395 = vmatpush2.xpose.msra.mxu0 0.0
  %396 = vmatprep.subr.mxu0 0.0
  %397 = vmatpush2.xpose.msra.mxu0 0.0
  %398 = vmatprep.subr.mxu0 0.0
  %399 = vmatpush2.xpose.msra.mxu0 0.0
  %400 = vmatprep.subr.mxu0 0.0
  %401 = vmatpush2.xpose.msra.mxu0 0.0
  %402 = vmatprep.subr.mxu0 0.0
  %403 = vmatpush2.xpose.msra.mxu0 0.0
  %404 = vmatprep.subr.mxu0 0.0
  %405 = vmatpush2.xpose.msra.mxu0 0.0
  %406 = vmatprep.subr.mxu0 0.0
  %407 = vmatpush2.xpose.msra.mxu0 0.0
  %408 = vmatprep.subr.mxu0 0.0
  %409 = vmatpush2.xpose.msra.mxu0 0.0
  %410 = vmatprep.subr.mxu0 0.0
  %411 = vmatpush2.xpose.msra.mxu0 0.0
  %412 = vmatprep.subr.mxu0 0.0
  %413 = vmatpush2.xpose.msra.mxu0 0.0
  %414 = vmatprep.subr.mxu0 0.0
  %415 = vmatpush2.xpose.msra.mxu0 0.0
  %416 = vmatprep.subr.mxu0 0.0
  %417 = vmatpush2.xpose.msra.mxu0 0.0
  %418 = vmatprep.subr.mxu0 0.0
  %419 = vmatpush2.xpose.msra.mxu0 0.0
  %420 = vmatprep.mubr.f32.mxu0 0.0
  %421 = vmatmul.mubr.f32.gmra.mxu0 %v352
  %v422 = vpop.f32.mrf.mxu0
  %v423 = vadd.f32 0.0, %v422
  %v424 = vpop.f32.mrf.mxu0
  %425 = vdwg.mxu0
  %426 = vrot.lane.b32.xlu0 %v180, 96
  %v427 = vpop.permute.xlu0 %426
  %v428 = vsel %vm199, %v180, 0
  %v430 = vsel %vm199, %v427, 0
  %432 = vmatprep.subr.mxu0 0.0
  %433 = vmatpush1.xpose.msra.mxu0 0.0
  %434 = vmatprep.subr.mxu0 0.0
  %435 = vmatpush1.xpose.msra.mxu0 0.0
  %436 = vmatprep.subr.mxu0 0.0
  %437 = vmatpush1.xpose.msra.mxu0 0.0
  %438 = vmatprep.subr.mxu0 0.0
  %439 = vmatpush1.xpose.msra.mxu0 0.0
  %440 = vmatprep.subr.mxu0 0.0
  %441 = vmatpush1.xpose.msra.mxu0 0.0
  %442 = vmatprep.subr.mxu0 0.0
  %443 = vmatpush1.xpose.msra.mxu0 0.0
  %444 = vmatprep.subr.mxu0 0.0
  %445 = vmatpush1.xpose.msra.mxu0 0.0
  %446 = vmatprep.subr.mxu0 0.0
  %447 = vmatpush1.xpose.msra.mxu0 0.0
  %448 = vmatprep.subr.mxu0 0.0
  %449 = vmatpush1.xpose.msra.mxu0 0.0
  %450 = vmatprep.subr.mxu0 0.0
  %451 = vmatpush1.xpose.msra.mxu0 0.0
  %452 = vmatprep.subr.mxu0 0.0
  %453 = vmatpush1.xpose.msra.mxu0 0.0
  %454 = vmatprep.subr.mxu0 0.0
  %455 = vmatpush1.xpose.msra.mxu0 0.0
  %456 = vmatprep.subr.mxu0 0.0
  %457 = vmatpush1.xpose.msra.mxu0 0.0
  %458 = vmatprep.subr.mxu0 0.0
  %459 = vmatpush1.xpose.msra.mxu0 0.0
  %460 = vmatprep.subr.mxu0 0.0
  %461 = vmatpush1.xpose.msra.mxu0 0.0
  %462 = vmatprep.subr.mxu0 0.0
  %463 = vmatpush1.xpose.msra.mxu0 %v430
  %464 = vmatprep.subr.mxu0 0.0
  %465 = vmatpush2.xpose.msra.mxu0 0.0
  %466 = vmatprep.subr.mxu0 0.0
  %467 = vmatpush2.xpose.msra.mxu0 0.0
  %468 = vmatprep.subr.mxu0 0.0
  %469 = vmatpush2.xpose.msra.mxu0 0.0
  %470 = vmatprep.subr.mxu0 0.0
  %471 = vmatpush2.xpose.msra.mxu0 0.0
  %472 = vmatprep.subr.mxu0 0.0
  %473 = vmatpush2.xpose.msra.mxu0 0.0
  %474 = vmatprep.subr.mxu0 0.0
  %475 = vmatpush2.xpose.msra.mxu0 0.0
  %476 = vmatprep.subr.mxu0 0.0
  %477 = vmatpush2.xpose.msra.mxu0 0.0
  %478 = vmatprep.subr.mxu0 0.0
  %479 = vmatpush2.xpose.msra.mxu0 0.0
  %480 = vmatprep.subr.mxu0 0.0
  %481 = vmatpush2.xpose.msra.mxu0 0.0
  %482 = vmatprep.subr.mxu0 0.0
  %483 = vmatpush2.xpose.msra.mxu0 0.0
  %484 = vmatprep.subr.mxu0 0.0
  %485 = vmatpush2.xpose.msra.mxu0 0.0
  %486 = vmatprep.subr.mxu0 0.0
  %487 = vmatpush2.xpose.msra.mxu0 0.0
  %488 = vmatprep.subr.mxu0 0.0
  %489 = vmatpush2.xpose.msra.mxu0 0.0
  %490 = vmatprep.subr.mxu0 0.0
  %491 = vmatpush2.xpose.msra.mxu0 0.0
  %492 = vmatprep.subr.mxu0 0.0
  %493 = vmatpush2.xpose.msra.mxu0 0.0
  %494 = vmatprep.subr.mxu0 0.0
  %495 = vmatpush2.xpose.msra.mxu0 0.0
  %496 = vmatprep.mubr.f32.mxu0 0.0
  %497 = vmatmul.mubr.f32.gmra.mxu0 %v428
  %v498 = vpop.f32.mrf.mxu0
  %v499 = vadd.f32 0.0, %v498
  %v500 = vpop.f32.mrf.mxu0
  %501 = vdwg.mxu0
  %502 = vrot.lane.b32.xlu0 %v182, 96
  %v503 = vpop.permute.xlu0 %502
  %v504 = vsel %vm199, %v182, 0
  %v506 = vsel %vm199, %v503, 0
  %508 = vmatprep.subr.mxu0 0.0
  %509 = vmatpush1.xpose.msra.mxu0 0.0
  %510 = vmatprep.subr.mxu0 0.0
  %511 = vmatpush1.xpose.msra.mxu0 0.0
  %512 = vmatprep.subr.mxu0 0.0
  %513 = vmatpush1.xpose.msra.mxu0 0.0
  %514 = vmatprep.subr.mxu0 0.0
  %515 = vmatpush1.xpose.msra.mxu0 0.0
  %516 = vmatprep.subr.mxu0 0.0
  %517 = vmatpush1.xpose.msra.mxu0 0.0
  %518 = vmatprep.subr.mxu0 0.0
  %519 = vmatpush1.xpose.msra.mxu0 0.0
  %520 = vmatprep.subr.mxu0 0.0
  %521 = vmatpush1.xpose.msra.mxu0 0.0
  %522 = vmatprep.subr.mxu0 0.0
  %523 = vmatpush1.xpose.msra.mxu0 0.0
  %524 = vmatprep.subr.mxu0 0.0
  %525 = vmatpush1.xpose.msra.mxu0 0.0
  %526 = vmatprep.subr.mxu0 0.0
  %527 = vmatpush1.xpose.msra.mxu0 0.0
  %528 = vmatprep.subr.mxu0 0.0
  %529 = vmatpush1.xpose.msra.mxu0 0.0
  %530 = vmatprep.subr.mxu0 0.0
  %531 = vmatpush1.xpose.msra.mxu0 0.0
  %532 = vmatprep.subr.mxu0 0.0
  %533 = vmatpush1.xpose.msra.mxu0 0.0
  %534 = vmatprep.subr.mxu0 0.0
  %535 = vmatpush1.xpose.msra.mxu0 0.0
  %536 = vmatprep.subr.mxu0 0.0
  %537 = vmatpush1.xpose.msra.mxu0 0.0
  %538 = vmatprep.subr.mxu0 0.0
  %539 = vmatpush1.xpose.msra.mxu0 %v506
  %540 = vmatprep.subr.mxu0 0.0
  %541 = vmatpush2.xpose.msra.mxu0 0.0
  %542 = vmatprep.subr.mxu0 0.0
  %543 = vmatpush2.xpose.msra.mxu0 0.0
  %544 = vmatprep.subr.mxu0 0.0
  %545 = vmatpush2.xpose.msra.mxu0 0.0
  %546 = vmatprep.subr.mxu0 0.0
  %547 = vmatpush2.xpose.msra.mxu0 0.0
  %548 = vmatprep.subr.mxu0 0.0
  %549 = vmatpush2.xpose.msra.mxu0 0.0
  %550 = vmatprep.subr.mxu0 0.0
  %551 = vmatpush2.xpose.msra.mxu0 0.0
  %552 = vmatprep.subr.mxu0 0.0
  %553 = vmatpush2.xpose.msra.mxu0 0.0
  %554 = vmatprep.subr.mxu0 0.0
  %555 = vmatpush2.xpose.msra.mxu0 0.0
  %556 = vmatprep.subr.mxu0 0.0
  %557 = vmatpush2.xpose.msra.mxu0 0.0
  %558 = vmatprep.subr.mxu0 0.0
  %559 = vmatpush2.xpose.msra.mxu0 0.0
  %560 = vmatprep.subr.mxu0 0.0
  %561 = vmatpush2.xpose.msra.mxu0 0.0
  %562 = vmatprep.subr.mxu0 0.0
  %563 = vmatpush2.xpose.msra.mxu0 0.0
  %564 = vmatprep.subr.mxu0 0.0
  %565 = vmatpush2.xpose.msra.mxu0 0.0
  %566 = vmatprep.subr.mxu0 0.0
  %567 = vmatpush2.xpose.msra.mxu0 0.0
  %568 = vmatprep.subr.mxu0 0.0
  %569 = vmatpush2.xpose.msra.mxu0 0.0
  %570 = vmatprep.subr.mxu0 0.0
  %571 = vmatpush2.xpose.msra.mxu0 0.0
  %572 = vmatprep.mubr.f32.mxu0 0.0
  %573 = vmatmul.mubr.f32.gmra.mxu0 %v504
  %v574 = vpop.f32.mrf.mxu0
  %v575 = vadd.f32 0.0, %v574
  %v576 = vpop.f32.mrf.mxu0
  %577 = vdwg.mxu0
  %578 = vrot.lane.b32.xlu0 %v184, 96
  %v579 = vpop.permute.xlu0 %578
  %v580 = vsel %vm199, %v184, 0
  %v582 = vsel %vm199, %v579, 0
  %584 = vmatprep.subr.mxu0 0.0
  %585 = vmatpush1.xpose.msra.mxu0 0.0
  %586 = vmatprep.subr.mxu0 0.0
  %587 = vmatpush1.xpose.msra.mxu0 0.0
  %588 = vmatprep.subr.mxu0 0.0
  %589 = vmatpush1.xpose.msra.mxu0 0.0
  %590 = vmatprep.subr.mxu0 0.0
  %591 = vmatpush1.xpose.msra.mxu0 0.0
  %592 = vmatprep.subr.mxu0 0.0
  %593 = vmatpush1.xpose.msra.mxu0 0.0
  %594 = vmatprep.subr.mxu0 0.0
  %595 = vmatpush1.xpose.msra.mxu0 0.0
  %596 = vmatprep.subr.mxu0 0.0
  %597 = vmatpush1.xpose.msra.mxu0 0.0
  %598 = vmatprep.subr.mxu0 0.0
  %599 = vmatpush1.xpose.msra.mxu0 0.0
  %600 = vmatprep.subr.mxu0 0.0
  %601 = vmatpush1.xpose.msra.mxu0 0.0
  %602 = vmatprep.subr.mxu0 0.0
  %603 = vmatpush1.xpose.msra.mxu0 0.0
  %604 = vmatprep.subr.mxu0 0.0
  %605 = vmatpush1.xpose.msra.mxu0 0.0
  %606 = vmatprep.subr.mxu0 0.0
  %607 = vmatpush1.xpose.msra.mxu0 0.0
  %608 = vmatprep.subr.mxu0 0.0
  %609 = vmatpush1.xpose.msra.mxu0 0.0
  %610 = vmatprep.subr.mxu0 0.0
  %611 = vmatpush1.xpose.msra.mxu0 0.0
  %612 = vmatprep.subr.mxu0 0.0
  %613 = vmatpush1.xpose.msra.mxu0 0.0
  %614 = vmatprep.subr.mxu0 0.0
  %615 = vmatpush1.xpose.msra.mxu0 %v582
  %616 = vmatprep.subr.mxu0 0.0
  %617 = vmatpush2.xpose.msra.mxu0 0.0
  %618 = vmatprep.subr.mxu0 0.0
  %619 = vmatpush2.xpose.msra.mxu0 0.0
  %620 = vmatprep.subr.mxu0 0.0
  %621 = vmatpush2.xpose.msra.mxu0 0.0
  %622 = vmatprep.subr.mxu0 0.0
  %623 = vmatpush2.xpose.msra.mxu0 0.0
  %624 = vmatprep.subr.mxu0 0.0
  %625 = vmatpush2.xpose.msra.mxu0 0.0
  %626 = vmatprep.subr.mxu0 0.0
  %627 = vmatpush2.xpose.msra.mxu0 0.0
  %628 = vmatprep.subr.mxu0 0.0
  %629 = vmatpush2.xpose.msra.mxu0 0.0
  %630 = vmatprep.subr.mxu0 0.0
  %631 = vmatpush2.xpose.msra.mxu0 0.0
  %632 = vmatprep.subr.mxu0 0.0
  %633 = vmatpush2.xpose.msra.mxu0 0.0
  %634 = vmatprep.subr.mxu0 0.0
  %635 = vmatpush2.xpose.msra.mxu0 0.0
  %636 = vmatprep.subr.mxu0 0.0
  %637 = vmatpush2.xpose.msra.mxu0 0.0
  %638 = vmatprep.subr.mxu0 0.0
  %639 = vmatpush2.xpose.msra.mxu0 0.0
  %640 = vmatprep.subr.mxu0 0.0
  %641 = vmatpush2.xpose.msra.mxu0 0.0
  %642 = vmatprep.subr.mxu0 0.0
  %643 = vmatpush2.xpose.msra.mxu0 0.0
  %644 = vmatprep.subr.mxu0 0.0
  %645 = vmatpush2.xpose.msra.mxu0 0.0
  %646 = vmatprep.subr.mxu0 0.0
  %647 = vmatpush2.xpose.msra.mxu0 0.0
  %648 = vmatprep.mubr.f32.mxu0 0.0
  %649 = vmatmul.mubr.f32.gmra.mxu0 %v580
  %v650 = vpop.f32.mrf.mxu0
  %v651 = vadd.f32 0.0, %v650
  %v652 = vpop.f32.mrf.mxu0
  %653 = vdwg.mxu0
  %654 = vrot.lane.b32.xlu0 %v186, 96
  %v655 = vpop.permute.xlu0 %654
  %v656 = vsel %vm199, %v186, 0
  %v658 = vsel %vm199, %v655, 0
  %660 = vmatprep.subr.mxu0 0.0
  %661 = vmatpush1.xpose.msra.mxu0 0.0
  %662 = vmatprep.subr.mxu0 0.0
  %663 = vmatpush1.xpose.msra.mxu0 0.0
  %664 = vmatprep.subr.mxu0 0.0
  %665 = vmatpush1.xpose.msra.mxu0 0.0
  %666 = vmatprep.subr.mxu0 0.0
  %667 = vmatpush1.xpose.msra.mxu0 0.0
  %668 = vmatprep.subr.mxu0 0.0
  %669 = vmatpush1.xpose.msra.mxu0 0.0
  %670 = vmatprep.subr.mxu0 0.0
  %671 = vmatpush1.xpose.msra.mxu0 0.0
  %672 = vmatprep.subr.mxu0 0.0
  %673 = vmatpush1.xpose.msra.mxu0 0.0
  %674 = vmatprep.subr.mxu0 0.0
  %675 = vmatpush1.xpose.msra.mxu0 0.0
  %676 = vmatprep.subr.mxu0 0.0
  %677 = vmatpush1.xpose.msra.mxu0 0.0
  %678 = vmatprep.subr.mxu0 0.0
  %679 = vmatpush1.xpose.msra.mxu0 0.0
  %680 = vmatprep.subr.mxu0 0.0
  %681 = vmatpush1.xpose.msra.mxu0 0.0
  %682 = vmatprep.subr.mxu0 0.0
  %683 = vmatpush1.xpose.msra.mxu0 0.0
  %684 = vmatprep.subr.mxu0 0.0
  %685 = vmatpush1.xpose.msra.mxu0 0.0
  %686 = vmatprep.subr.mxu0 0.0
  %687 = vmatpush1.xpose.msra.mxu0 0.0
  %688 = vmatprep.subr.mxu0 0.0
  %689 = vmatpush1.xpose.msra.mxu0 0.0
  %690 = vmatprep.subr.mxu0 0.0
  %691 = vmatpush1.xpose.msra.mxu0 %v658
  %692 = vmatprep.subr.mxu0 0.0
  %693 = vmatpush2.xpose.msra.mxu0 0.0
  %694 = vmatprep.subr.mxu0 0.0
  %695 = vmatpush2.xpose.msra.mxu0 0.0
  %696 = vmatprep.subr.mxu0 0.0
  %697 = vmatpush2.xpose.msra.mxu0 0.0
  %698 = vmatprep.subr.mxu0 0.0
  %699 = vmatpush2.xpose.msra.mxu0 0.0
  %700 = vmatprep.subr.mxu0 0.0
  %701 = vmatpush2.xpose.msra.mxu0 0.0
  %702 = vmatprep.subr.mxu0 0.0
  %703 = vmatpush2.xpose.msra.mxu0 0.0
  %704 = vmatprep.subr.mxu0 0.0
  %705 = vmatpush2.xpose.msra.mxu0 0.0
  %706 = vmatprep.subr.mxu0 0.0
  %707 = vmatpush2.xpose.msra.mxu0 0.0
  %708 = vmatprep.subr.mxu0 0.0
  %709 = vmatpush2.xpose.msra.mxu0 0.0
  %710 = vmatprep.subr.mxu0 0.0
  %711 = vmatpush2.xpose.msra.mxu0 0.0
  %712 = vmatprep.subr.mxu0 0.0
  %713 = vmatpush2.xpose.msra.mxu0 0.0
  %714 = vmatprep.subr.mxu0 0.0
  %715 = vmatpush2.xpose.msra.mxu0 0.0
  %716 = vmatprep.subr.mxu0 0.0
  %717 = vmatpush2.xpose.msra.mxu0 0.0
  %718 = vmatprep.subr.mxu0 0.0
  %719 = vmatpush2.xpose.msra.mxu0 0.0
  %720 = vmatprep.subr.mxu0 0.0
  %721 = vmatpush2.xpose.msra.mxu0 0.0
  %722 = vmatprep.subr.mxu0 0.0
  %723 = vmatpush2.xpose.msra.mxu0 0.0
  %724 = vmatprep.mubr.f32.mxu0 0.0
  %725 = vmatmul.mubr.f32.gmra.mxu0 %v656
  %v726 = vpop.f32.mrf.mxu0
  %v727 = vadd.f32 0.0, %v726
  %v728 = vpop.f32.mrf.mxu0
  %729 = vdwg.mxu0
  %730 = vrot.lane.b32.xlu0 %v188, 96
  %v731 = vpop.permute.xlu0 %730
  %v732 = vsel %vm199, %v188, 0
  %v734 = vsel %vm199, %v731, 0
  %736 = vmatprep.subr.mxu0 0.0
  %737 = vmatpush1.xpose.msra.mxu0 0.0
  %738 = vmatprep.subr.mxu0 0.0
  %739 = vmatpush1.xpose.msra.mxu0 0.0
  %740 = vmatprep.subr.mxu0 0.0
  %741 = vmatpush1.xpose.msra.mxu0 0.0
  %742 = vmatprep.subr.mxu0 0.0
  %743 = vmatpush1.xpose.msra.mxu0 0.0
  %744 = vmatprep.subr.mxu0 0.0
  %745 = vmatpush1.xpose.msra.mxu0 0.0
  %746 = vmatprep.subr.mxu0 0.0
  %747 = vmatpush1.xpose.msra.mxu0 0.0
  %748 = vmatprep.subr.mxu0 0.0
  %749 = vmatpush1.xpose.msra.mxu0 0.0
  %750 = vmatprep.subr.mxu0 0.0
  %751 = vmatpush1.xpose.msra.mxu0 0.0
  %752 = vmatprep.subr.mxu0 0.0
  %753 = vmatpush1.xpose.msra.mxu0 0.0
  %754 = vmatprep.subr.mxu0 0.0
  %755 = vmatpush1.xpose.msra.mxu0 0.0
  %756 = vmatprep.subr.mxu0 0.0
  %757 = vmatpush1.xpose.msra.mxu0 0.0
  %758 = vmatprep.subr.mxu0 0.0
  %759 = vmatpush1.xpose.msra.mxu0 0.0
  %760 = vmatprep.subr.mxu0 0.0
  %761 = vmatpush1.xpose.msra.mxu0 0.0
  %762 = vmatprep.subr.mxu0 0.0
  %763 = vmatpush1.xpose.msra.mxu0 0.0
  %764 = vmatprep.subr.mxu0 0.0
  %765 = vmatpush1.xpose.msra.mxu0 0.0
  %766 = vmatprep.subr.mxu0 0.0
  %767 = vmatpush1.xpose.msra.mxu0 %v734
  %768 = vmatprep.subr.mxu0 0.0
  %769 = vmatpush2.xpose.msra.mxu0 0.0
  %770 = vmatprep.subr.mxu0 0.0
  %771 = vmatpush2.xpose.msra.mxu0 0.0
  %772 = vmatprep.subr.mxu0 0.0
  %773 = vmatpush2.xpose.msra.mxu0 0.0
  %774 = vmatprep.subr.mxu0 0.0
  %775 = vmatpush2.xpose.msra.mxu0 0.0
  %776 = vmatprep.subr.mxu0 0.0
  %777 = vmatpush2.xpose.msra.mxu0 0.0
  %778 = vmatprep.subr.mxu0 0.0
  %779 = vmatpush2.xpose.msra.mxu0 0.0
  %780 = vmatprep.subr.mxu0 0.0
  %781 = vmatpush2.xpose.msra.mxu0 0.0
  %782 = vmatprep.subr.mxu0 0.0
  %783 = vmatpush2.xpose.msra.mxu0 0.0
  %784 = vmatprep.subr.mxu0 0.0
  %785 = vmatpush2.xpose.msra.mxu0 0.0
  %786 = vmatprep.subr.mxu0 0.0
  %787 = vmatpush2.xpose.msra.mxu0 0.0
  %788 = vmatprep.subr.mxu0 0.0
  %789 = vmatpush2.xpose.msra.mxu0 0.0
  %790 = vmatprep.subr.mxu0 0.0
  %791 = vmatpush2.xpose.msra.mxu0 0.0
  %792 = vmatprep.subr.mxu0 0.0
  %793 = vmatpush2.xpose.msra.mxu0 0.0
  %794 = vmatprep.subr.mxu0 0.0
  %795 = vmatpush2.xpose.msra.mxu0 0.0
  %796 = vmatprep.subr.mxu0 0.0
  %797 = vmatpush2.xpose.msra.mxu0 0.0
  %798 = vmatprep.subr.mxu0 0.0
  %799 = vmatpush2.xpose.msra.mxu0 0.0
  %800 = vmatprep.mubr.f32.mxu0 0.0
  %801 = vmatmul.mubr.f32.gmra.mxu0 %v732
  %v802 = vpop.f32.mrf.mxu0
  %v803 = vadd.f32 0.0, %v802
  %v804 = vpop.f32.mrf.mxu0
  %805 = vdwg.mxu0
  %v806 = vmul.f32 %v271, 0.35355338
  %v807 = vmul.f32 %v347, 0.35355338
  %v808 = vmul.f32 %v423, 0.35355338
  %v809 = vmul.f32 %v499, 0.35355338
  %v810 = vmul.f32 %v575, 0.35355338
  %v811 = vmul.f32 %v651, 0.35355338
  %v812 = vmul.f32 %v727, 0.35355338
  %v813 = vmul.f32 %v803, 0.35355338
  %v814 = vadd.f32 %v806, %v189
  %v815 = vadd.f32 %v807, %v190
  %v816 = vadd.f32 %v808, %v191
  %v817 = vadd.f32 %v809, %v192
  %v818 = vadd.f32 %v810, %v193
  %v819 = vadd.f32 %v811, %v194
  %v820 = vadd.f32 %v812, %v195
  %v821 = vadd.f32 %v813, %v196
  %v822 = vsel %vm199, %v814, -inf
  %823 = vmax.xlane.f32.xlu0 %v822
  %v824 = vpop.xlane.xlu0 %823
  %v825 = vsel %vm199, %v815, -inf
  %826 = vmax.xlane.f32.xlu0 %v825
  %v827 = vpop.xlane.xlu0 %826
  %v828 = vsel %vm199, %v816, -inf
  %829 = vmax.xlane.f32.xlu0 %v828
  %v830 = vpop.xlane.xlu0 %829
  %v831 = vsel %vm199, %v817, -inf
  %832 = vmax.xlane.f32.xlu0 %v831
  %v833 = vpop.xlane.xlu0 %832
  %v834 = vsel %vm199, %v818, -inf
  %835 = vmax.xlane.f32.xlu0 %v834
  %v836 = vpop.xlane.xlu0 %835
  %v837 = vsel %vm199, %v819, -inf
  %838 = vmax.xlane.f32.xlu0 %v837
  %v839 = vpop.xlane.xlu0 %838
  %v840 = vsel %vm199, %v820, -inf
  %841 = vmax.xlane.f32.xlu0 %v840
  %v842 = vpop.xlane.xlu0 %841
  %v843 = vsel %vm199, %v821, -inf
  %844 = vmax.xlane.f32.xlu0 %v843
  %v845 = vpop.xlane.xlu0 %844
  %v846 = vsub.f32 %v814, %v824
  %v847 = vsub.f32 %v815, %v827
  %v848 = vsub.f32 %v816, %v830
  %v849 = vsub.f32 %v817, %v833
  %v850 = vsub.f32 %v818, %v836
  %v851 = vsub.f32 %v819, %v839
  %v852 = vsub.f32 %v820, %v842
  %v853 = vsub.f32 %v821, %v845
  %v854 = vmul.f32 %v846, 1.442695
  %v855 = vpow.pop %v854
  %v856 = vmul.f32 %v847, 1.442695
  %v857 = vpow.pop %v856
  %v858 = vmul.f32 %v848, 1.442695
  %v859 = vpow.pop %v858
  %v860 = vmul.f32 %v849, 1.442695
  %v861 = vpow.pop %v860
  %v862 = vmul.f32 %v850, 1.442695
  %v863 = vpow.pop %v862
  %v864 = vmul.f32 %v851, 1.442695
  %v865 = vpow.pop %v864
  %v866 = vmul.f32 %v852, 1.442695
  %v867 = vpow.pop %v866
  %v868 = vmul.f32 %v853, 1.442695
  %v869 = vpow.pop %v868
  %v870 = vsel %vm199, %v855, 0.0
  %871 = vadd.xlane.f32.xlu0 %v870
  %v872 = vpop.xlane.xlu0 %871
  %v873 = vsel %vm199, %v857, 0.0
  %874 = vadd.xlane.f32.xlu0 %v873
  %v875 = vpop.xlane.xlu0 %874
  %v876 = vsel %vm199, %v859, 0.0
  %877 = vadd.xlane.f32.xlu0 %v876
  %v878 = vpop.xlane.xlu0 %877
  %v879 = vsel %vm199, %v861, 0.0
  %880 = vadd.xlane.f32.xlu0 %v879
  %v881 = vpop.xlane.xlu0 %880
  %v882 = vsel %vm199, %v863, 0.0
  %883 = vadd.xlane.f32.xlu0 %v882
  %v884 = vpop.xlane.xlu0 %883
  %v885 = vsel %vm199, %v865, 0.0
  %886 = vadd.xlane.f32.xlu0 %v885
  %v887 = vpop.xlane.xlu0 %886
  %v888 = vsel %vm199, %v867, 0.0
  %889 = vadd.xlane.f32.xlu0 %v888
  %v890 = vpop.xlane.xlu0 %889
  %v891 = vsel %vm199, %v869, 0.0
  %892 = vadd.xlane.f32.xlu0 %v891
  %v893 = vpop.xlane.xlu0 %892
  %v894 = vrcp.pop %v872
  %v895 = vrcp.pop %v875
  %v896 = vrcp.pop %v878
  %v897 = vrcp.pop %v881
  %v898 = vrcp.pop %v884
  %v899 = vrcp.pop %v887
  %v900 = vrcp.pop %v890
  %v901 = vrcp.pop %v893
  %v902 = vmul.f32 %v855, %v894
  %v903 = vmul.f32 %v857, %v895
  %v904 = vmul.f32 %v859, %v896
  %v905 = vmul.f32 %v861, %v897
  %v906 = vmul.f32 %v863, %v898
  %v907 = vmul.f32 %v865, %v899
  %v908 = vmul.f32 %v867, %v900
  %v909 = vmul.f32 %v869, %v901
  %910 = vrot.lane.b32.xlu0 %v167, 64
  %v911 = vpop.permute.xlu0 %910
  %v914 = vsel %vm199, %v902, 0
  %916 = vmatprep.subr.mxu0 0.0
  %917 = vmatpush1.msra.mxu0 0.0
  %918 = vmatprep.subr.mxu0 0.0
  %919 = vmatpush1.msra.mxu0 0.0
  %920 = vmatprep.subr.mxu0 0.0
  %921 = vmatpush1.msra.mxu0 0.0
  %922 = vmatprep.subr.mxu0 0.0
  %923 = vmatpush1.msra.mxu0 0.0
  %924 = vmatprep.subr.mxu0 0.0
  %925 = vmatpush1.msra.mxu0 0.0
  %926 = vmatprep.subr.mxu0 0.0
  %927 = vmatpush1.msra.mxu0 0.0
  %928 = vmatprep.subr.mxu0 0.0
  %929 = vmatpush1.msra.mxu0 0.0
  %930 = vmatprep.subr.mxu0 0.0
  %931 = vmatpush1.msra.mxu0 0.0
  %932 = vmatprep.subr.mxu0 0.0
  %933 = vmatpush1.msra.mxu0 0.0
  %934 = vmatprep.subr.mxu0 0.0
  %935 = vmatpush1.msra.mxu0 0.0
  %936 = vmatprep.subr.mxu0 0.0
  %937 = vmatpush1.msra.mxu0 0.0
  %938 = vmatprep.subr.mxu0 0.0
  %939 = vmatpush1.msra.mxu0 0.0
  %940 = vmatprep.subr.mxu0 0.0
  %941 = vmatpush1.msra.mxu0 0.0
  %942 = vmatprep.subr.mxu0 0.0
  %943 = vmatpush1.msra.mxu0 0.0
  %944 = vmatprep.subr.mxu0 0.0
  %945 = vmatpush1.msra.mxu0 0.0
  %946 = vmatprep.subr.mxu0 0.0
  %947 = vmatpush1.msra.mxu0 %v911
  %948 = vmatprep.subr.mxu0 0.0
  %949 = vmatpush2.msra.mxu0 0.0
  %950 = vmatprep.subr.mxu0 0.0
  %951 = vmatpush2.msra.mxu0 0.0
  %952 = vmatprep.subr.mxu0 0.0
  %953 = vmatpush2.msra.mxu0 0.0
  %954 = vmatprep.subr.mxu0 0.0
  %955 = vmatpush2.msra.mxu0 0.0
  %956 = vmatprep.subr.mxu0 0.0
  %957 = vmatpush2.msra.mxu0 0.0
  %958 = vmatprep.subr.mxu0 0.0
  %959 = vmatpush2.msra.mxu0 0.0
  %960 = vmatprep.subr.mxu0 0.0
  %961 = vmatpush2.msra.mxu0 0.0
  %962 = vmatprep.subr.mxu0 0.0
  %963 = vmatpush2.msra.mxu0 0.0
  %964 = vmatprep.subr.mxu0 0.0
  %965 = vmatpush2.msra.mxu0 0.0
  %966 = vmatprep.subr.mxu0 0.0
  %967 = vmatpush2.msra.mxu0 0.0
  %968 = vmatprep.subr.mxu0 0.0
  %969 = vmatpush2.msra.mxu0 0.0
  %970 = vmatprep.subr.mxu0 0.0
  %971 = vmatpush2.msra.mxu0 0.0
  %972 = vmatprep.subr.mxu0 0.0
  %973 = vmatpush2.msra.mxu0 0.0
  %974 = vmatprep.subr.mxu0 0.0
  %975 = vmatpush2.msra.mxu0 0.0
  %976 = vmatprep.subr.mxu0 0.0
  %977 = vmatpush2.msra.mxu0 0.0
  %978 = vmatprep.subr.mxu0 0.0
  %979 = vmatpush2.msra.mxu0 0.0
  %980 = vmatprep.mubr.f32.mxu0 0.0
  %981 = vmatmul.mubr.f32.gmra.mxu0 %v914
  %v982 = vpop.f32.mrf.mxu0
  %v983 = vadd.f32 0.0, %v982
  %v984 = vpop.f32.mrf.mxu0
  %985 = vdwg.mxu0
  %986 = vrot.lane.b32.xlu0 %v172, 64
  %v987 = vpop.permute.xlu0 %986
  %v990 = vsel %vm199, %v903, 0
  %992 = vmatprep.subr.mxu0 0.0
  %993 = vmatpush1.msra.mxu0 0.0
  %994 = vmatprep.subr.mxu0 0.0
  %995 = vmatpush1.msra.mxu0 0.0
  %996 = vmatprep.subr.mxu0 0.0
  %997 = vmatpush1.msra.mxu0 0.0
  %998 = vmatprep.subr.mxu0 0.0
  %999 = vmatpush1.msra.mxu0 0.0
  %1000 = vmatprep.subr.mxu0 0.0
  %1001 = vmatpush1.msra.mxu0 0.0
  %1002 = vmatprep.subr.mxu0 0.0
  %1003 = vmatpush1.msra.mxu0 0.0
  %1004 = vmatprep.subr.mxu0 0.0
  %1005 = vmatpush1.msra.mxu0 0.0
  %1006 = vmatprep.subr.mxu0 0.0
  %1007 = vmatpush1.msra.mxu0 0.0
  %1008 = vmatprep.subr.mxu0 0.0
  %1009 = vmatpush1.msra.mxu0 0.0
  %1010 = vmatprep.subr.mxu0 0.0
  %1011 = vmatpush1.msra.mxu0 0.0
  %1012 = vmatprep.subr.mxu0 0.0
  %1013 = vmatpush1.msra.mxu0 0.0
  %1014 = vmatprep.subr.mxu0 0.0
  %1015 = vmatpush1.msra.mxu0 0.0
  %1016 = vmatprep.subr.mxu0 0.0
  %1017 = vmatpush1.msra.mxu0 0.0
  %1018 = vmatprep.subr.mxu0 0.0
  %1019 = vmatpush1.msra.mxu0 0.0
  %1020 = vmatprep.subr.mxu0 0.0
  %1021 = vmatpush1.msra.mxu0 0.0
  %1022 = vmatprep.subr.mxu0 0.0
  %1023 = vmatpush1.msra.mxu0 %v987
  %1024 = vmatprep.subr.mxu0 0.0
  %1025 = vmatpush2.msra.mxu0 0.0
  %1026 = vmatprep.subr.mxu0 0.0
  %1027 = vmatpush2.msra.mxu0 0.0
  %1028 = vmatprep.subr.mxu0 0.0
  %1029 = vmatpush2.msra.mxu0 0.0
  %1030 = vmatprep.subr.mxu0 0.0
  %1031 = vmatpush2.msra.mxu0 0.0
  %1032 = vmatprep.subr.mxu0 0.0
  %1033 = vmatpush2.msra.mxu0 0.0
  %1034 = vmatprep.subr.mxu0 0.0
  %1035 = vmatpush2.msra.mxu0 0.0
  %1036 = vmatprep.subr.mxu0 0.0
  %1037 = vmatpush2.msra.mxu0 0.0
  %1038 = vmatprep.subr.mxu0 0.0
  %1039 = vmatpush2.msra.mxu0 0.0
  %1040 = vmatprep.subr.mxu0 0.0
  %1041 = vmatpush2.msra.mxu0 0.0
  %1042 = vmatprep.subr.mxu0 0.0
  %1043 = vmatpush2.msra.mxu0 0.0
  %1044 = vmatprep.subr.mxu0 0.0
  %1045 = vmatpush2.msra.mxu0 0.0
  %1046 = vmatprep.subr.mxu0 0.0
  %1047 = vmatpush2.msra.mxu0 0.0
  %1048 = vmatprep.subr.mxu0 0.0
  %1049 = vmatpush2.msra.mxu0 0.0
  %1050 = vmatprep.subr.mxu0 0.0
  %1051 = vmatpush2.msra.mxu0 0.0
  %1052 = vmatprep.subr.mxu0 0.0
  %1053 = vmatpush2.msra.mxu0 0.0
  %1054 = vmatprep.subr.mxu0 0.0
  %1055 = vmatpush2.msra.mxu0 0.0
  %1056 = vmatprep.mubr.f32.mxu0 0.0
  %1057 = vmatmul.mubr.f32.gmra.mxu0 %v990
  %v1058 = vpop.f32.mrf.mxu0
  %v1059 = vadd.f32 0.0, %v1058
  %v1060 = vpop.f32.mrf.mxu0
  %1061 = vdwg.mxu0
  %1062 = vrot.lane.b32.xlu0 %v178, 64
  %v1063 = vpop.permute.xlu0 %1062
  %v1066 = vsel %vm199, %v904, 0
  %1068 = vmatprep.subr.mxu0 0.0
  %1069 = vmatpush1.msra.mxu0 0.0
  %1070 = vmatprep.subr.mxu0 0.0
  %1071 = vmatpush1.msra.mxu0 0.0
  %1072 = vmatprep.subr.mxu0 0.0
  %1073 = vmatpush1.msra.mxu0 0.0
  %1074 = vmatprep.subr.mxu0 0.0
  %1075 = vmatpush1.msra.mxu0 0.0
  %1076 = vmatprep.subr.mxu0 0.0
  %1077 = vmatpush1.msra.mxu0 0.0
  %1078 = vmatprep.subr.mxu0 0.0
  %1079 = vmatpush1.msra.mxu0 0.0
  %1080 = vmatprep.subr.mxu0 0.0
  %1081 = vmatpush1.msra.mxu0 0.0
  %1082 = vmatprep.subr.mxu0 0.0
  %1083 = vmatpush1.msra.mxu0 0.0
  %1084 = vmatprep.subr.mxu0 0.0
  %1085 = vmatpush1.msra.mxu0 0.0
  %1086 = vmatprep.subr.mxu0 0.0
  %1087 = vmatpush1.msra.mxu0 0.0
  %1088 = vmatprep.subr.mxu0 0.0
  %1089 = vmatpush1.msra.mxu0 0.0
  %1090 = vmatprep.subr.mxu0 0.0
  %1091 = vmatpush1.msra.mxu0 0.0
  %1092 = vmatprep.subr.mxu0 0.0
  %1093 = vmatpush1.msra.mxu0 0.0
  %1094 = vmatprep.subr.mxu0 0.0
  %1095 = vmatpush1.msra.mxu0 0.0
  %1096 = vmatprep.subr.mxu0 0.0
  %1097 = vmatpush1.msra.mxu0 0.0
  %1098 = vmatprep.subr.mxu0 0.0
  %1099 = vmatpush1.msra.mxu0 %v1063
  %1100 = vmatprep.subr.mxu0 0.0
  %1101 = vmatpush2.msra.mxu0 0.0
  %1102 = vmatprep.subr.mxu0 0.0
  %1103 = vmatpush2.msra.mxu0 0.0
  %1104 = vmatprep.subr.mxu0 0.0
  %1105 = vmatpush2.msra.mxu0 0.0
  %1106 = vmatprep.subr.mxu0 0.0
  %1107 = vmatpush2.msra.mxu0 0.0
  %1108 = vmatprep.subr.mxu0 0.0
  %1109 = vmatpush2.msra.mxu0 0.0
  %1110 = vmatprep.subr.mxu0 0.0
  %1111 = vmatpush2.msra.mxu0 0.0
  %1112 = vmatprep.subr.mxu0 0.0
  %1113 = vmatpush2.msra.mxu0 0.0
  %1114 = vmatprep.subr.mxu0 0.0
  %1115 = vmatpush2.msra.mxu0 0.0
  %1116 = vmatprep.subr.mxu0 0.0
  %1117 = vmatpush2.msra.mxu0 0.0
  %1118 = vmatprep.subr.mxu0 0.0
  %1119 = vmatpush2.msra.mxu0 0.0
  %1120 = vmatprep.subr.mxu0 0.0
  %1121 = vmatpush2.msra.mxu0 0.0
  %1122 = vmatprep.subr.mxu0 0.0
  %1123 = vmatpush2.msra.mxu0 0.0
  %1124 = vmatprep.subr.mxu0 0.0
  %1125 = vmatpush2.msra.mxu0 0.0
  %1126 = vmatprep.subr.mxu0 0.0
  %1127 = vmatpush2.msra.mxu0 0.0
  %1128 = vmatprep.subr.mxu0 0.0
  %1129 = vmatpush2.msra.mxu0 0.0
  %1130 = vmatprep.subr.mxu0 0.0
  %1131 = vmatpush2.msra.mxu0 0.0
  %1132 = vmatprep.mubr.f32.mxu0 0.0
  %1133 = vmatmul.mubr.f32.gmra.mxu0 %v1066
  %v1134 = vpop.f32.mrf.mxu0
  %v1135 = vadd.f32 0.0, %v1134
  %v1136 = vpop.f32.mrf.mxu0
  %1137 = vdwg.mxu0
  %1138 = vrot.lane.b32.xlu0 %v180, 64
  %v1139 = vpop.permute.xlu0 %1138
  %v1142 = vsel %vm199, %v905, 0
  %1144 = vmatprep.subr.mxu0 0.0
  %1145 = vmatpush1.msra.mxu0 0.0
  %1146 = vmatprep.subr.mxu0 0.0
  %1147 = vmatpush1.msra.mxu0 0.0
  %1148 = vmatprep.subr.mxu0 0.0
  %1149 = vmatpush1.msra.mxu0 0.0
  %1150 = vmatprep.subr.mxu0 0.0
  %1151 = vmatpush1.msra.mxu0 0.0
  %1152 = vmatprep.subr.mxu0 0.0
  %1153 = vmatpush1.msra.mxu0 0.0
  %1154 = vmatprep.subr.mxu0 0.0
  %1155 = vmatpush1.msra.mxu0 0.0
  %1156 = vmatprep.subr.mxu0 0.0
  %1157 = vmatpush1.msra.mxu0 0.0
  %1158 = vmatprep.subr.mxu0 0.0
  %1159 = vmatpush1.msra.mxu0 0.0
  %1160 = vmatprep.subr.mxu0 0.0
  %1161 = vmatpush1.msra.mxu0 0.0
  %1162 = vmatprep.subr.mxu0 0.0
  %1163 = vmatpush1.msra.mxu0 0.0
  %1164 = vmatprep.subr.mxu0 0.0
  %1165 = vmatpush1.msra.mxu0 0.0
  %1166 = vmatprep.subr.mxu0 0.0
  %1167 = vmatpush1.msra.mxu0 0.0
  %1168 = vmatprep.subr.mxu0 0.0
  %1169 = vmatpush1.msra.mxu0 0.0
  %1170 = vmatprep.subr.mxu0 0.0
  %1171 = vmatpush1.msra.mxu0 0.0
  %1172 = vmatprep.subr.mxu0 0.0
  %1173 = vmatpush1.msra.mxu0 0.0
  %1174 = vmatprep.subr.mxu0 0.0
  %1175 = vmatpush1.msra.mxu0 %v1139
  %1176 = vmatprep.subr.mxu0 0.0
  %1177 = vmatpush2.msra.mxu0 0.0
  %1178 = vmatprep.subr.mxu0 0.0
  %1179 = vmatpush2.msra.mxu0 0.0
  %1180 = vmatprep.subr.mxu0 0.0
  %1181 = vmatpush2.msra.mxu0 0.0
  %1182 = vmatprep.subr.mxu0 0.0
  %1183 = vmatpush2.msra.mxu0 0.0
  %1184 = vmatprep.subr.mxu0 0.0
  %1185 = vmatpush2.msra.mxu0 0.0
  %1186 = vmatprep.subr.mxu0 0.0
  %1187 = vmatpush2.msra.mxu0 0.0
  %1188 = vmatprep.subr.mxu0 0.0
  %1189 = vmatpush2.msra.mxu0 0.0
  %1190 = vmatprep.subr.mxu0 0.0
  %1191 = vmatpush2.msra.mxu0 0.0
  %1192 = vmatprep.subr.mxu0 0.0
  %1193 = vmatpush2.msra.mxu0 0.0
  %1194 = vmatprep.subr.mxu0 0.0
  %1195 = vmatpush2.msra.mxu0 0.0
  %1196 = vmatprep.subr.mxu0 0.0
  %1197 = vmatpush2.msra.mxu0 0.0
  %1198 = vmatprep.subr.mxu0 0.0
  %1199 = vmatpush2.msra.mxu0 0.0
  %1200 = vmatprep.subr.mxu0 0.0
  %1201 = vmatpush2.msra.mxu0 0.0
  %1202 = vmatprep.subr.mxu0 0.0
  %1203 = vmatpush2.msra.mxu0 0.0
  %1204 = vmatprep.subr.mxu0 0.0
  %1205 = vmatpush2.msra.mxu0 0.0
  %1206 = vmatprep.subr.mxu0 0.0
  %1207 = vmatpush2.msra.mxu0 0.0
  %1208 = vmatprep.mubr.f32.mxu0 0.0
  %1209 = vmatmul.mubr.f32.gmra.mxu0 %v1142
  %v1210 = vpop.f32.mrf.mxu0
  %v1211 = vadd.f32 0.0, %v1210
  %v1212 = vpop.f32.mrf.mxu0
  %1213 = vdwg.mxu0
  %1214 = vrot.lane.b32.xlu0 %v182, 64
  %v1215 = vpop.permute.xlu0 %1214
  %v1218 = vsel %vm199, %v906, 0
  %1220 = vmatprep.subr.mxu0 0.0
  %1221 = vmatpush1.msra.mxu0 0.0
  %1222 = vmatprep.subr.mxu0 0.0
  %1223 = vmatpush1.msra.mxu0 0.0
  %1224 = vmatprep.subr.mxu0 0.0
  %1225 = vmatpush1.msra.mxu0 0.0
  %1226 = vmatprep.subr.mxu0 0.0
  %1227 = vmatpush1.msra.mxu0 0.0
  %1228 = vmatprep.subr.mxu0 0.0
  %1229 = vmatpush1.msra.mxu0 0.0
  %1230 = vmatprep.subr.mxu0 0.0
  %1231 = vmatpush1.msra.mxu0 0.0
  %1232 = vmatprep.subr.mxu0 0.0
  %1233 = vmatpush1.msra.mxu0 0.0
  %1234 = vmatprep.subr.mxu0 0.0
  %1235 = vmatpush1.msra.mxu0 0.0
  %1236 = vmatprep.subr.mxu0 0.0
  %1237 = vmatpush1.msra.mxu0 0.0
  %1238 = vmatprep.subr.mxu0 0.0
  %1239 = vmatpush1.msra.mxu0 0.0
  %1240 = vmatprep.subr.mxu0 0.0
  %1241 = vmatpush1.msra.mxu0 0.0
  %1242 = vmatprep.subr.mxu0 0.0
  %1243 = vmatpush1.msra.mxu0 0.0
  %1244 = vmatprep.subr.mxu0 0.0
  %1245 = vmatpush1.msra.mxu0 0.0
  %1246 = vmatprep.subr.mxu0 0.0
  %1247 = vmatpush1.msra.mxu0 0.0
  %1248 = vmatprep.subr.mxu0 0.0
  %1249 = vmatpush1.msra.mxu0 0.0
  %1250 = vmatprep.subr.mxu0 0.0
  %1251 = vmatpush1.msra.mxu0 %v1215
  %1252 = vmatprep.subr.mxu0 0.0
  %1253 = vmatpush2.msra.mxu0 0.0
  %1254 = vmatprep.subr.mxu0 0.0
  %1255 = vmatpush2.msra.mxu0 0.0
  %1256 = vmatprep.subr.mxu0 0.0
  %1257 = vmatpush2.msra.mxu0 0.0
  %1258 = vmatprep.subr.mxu0 0.0
  %1259 = vmatpush2.msra.mxu0 0.0
  %1260 = vmatprep.subr.mxu0 0.0
  %1261 = vmatpush2.msra.mxu0 0.0
  %1262 = vmatprep.subr.mxu0 0.0
  %1263 = vmatpush2.msra.mxu0 0.0
  %1264 = vmatprep.subr.mxu0 0.0
  %1265 = vmatpush2.msra.mxu0 0.0
  %1266 = vmatprep.subr.mxu0 0.0
  %1267 = vmatpush2.msra.mxu0 0.0
  %1268 = vmatprep.subr.mxu0 0.0
  %1269 = vmatpush2.msra.mxu0 0.0
  %1270 = vmatprep.subr.mxu0 0.0
  %1271 = vmatpush2.msra.mxu0 0.0
  %1272 = vmatprep.subr.mxu0 0.0
  %1273 = vmatpush2.msra.mxu0 0.0
  %1274 = vmatprep.subr.mxu0 0.0
  %1275 = vmatpush2.msra.mxu0 0.0
  %1276 = vmatprep.subr.mxu0 0.0
  %1277 = vmatpush2.msra.mxu0 0.0
  %1278 = vmatprep.subr.mxu0 0.0
  %1279 = vmatpush2.msra.mxu0 0.0
  %1280 = vmatprep.subr.mxu0 0.0
  %1281 = vmatpush2.msra.mxu0 0.0
  %1282 = vmatprep.subr.mxu0 0.0
  %1283 = vmatpush2.msra.mxu0 0.0
  %1284 = vmatprep.mubr.f32.mxu0 0.0
  %1285 = vmatmul.mubr.f32.gmra.mxu0 %v1218
  %v1286 = vpop.f32.mrf.mxu0
  %v1287 = vadd.f32 0.0, %v1286
  %v1288 = vpop.f32.mrf.mxu0
  %1289 = vdwg.mxu0
  %1290 = vrot.lane.b32.xlu0 %v184, 64
  %v1291 = vpop.permute.xlu0 %1290
  %v1294 = vsel %vm199, %v907, 0
  %1296 = vmatprep.subr.mxu0 0.0
  %1297 = vmatpush1.msra.mxu0 0.0
  %1298 = vmatprep.subr.mxu0 0.0
  %1299 = vmatpush1.msra.mxu0 0.0
  %1300 = vmatprep.subr.mxu0 0.0
  %1301 = vmatpush1.msra.mxu0 0.0
  %1302 = vmatprep.subr.mxu0 0.0
  %1303 = vmatpush1.msra.mxu0 0.0
  %1304 = vmatprep.subr.mxu0 0.0
  %1305 = vmatpush1.msra.mxu0 0.0
  %1306 = vmatprep.subr.mxu0 0.0
  %1307 = vmatpush1.msra.mxu0 0.0
  %1308 = vmatprep.subr.mxu0 0.0
  %1309 = vmatpush1.msra.mxu0 0.0
  %1310 = vmatprep.subr.mxu0 0.0
  %1311 = vmatpush1.msra.mxu0 0.0
  %1312 = vmatprep.subr.mxu0 0.0
  %1313 = vmatpush1.msra.mxu0 0.0
  %1314 = vmatprep.subr.mxu0 0.0
  %1315 = vmatpush1.msra.mxu0 0.0
  %1316 = vmatprep.subr.mxu0 0.0
  %1317 = vmatpush1.msra.mxu0 0.0
  %1318 = vmatprep.subr.mxu0 0.0
  %1319 = vmatpush1.msra.mxu0 0.0
  %1320 = vmatprep.subr.mxu0 0.0
  %1321 = vmatpush1.msra.mxu0 0.0
  %1322 = vmatprep.subr.mxu0 0.0
  %1323 = vmatpush1.msra.mxu0 0.0
  %1324 = vmatprep.subr.mxu0 0.0
  %1325 = vmatpush1.msra.mxu0 0.0
  %1326 = vmatprep.subr.mxu0 0.0
  %1327 = vmatpush1.msra.mxu0 %v1291
  %1328 = vmatprep.subr.mxu0 0.0
  %1329 = vmatpush2.msra.mxu0 0.0
  %1330 = vmatprep.subr.mxu0 0.0
  %1331 = vmatpush2.msra.mxu0 0.0
  %1332 = vmatprep.subr.mxu0 0.0
  %1333 = vmatpush2.msra.mxu0 0.0
  %1334 = vmatprep.subr.mxu0 0.0
  %1335 = vmatpush2.msra.mxu0 0.0
  %1336 = vmatprep.subr.mxu0 0.0
  %1337 = vmatpush2.msra.mxu0 0.0
  %1338 = vmatprep.subr.mxu0 0.0
  %1339 = vmatpush2.msra.mxu0 0.0
  %1340 = vmatprep.subr.mxu0 0.0
  %1341 = vmatpush2.msra.mxu0 0.0
  %1342 = vmatprep.subr.mxu0 0.0
  %1343 = vmatpush2.msra.mxu0 0.0
  %1344 = vmatprep.subr.mxu0 0.0
  %1345 = vmatpush2.msra.mxu0 0.0
  %1346 = vmatprep.subr.mxu0 0.0
  %1347 = vmatpush2.msra.mxu0 0.0
  %1348 = vmatprep.subr.mxu0 0.0
  %1349 = vmatpush2.msra.mxu0 0.0
  %1350 = vmatprep.subr.mxu0 0.0
  %1351 = vmatpush2.msra.mxu0 0.0
  %1352 = vmatprep.subr.mxu0 0.0
  %1353 = vmatpush2.msra.mxu0 0.0
  %1354 = vmatprep.subr.mxu0 0.0
  %1355 = vmatpush2.msra.mxu0 0.0
  %1356 = vmatprep.subr.mxu0 0.0
  %1357 = vmatpush2.msra.mxu0 0.0
  %1358 = vmatprep.subr.mxu0 0.0
  %1359 = vmatpush2.msra.mxu0 0.0
  %1360 = vmatprep.mubr.f32.mxu0 0.0
  %1361 = vmatmul.mubr.f32.gmra.mxu0 %v1294
  %v1362 = vpop.f32.mrf.mxu0
  %v1363 = vadd.f32 0.0, %v1362
  %v1364 = vpop.f32.mrf.mxu0
  %1365 = vdwg.mxu0
  %1366 = vrot.lane.b32.xlu0 %v186, 64
  %v1367 = vpop.permute.xlu0 %1366
  %v1370 = vsel %vm199, %v908, 0
  %1372 = vmatprep.subr.mxu0 0.0
  %1373 = vmatpush1.msra.mxu0 0.0
  %1374 = vmatprep.subr.mxu0 0.0
  %1375 = vmatpush1.msra.mxu0 0.0
  %1376 = vmatprep.subr.mxu0 0.0
  %1377 = vmatpush1.msra.mxu0 0.0
  %1378 = vmatprep.subr.mxu0 0.0
  %1379 = vmatpush1.msra.mxu0 0.0
  %1380 = vmatprep.subr.mxu0 0.0
  %1381 = vmatpush1.msra.mxu0 0.0
  %1382 = vmatprep.subr.mxu0 0.0
  %1383 = vmatpush1.msra.mxu0 0.0
  %1384 = vmatprep.subr.mxu0 0.0
  %1385 = vmatpush1.msra.mxu0 0.0
  %1386 = vmatprep.subr.mxu0 0.0
  %1387 = vmatpush1.msra.mxu0 0.0
  %1388 = vmatprep.subr.mxu0 0.0
  %1389 = vmatpush1.msra.mxu0 0.0
  %1390 = vmatprep.subr.mxu0 0.0
  %1391 = vmatpush1.msra.mxu0 0.0
  %1392 = vmatprep.subr.mxu0 0.0
  %1393 = vmatpush1.msra.mxu0 0.0
  %1394 = vmatprep.subr.mxu0 0.0
  %1395 = vmatpush1.msra.mxu0 0.0
  %1396 = vmatprep.subr.mxu0 0.0
  %1397 = vmatpush1.msra.mxu0 0.0
  %1398 = vmatprep.subr.mxu0 0.0
  %1399 = vmatpush1.msra.mxu0 0.0
  %1400 = vmatprep.subr.mxu0 0.0
  %1401 = vmatpush1.msra.mxu0 0.0
  %1402 = vmatprep.subr.mxu0 0.0
  %1403 = vmatpush1.msra.mxu0 %v1367
  %1404 = vmatprep.subr.mxu0 0.0
  %1405 = vmatpush2.msra.mxu0 0.0
  %1406 = vmatprep.subr.mxu0 0.0
  %1407 = vmatpush2.msra.mxu0 0.0
  %1408 = vmatprep.subr.mxu0 0.0
  %1409 = vmatpush2.msra.mxu0 0.0
  %1410 = vmatprep.subr.mxu0 0.0
  %1411 = vmatpush2.msra.mxu0 0.0
  %1412 = vmatprep.subr.mxu0 0.0
  %1413 = vmatpush2.msra.mxu0 0.0
  %1414 = vmatprep.subr.mxu0 0.0
  %1415 = vmatpush2.msra.mxu0 0.0
  %1416 = vmatprep.subr.mxu0 0.0
  %1417 = vmatpush2.msra.mxu0 0.0
  %1418 = vmatprep.subr.mxu0 0.0
  %1419 = vmatpush2.msra.mxu0 0.0
  %1420 = vmatprep.subr.mxu0 0.0
  %1421 = vmatpush2.msra.mxu0 0.0
  %1422 = vmatprep.subr.mxu0 0.0
  %1423 = vmatpush2.msra.mxu0 0.0
  %1424 = vmatprep.subr.mxu0 0.0
  %1425 = vmatpush2.msra.mxu0 0.0
  %1426 = vmatprep.subr.mxu0 0.0
  %1427 = vmatpush2.msra.mxu0 0.0
  %1428 = vmatprep.subr.mxu0 0.0
  %1429 = vmatpush2.msra.mxu0 0.0
  %1430 = vmatprep.subr.mxu0 0.0
  %1431 = vmatpush2.msra.mxu0 0.0
  %1432 = vmatprep.subr.mxu0 0.0
  %1433 = vmatpush2.msra.mxu0 0.0
  %1434 = vmatprep.subr.mxu0 0.0
  %1435 = vmatpush2.msra.mxu0 0.0
  %1436 = vmatprep.mubr.f32.mxu0 0.0
  %1437 = vmatmul.mubr.f32.gmra.mxu0 %v1370
  %v1438 = vpop.f32.mrf.mxu0
  %v1439 = vadd.f32 0.0, %v1438
  %v1440 = vpop.f32.mrf.mxu0
  %1441 = vdwg.mxu0
  %1442 = vrot.lane.b32.xlu0 %v188, 64
  %v1443 = vpop.permute.xlu0 %1442
  %v1446 = vsel %vm199, %v909, 0
  %1448 = vmatprep.subr.mxu0 0.0
  %1449 = vmatpush1.msra.mxu0 0.0
  %1450 = vmatprep.subr.mxu0 0.0
  %1451 = vmatpush1.msra.mxu0 0.0
  %1452 = vmatprep.subr.mxu0 0.0
  %1453 = vmatpush1.msra.mxu0 0.0
  %1454 = vmatprep.subr.mxu0 0.0
  %1455 = vmatpush1.msra.mxu0 0.0
  %1456 = vmatprep.subr.mxu0 0.0
  %1457 = vmatpush1.msra.mxu0 0.0
  %1458 = vmatprep.subr.mxu0 0.0
  %1459 = vmatpush1.msra.mxu0 0.0
  %1460 = vmatprep.subr.mxu0 0.0
  %1461 = vmatpush1.msra.mxu0 0.0
  %1462 = vmatprep.subr.mxu0 0.0
  %1463 = vmatpush1.msra.mxu0 0.0
  %1464 = vmatprep.subr.mxu0 0.0
  %1465 = vmatpush1.msra.mxu0 0.0
  %1466 = vmatprep.subr.mxu0 0.0
  %1467 = vmatpush1.msra.mxu0 0.0
  %1468 = vmatprep.subr.mxu0 0.0
  %1469 = vmatpush1.msra.mxu0 0.0
  %1470 = vmatprep.subr.mxu0 0.0
  %1471 = vmatpush1.msra.mxu0 0.0
  %1472 = vmatprep.subr.mxu0 0.0
  %1473 = vmatpush1.msra.mxu0 0.0
  %1474 = vmatprep.subr.mxu0 0.0
  %1475 = vmatpush1.msra.mxu0 0.0
  %1476 = vmatprep.subr.mxu0 0.0
  %1477 = vmatpush1.msra.mxu0 0.0
  %1478 = vmatprep.subr.mxu0 0.0
  %1479 = vmatpush1.msra.mxu0 %v1443
  %1480 = vmatprep.subr.mxu0 0.0
  %1481 = vmatpush2.msra.mxu0 0.0
  %1482 = vmatprep.subr.mxu0 0.0
  %1483 = vmatpush2.msra.mxu0 0.0
  %1484 = vmatprep.subr.mxu0 0.0
  %1485 = vmatpush2.msra.mxu0 0.0
  %1486 = vmatprep.subr.mxu0 0.0
  %1487 = vmatpush2.msra.mxu0 0.0
  %1488 = vmatprep.subr.mxu0 0.0
  %1489 = vmatpush2.msra.mxu0 0.0
  %1490 = vmatprep.subr.mxu0 0.0
  %1491 = vmatpush2.msra.mxu0 0.0
  %1492 = vmatprep.subr.mxu0 0.0
  %1493 = vmatpush2.msra.mxu0 0.0
  %1494 = vmatprep.subr.mxu0 0.0
  %1495 = vmatpush2.msra.mxu0 0.0
  %1496 = vmatprep.subr.mxu0 0.0
  %1497 = vmatpush2.msra.mxu0 0.0
  %1498 = vmatprep.subr.mxu0 0.0
  %1499 = vmatpush2.msra.mxu0 0.0
  %1500 = vmatprep.subr.mxu0 0.0
  %1501 = vmatpush2.msra.mxu0 0.0
  %1502 = vmatprep.subr.mxu0 0.0
  %1503 = vmatpush2.msra.mxu0 0.0
  %1504 = vmatprep.subr.mxu0 0.0
  %1505 = vmatpush2.msra.mxu0 0.0
  %1506 = vmatprep.subr.mxu0 0.0
  %1507 = vmatpush2.msra.mxu0 0.0
  %1508 = vmatprep.subr.mxu0 0.0
  %1509 = vmatpush2.msra.mxu0 0.0
  %1510 = vmatprep.subr.mxu0 0.0
  %1511 = vmatpush2.msra.mxu0 0.0
  %1512 = vmatprep.mubr.f32.mxu0 0.0
  %1513 = vmatmul.mubr.f32.gmra.mxu0 %v1446
  %v1514 = vpop.f32.mrf.mxu0
  %v1515 = vadd.f32 0.0, %v1514
  %v1516 = vpop.f32.mrf.mxu0
  %1517 = vdwg.mxu0
  %1520 = vrot.lane.b32.xlu0 %v1135, 8
  %v1521 = vpop.permute.xlu0 %1520
  %1522 = vrot.lane.b32.xlu0 %v1211, 8
  %v1523 = vpop.permute.xlu0 %1522
  %1528 = vrot.lane.b32.xlu0 %v1287, 16
  %v1529 = vpop.permute.xlu0 %1528
  %1530 = vrot.lane.b32.xlu0 %v1363, 16
  %v1531 = vpop.permute.xlu0 %1530
  %1536 = vrot.lane.b32.xlu0 %v1439, 24
  %v1537 = vpop.permute.xlu0 %1536
  %1538 = vrot.lane.b32.xlu0 %v1515, 24
  %v1539 = vpop.permute.xlu0 %1538
  %v1542 = vsel %vm199, %v983, %v1521
  %v1543 = vsel %vm199, %v1059, %v1523
  %vm1544 = vcmask 130048
  %v1545 = vsel %vm1544, %v1542, %v1529
  %v1546 = vsel %vm1544, %v1543, %v1531
  %vm1547 = vcmask 195584
  %v1548 = vsel %vm1547, %v1545, %v1537
  %v1549 = vsel %vm1547, %v1546, %v1539
  %vm1550 = vcmask 261120
  %v1551 = vsel %vm1550, %v1548, 0.0
  %v1552 = vsel %vm1550, %v1549, 0.0
  %v1553 = vld [vmem:[%s4 + $0x8] sm:$0xff]
  %v1554 = vld [vmem:[%s4 + $0x40] sm:$0xff]
  %v1555 = vld [vmem:[%s4 + $0x78] sm:$0xff]
  %v1556 = vld [vmem:[%s4 + $0xb0] sm:$0xff]
  %v1557 = vld [vmem:[%s4 + $0xe8] sm:$0xff]
  %v1558 = vld [vmem:[%s4 + $0x120] sm:$0xff]
  %v1559 = vld [vmem:[%s4 + $0x158] sm:$0xff]
  %v1560 = vld [vmem:[%s4 + $0x190] sm:$0xff]
  %v1561 = vld [vmem:[%s4 + $0x1c8] sm:$0xff]
  %v1562 = vld [vmem:[%s4 + $0x200] sm:$0xff]
  %v1563 = vld [vmem:[%s4 + $0x238] sm:$0xff]
  %v1564 = vld [vmem:[%s4 + $0x270] sm:$0xff]
  %v1565 = vld [vmem:[%s4 + $0x2a8] sm:$0xff]
  %v1566 = vld [vmem:[%s4 + $0x2e0] sm:$0xff]
  %v1567 = vld [vmem:[%s4 + $0x318] sm:$0xff]
  %v1568 = vld [vmem:[%s4 + $0x350] sm:$0xff]
  %1569 = vmatprep.subr.mxu0 0.0
  %1570 = vmatpush1.msra.mxu0 %v1568
  %1571 = vmatprep.subr.mxu0 0.0
  %1572 = vmatpush1.msra.mxu0 %v1567
  %1573 = vmatprep.subr.mxu0 0.0
  %1574 = vmatpush1.msra.mxu0 %v1566
  %1575 = vmatprep.subr.mxu0 0.0
  %1576 = vmatpush1.msra.mxu0 %v1565
  %1577 = vmatprep.subr.mxu0 0.0
  %1578 = vmatpush1.msra.mxu0 %v1564
  %1579 = vmatprep.subr.mxu0 0.0
  %1580 = vmatpush1.msra.mxu0 %v1563
  %1581 = vmatprep.subr.mxu0 0.0
  %1582 = vmatpush1.msra.mxu0 %v1562
  %1583 = vmatprep.subr.mxu0 0.0
  %1584 = vmatpush1.msra.mxu0 %v1561
  %1585 = vmatprep.subr.mxu0 0.0
  %1586 = vmatpush1.msra.mxu0 %v1560
  %1587 = vmatprep.subr.mxu0 0.0
  %1588 = vmatpush1.msra.mxu0 %v1559
  %1589 = vmatprep.subr.mxu0 0.0
  %1590 = vmatpush1.msra.mxu0 %v1558
  %1591 = vmatprep.subr.mxu0 0.0
  %1592 = vmatpush1.msra.mxu0 %v1557
  %1593 = vmatprep.subr.mxu0 0.0
  %1594 = vmatpush1.msra.mxu0 %v1556
  %1595 = vmatprep.subr.mxu0 0.0
  %1596 = vmatpush1.msra.mxu0 %v1555
  %1597 = vmatprep.subr.mxu0 0.0
  %1598 = vmatpush1.msra.mxu0 %v1554
  %1599 = vmatprep.subr.mxu0 0.0
  %1600 = vmatpush1.msra.mxu0 %v1553
  %1601 = vmatprep.subr.mxu0 0.0
  %1602 = vmatpush2.msra.mxu0 0.0
  %1603 = vmatprep.subr.mxu0 0.0
  %1604 = vmatpush2.msra.mxu0 0.0
  %1605 = vmatprep.subr.mxu0 0.0
  %1606 = vmatpush2.msra.mxu0 0.0
  %1607 = vmatprep.subr.mxu0 0.0
  %1608 = vmatpush2.msra.mxu0 0.0
  %1609 = vmatprep.subr.mxu0 0.0
  %1610 = vmatpush2.msra.mxu0 0.0
  %1611 = vmatprep.subr.mxu0 0.0
  %1612 = vmatpush2.msra.mxu0 0.0
  %1613 = vmatprep.subr.mxu0 0.0
  %1614 = vmatpush2.msra.mxu0 0.0
  %1615 = vmatprep.subr.mxu0 0.0
  %1616 = vmatpush2.msra.mxu0 0.0
  %1617 = vmatprep.subr.mxu0 0.0
  %1618 = vmatpush2.msra.mxu0 0.0
  %1619 = vmatprep.subr.mxu0 0.0
  %1620 = vmatpush2.msra.mxu0 0.0
  %1621 = vmatprep.subr.mxu0 0.0
  %1622 = vmatpush2.msra.mxu0 0.0
  %1623 = vmatprep.subr.mxu0 0.0
  %1624 = vmatpush2.msra.mxu0 0.0
  %1625 = vmatprep.subr.mxu0 0.0
  %1626 = vmatpush2.msra.mxu0 0.0
  %1627 = vmatprep.subr.mxu0 0.0
  %1628 = vmatpush2.msra.mxu0 0.0
  %1629 = vmatprep.subr.mxu0 0.0
  %1630 = vmatpush2.msra.mxu0 0.0
  %1631 = vmatprep.subr.mxu0 0.0
  %1632 = vmatpush2.msra.mxu0 0.0
  %1633 = vmatprep.mubr.f32.mxu0 0.0
  %1634 = vmatmul.mubr.f32.gmra.mxu0 %v1551
  %v1635 = vpop.f32.mrf.mxu0
  %v1636 = vadd.f32 0.0, %v1635
  %v1637 = vpop.f32.mrf.mxu0
  %1638 = vmatprep.mubr.f32.mxu0 0.0
  %1639 = vmatmul.mubr.f32.gmra.mxu0 %v1552
  %v1640 = vpop.f32.mrf.mxu0
  %v1641 = vadd.f32 0.0, %v1640
  %v1642 = vpop.f32.mrf.mxu0
  %1643 = vdwg.mxu0
  %v1644 = vadd.f32 %v23, %v1636
  %v1645 = vadd.f32 %v24, %v1641
  %v1646 = vld [vmem:[%s5 + $0x2] sm:$0x1]
  %v1647 = vld [vmem:[%s5 + $0x3] sm:$0x1]
  %1648 = vadd.xlane.f32.xlu0 %v1644
  %v1649 = vpop.xlane.xlu0 %1648
  %1650 = vadd.xlane.f32.xlu0 %v1645
  %v1651 = vpop.xlane.xlu0 %1650
  %v1652 = vmul.f32 %v1649, 0.03125
  %v1653 = vmul.f32 %v1651, 0.03125
  %v1654 = vsub.f32 %v1644, %v1652
  %v1655 = vsub.f32 %v1645, %v1653
  %v1656 = vmul.f32 %v1654, %v41
  %v1657 = vmul.f32 %v1655, %v41
  %v1658 = vmul.f32 %v1656, %v1656
  %v1659 = vmul.f32 %v1657, %v1657
  %1660 = vadd.xlane.f32.xlu0 %v1658
  %v1661 = vpop.xlane.xlu0 %1660
  %1662 = vadd.xlane.f32.xlu0 %v1659
  %v1663 = vpop.xlane.xlu0 %1662
  %v1664 = vmul.f32 %v1661, 0.032258064
  %v1665 = vmul.f32 %v1663, 0.032258064
  %v1666 = vrsqrt.pop %v1664
  %v1667 = vmul.f32 %v1664, %v1666
  %vm1668 = vcmp.eq.f32.partialorder %v1664, inf
  %v1669 = vsel %vm1668, %v1664, %v1667
  %vm1670 = vcmp.eq.f32.partialorder %v1664, 0.0
  %v1671 = vand.u32 %v1664, 2147483648
  %v1672 = vsel %vm1670, %v1671, %v1669
  %v1673 = vrsqrt.pop %v1665
  %v1674 = vmul.f32 %v1665, %v1673
  %vm1675 = vcmp.eq.f32.partialorder %v1665, inf
  %v1676 = vsel %vm1675, %v1665, %v1674
  %vm1677 = vcmp.eq.f32.partialorder %v1665, 0.0
  %v1678 = vand.u32 %v1665, 2147483648
  %v1679 = vsel %vm1677, %v1678, %v1676
  %v1680 = vadd.f32 %v1672, 1e-06
  %v1681 = vadd.f32 %v1679, 1e-06
  %v1682 = vrcp.pop %v1680
  %v1683 = vrcp.pop %v1681
  %v1684 = vmul.f32 %v1656, %v1682
  %v1685 = vmul.f32 %v1657, %v1683
  %v1686 = vlaneseq
  %v1687 = vshrl.u32 %v1686, 7
  %v1688 = vsub.s32 0, %v1687
  %v1689 = vrot.slane %v1646, %v1688
  %v1690 = vmul.f32 %v1689, %v1684
  %v1691 = vmul.f32 %v1689, %v1685
  %v1692 = vlaneseq
  %v1693 = vshrl.u32 %v1692, 7
  %v1694 = vsub.s32 0, %v1693
  %v1695 = vrot.slane %v1647, %v1694
  %v1696 = vadd.f32 %v1690, %v1695
  %v1697 = vadd.f32 %v1691, %v1695
  %v1698 = vld [vmem:[%s4 + $0x10] sm:$0xff]
  %v1699 = vld [vmem:[%s4 + $0x48] sm:$0xff]
  %v1700 = vld [vmem:[%s4 + $0x80] sm:$0xff]
  %v1701 = vld [vmem:[%s4 + $0xb8] sm:$0xff]
  %v1702 = vld [vmem:[%s4 + $0xf0] sm:$0xff]
  %v1703 = vld [vmem:[%s4 + $0x128] sm:$0xff]
  %v1704 = vld [vmem:[%s4 + $0x160] sm:$0xff]
  %v1705 = vld [vmem:[%s4 + $0x198] sm:$0xff]
  %v1706 = vld [vmem:[%s4 + $0x1d0] sm:$0xff]
  %v1707 = vld [vmem:[%s4 + $0x208] sm:$0xff]
  %v1708 = vld [vmem:[%s4 + $0x240] sm:$0xff]
  %v1709 = vld [vmem:[%s4 + $0x278] sm:$0xff]
  %v1710 = vld [vmem:[%s4 + $0x2b0] sm:$0xff]
  %v1711 = vld [vmem:[%s4 + $0x2e8] sm:$0xff]
  %v1712 = vld [vmem:[%s4 + $0x320] sm:$0xff]
  %v1713 = vld [vmem:[%s4 + $0x358] sm:$0xff]
  %1714 = vmatprep.subr.mxu0 0.0
  %1715 = vmatpush1.msra.mxu0 %v1713
  %1716 = vmatprep.subr.mxu0 0.0
  %1717 = vmatpush1.msra.mxu0 %v1712
  %1718 = vmatprep.subr.mxu0 0.0
  %1719 = vmatpush1.msra.mxu0 %v1711
  %1720 = vmatprep.subr.mxu0 0.0
  %1721 = vmatpush1.msra.mxu0 %v1710
  %1722 = vmatprep.subr.mxu0 0.0
  %1723 = vmatpush1.msra.mxu0 %v1709
  %1724 = vmatprep.subr.mxu0 0.0
  %1725 = vmatpush1.msra.mxu0 %v1708
  %1726 = vmatprep.subr.mxu0 0.0
  %1727 = vmatpush1.msra.mxu0 %v1707
  %1728 = vmatprep.subr.mxu0 0.0
  %1729 = vmatpush1.msra.mxu0 %v1706
  %1730 = vmatprep.subr.mxu0 0.0
  %1731 = vmatpush1.msra.mxu0 %v1705
  %1732 = vmatprep.subr.mxu0 0.0
  %1733 = vmatpush1.msra.mxu0 %v1704
  %1734 = vmatprep.subr.mxu0 0.0
  %1735 = vmatpush1.msra.mxu0 %v1703
  %1736 = vmatprep.subr.mxu0 0.0
  %1737 = vmatpush1.msra.mxu0 %v1702
  %1738 = vmatprep.subr.mxu0 0.0
  %1739 = vmatpush1.msra.mxu0 %v1701
  %1740 = vmatprep.subr.mxu0 0.0
  %1741 = vmatpush1.msra.mxu0 %v1700
  %1742 = vmatprep.subr.mxu0 0.0
  %1743 = vmatpush1.msra.mxu0 %v1699
  %1744 = vmatprep.subr.mxu0 0.0
  %1745 = vmatpush1.msra.mxu0 %v1698
  %1746 = vmatprep.subr.mxu0 0.0
  %1747 = vmatpush2.msra.mxu0 0.0
  %1748 = vmatprep.subr.mxu0 0.0
  %1749 = vmatpush2.msra.mxu0 0.0
  %1750 = vmatprep.subr.mxu0 0.0
  %1751 = vmatpush2.msra.mxu0 0.0
  %1752 = vmatprep.subr.mxu0 0.0
  %1753 = vmatpush2.msra.mxu0 0.0
  %1754 = vmatprep.subr.mxu0 0.0
  %1755 = vmatpush2.msra.mxu0 0.0
  %1756 = vmatprep.subr.mxu0 0.0
  %1757 = vmatpush2.msra.mxu0 0.0
  %1758 = vmatprep.subr.mxu0 0.0
  %1759 = vmatpush2.msra.mxu0 0.0
  %1760 = vmatprep.subr.mxu0 0.0
  %1761 = vmatpush2.msra.mxu0 0.0
  %1762 = vmatprep.subr.mxu0 0.0
  %1763 = vmatpush2.msra.mxu0 0.0
  %1764 = vmatprep.subr.mxu0 0.0
  %1765 = vmatpush2.msra.mxu0 0.0
  %1766 = vmatprep.subr.mxu0 0.0
  %1767 = vmatpush2.msra.mxu0 0.0
  %1768 = vmatprep.subr.mxu0 0.0
  %1769 = vmatpush2.msra.mxu0 0.0
  %1770 = vmatprep.subr.mxu0 0.0
  %1771 = vmatpush2.msra.mxu0 0.0
  %1772 = vmatprep.subr.mxu0 0.0
  %1773 = vmatpush2.msra.mxu0 0.0
  %1774 = vmatprep.subr.mxu0 0.0
  %1775 = vmatpush2.msra.mxu0 0.0
  %1776 = vmatprep.subr.mxu0 0.0
  %1777 = vmatpush2.msra.mxu0 0.0
  %1778 = vmatprep.mubr.f32.mxu0 0.0
  %1779 = vmatmul.mubr.f32.gmra.mxu0 %v1696
  %v1780 = vpop.f32.mrf.mxu0
  %v1781 = vadd.f32 0.0, %v1780
  %v1782 = vpop.f32.mrf.mxu0
  %1783 = vmatprep.mubr.f32.mxu0 0.0
  %1784 = vmatmul.mubr.f32.gmra.mxu0 %v1697
  %v1785 = vpop.f32.mrf.mxu0
  %v1786 = vadd.f32 0.0, %v1785
  %v1787 = vpop.f32.mrf.mxu0
  %1788 = vdwg.mxu0
  %v1789 = vld [vmem:[%s4 + $0x18] sm:$0xff]
  %v1790 = vld [vmem:[%s4 + $0x50] sm:$0xff]
  %v1791 = vld [vmem:[%s4 + $0x88] sm:$0xff]
  %v1792 = vld [vmem:[%s4 + $0xc0] sm:$0xff]
  %v1793 = vld [vmem:[%s4 + $0xf8] sm:$0xff]
  %v1794 = vld [vmem:[%s4 + $0x130] sm:$0xff]
  %v1795 = vld [vmem:[%s4 + $0x168] sm:$0xff]
  %v1796 = vld [vmem:[%s4 + $0x1a0] sm:$0xff]
  %v1797 = vld [vmem:[%s4 + $0x1d8] sm:$0xff]
  %v1798 = vld [vmem:[%s4 + $0x210] sm:$0xff]
  %v1799 = vld [vmem:[%s4 + $0x248] sm:$0xff]
  %v1800 = vld [vmem:[%s4 + $0x280] sm:$0xff]
  %v1801 = vld [vmem:[%s4 + $0x2b8] sm:$0xff]
  %v1802 = vld [vmem:[%s4 + $0x2f0] sm:$0xff]
  %v1803 = vld [vmem:[%s4 + $0x328] sm:$0xff]
  %v1804 = vld [vmem:[%s4 + $0x360] sm:$0xff]
  %1805 = vmatprep.subr.mxu0 0.0
  %1806 = vmatpush1.msra.mxu0 %v1804
  %1807 = vmatprep.subr.mxu0 0.0
  %1808 = vmatpush1.msra.mxu0 %v1803
  %1809 = vmatprep.subr.mxu0 0.0
  %1810 = vmatpush1.msra.mxu0 %v1802
  %1811 = vmatprep.subr.mxu0 0.0
  %1812 = vmatpush1.msra.mxu0 %v1801
  %1813 = vmatprep.subr.mxu0 0.0
  %1814 = vmatpush1.msra.mxu0 %v1800
  %1815 = vmatprep.subr.mxu0 0.0
  %1816 = vmatpush1.msra.mxu0 %v1799
  %1817 = vmatprep.subr.mxu0 0.0
  %1818 = vmatpush1.msra.mxu0 %v1798
  %1819 = vmatprep.subr.mxu0 0.0
  %1820 = vmatpush1.msra.mxu0 %v1797
  %1821 = vmatprep.subr.mxu0 0.0
  %1822 = vmatpush1.msra.mxu0 %v1796
  %1823 = vmatprep.subr.mxu0 0.0
  %1824 = vmatpush1.msra.mxu0 %v1795
  %1825 = vmatprep.subr.mxu0 0.0
  %1826 = vmatpush1.msra.mxu0 %v1794
  %1827 = vmatprep.subr.mxu0 0.0
  %1828 = vmatpush1.msra.mxu0 %v1793
  %1829 = vmatprep.subr.mxu0 0.0
  %1830 = vmatpush1.msra.mxu0 %v1792
  %1831 = vmatprep.subr.mxu0 0.0
  %1832 = vmatpush1.msra.mxu0 %v1791
  %1833 = vmatprep.subr.mxu0 0.0
  %1834 = vmatpush1.msra.mxu0 %v1790
  %1835 = vmatprep.subr.mxu0 0.0
  %1836 = vmatpush1.msra.mxu0 %v1789
  %1837 = vmatprep.subr.mxu0 0.0
  %1838 = vmatpush2.msra.mxu0 0.0
  %1839 = vmatprep.subr.mxu0 0.0
  %1840 = vmatpush2.msra.mxu0 0.0
  %1841 = vmatprep.subr.mxu0 0.0
  %1842 = vmatpush2.msra.mxu0 0.0
  %1843 = vmatprep.subr.mxu0 0.0
  %1844 = vmatpush2.msra.mxu0 0.0
  %1845 = vmatprep.subr.mxu0 0.0
  %1846 = vmatpush2.msra.mxu0 0.0
  %1847 = vmatprep.subr.mxu0 0.0
  %1848 = vmatpush2.msra.mxu0 0.0
  %1849 = vmatprep.subr.mxu0 0.0
  %1850 = vmatpush2.msra.mxu0 0.0
  %1851 = vmatprep.subr.mxu0 0.0
  %1852 = vmatpush2.msra.mxu0 0.0
  %1853 = vmatprep.subr.mxu0 0.0
  %1854 = vmatpush2.msra.mxu0 0.0
  %1855 = vmatprep.subr.mxu0 0.0
  %1856 = vmatpush2.msra.mxu0 0.0
  %1857 = vmatprep.subr.mxu0 0.0
  %1858 = vmatpush2.msra.mxu0 0.0
  %1859 = vmatprep.subr.mxu0 0.0
  %1860 = vmatpush2.msra.mxu0 0.0
  %1861 = vmatprep.subr.mxu0 0.0
  %1862 = vmatpush2.msra.mxu0 0.0
  %1863 = vmatprep.subr.mxu0 0.0
  %1864 = vmatpush2.msra.mxu0 0.0
  %1865 = vmatprep.subr.mxu0 0.0
  %1866 = vmatpush2.msra.mxu0 0.0
  %1867 = vmatprep.subr.mxu0 0.0
  %1868 = vmatpush2.msra.mxu0 0.0
  %1869 = vmatprep.mubr.f32.mxu0 0.0
  %1870 = vmatmul.mubr.f32.gmra.mxu0 %v25
  %v1871 = vpop.f32.mrf.mxu0
  %v1872 = vadd.f32 0.0, %v1871
  %v1873 = vpop.f32.mrf.mxu0
  %1874 = vmatprep.mubr.f32.mxu0 0.0
  %1875 = vmatmul.mubr.f32.gmra.mxu0 %v26
  %v1876 = vpop.f32.mrf.mxu0
  %v1877 = vadd.f32 0.0, %v1876
  %v1878 = vpop.f32.mrf.mxu0
  %1879 = vdwg.mxu0
  %1882 = vrot.lane.b32.xlu0 %v1781, 120
  %v1883 = vpop.permute.xlu0 %1882
  %1884 = vrot.lane.b32.xlu0 %v1786, 120
  %v1885 = vpop.permute.xlu0 %1884
  %1886 = vrot.lane.b32.xlu0 %v1781, 112
  %v1887 = vpop.permute.xlu0 %1886
  %1888 = vrot.lane.b32.xlu0 %v1786, 112
  %v1889 = vpop.permute.xlu0 %1888
  %1890 = vrot.lane.b32.xlu0 %v1781, 104
  %v1891 = vpop.permute.xlu0 %1890
  %1892 = vrot.lane.b32.xlu0 %v1786, 104
  %v1893 = vpop.permute.xlu0 %1892
  %1896 = vrot.lane.b32.xlu0 %v1872, 120
  %v1897 = vpop.permute.xlu0 %1896
  %1898 = vrot.lane.b32.xlu0 %v1877, 120
  %v1899 = vpop.permute.xlu0 %1898
  %1900 = vrot.lane.b32.xlu0 %v1872, 112
  %v1901 = vpop.permute.xlu0 %1900
  %1902 = vrot.lane.b32.xlu0 %v1877, 112
  %v1903 = vpop.permute.xlu0 %1902
  %1904 = vrot.lane.b32.xlu0 %v1872, 104
  %v1905 = vpop.permute.xlu0 %1904
  %1906 = vrot.lane.b32.xlu0 %v1877, 104
  %v1907 = vpop.permute.xlu0 %1906
  %v1908 = vld [vmem:[%s3] sm:$0xff]
  %v1909 = vld [vmem:[%s3 + $0x8] sm:$0xff]
  %v1910 = vld [vmem:[%s3 + $0x10] sm:$0xff]
  %v1911 = vld [vmem:[%s3 + $0x18] sm:$0xff]
  %v1912 = vld [vmem:[%s3 + $0x20] sm:$0xff]
  %v1913 = vld [vmem:[%s3 + $0x28] sm:$0xff]
  %v1914 = vld [vmem:[%s3 + $0x30] sm:$0xff]
  %v1915 = vld [vmem:[%s3 + $0x38] sm:$0xff]
  %v1916 = vsel %vm199, %v1781, 0
  %v1918 = vsel %vm199, %v1872, 0
  %1920 = vmatprep.subr.mxu0 0.0
  %1921 = vmatpush1.xpose.msra.mxu0 0.0
  %1922 = vmatprep.subr.mxu0 0.0
  %1923 = vmatpush1.xpose.msra.mxu0 0.0
  %1924 = vmatprep.subr.mxu0 0.0
  %1925 = vmatpush1.xpose.msra.mxu0 0.0
  %1926 = vmatprep.subr.mxu0 0.0
  %1927 = vmatpush1.xpose.msra.mxu0 0.0
  %1928 = vmatprep.subr.mxu0 0.0
  %1929 = vmatpush1.xpose.msra.mxu0 0.0
  %1930 = vmatprep.subr.mxu0 0.0
  %1931 = vmatpush1.xpose.msra.mxu0 0.0
  %1932 = vmatprep.subr.mxu0 0.0
  %1933 = vmatpush1.xpose.msra.mxu0 0.0
  %1934 = vmatprep.subr.mxu0 0.0
  %1935 = vmatpush1.xpose.msra.mxu0 0.0
  %1936 = vmatprep.subr.mxu0 0.0
  %1937 = vmatpush1.xpose.msra.mxu0 0.0
  %1938 = vmatprep.subr.mxu0 0.0
  %1939 = vmatpush1.xpose.msra.mxu0 0.0
  %1940 = vmatprep.subr.mxu0 0.0
  %1941 = vmatpush1.xpose.msra.mxu0 0.0
  %1942 = vmatprep.subr.mxu0 0.0
  %1943 = vmatpush1.xpose.msra.mxu0 0.0
  %1944 = vmatprep.subr.mxu0 0.0
  %1945 = vmatpush1.xpose.msra.mxu0 0.0
  %1946 = vmatprep.subr.mxu0 0.0
  %1947 = vmatpush1.xpose.msra.mxu0 0.0
  %1948 = vmatprep.subr.mxu0 0.0
  %1949 = vmatpush1.xpose.msra.mxu0 0.0
  %1950 = vmatprep.subr.mxu0 0.0
  %1951 = vmatpush1.xpose.msra.mxu0 %v1918
  %1952 = vmatprep.subr.mxu0 0.0
  %1953 = vmatpush2.xpose.msra.mxu0 0.0
  %1954 = vmatprep.subr.mxu0 0.0
  %1955 = vmatpush2.xpose.msra.mxu0 0.0
  %1956 = vmatprep.subr.mxu0 0.0
  %1957 = vmatpush2.xpose.msra.mxu0 0.0
  %1958 = vmatprep.subr.mxu0 0.0
  %1959 = vmatpush2.xpose.msra.mxu0 0.0
  %1960 = vmatprep.subr.mxu0 0.0
  %1961 = vmatpush2.xpose.msra.mxu0 0.0
  %1962 = vmatprep.subr.mxu0 0.0
  %1963 = vmatpush2.xpose.msra.mxu0 0.0
  %1964 = vmatprep.subr.mxu0 0.0
  %1965 = vmatpush2.xpose.msra.mxu0 0.0
  %1966 = vmatprep.subr.mxu0 0.0
  %1967 = vmatpush2.xpose.msra.mxu0 0.0
  %1968 = vmatprep.subr.mxu0 0.0
  %1969 = vmatpush2.xpose.msra.mxu0 0.0
  %1970 = vmatprep.subr.mxu0 0.0
  %1971 = vmatpush2.xpose.msra.mxu0 0.0
  %1972 = vmatprep.subr.mxu0 0.0
  %1973 = vmatpush2.xpose.msra.mxu0 0.0
  %1974 = vmatprep.subr.mxu0 0.0
  %1975 = vmatpush2.xpose.msra.mxu0 0.0
  %1976 = vmatprep.subr.mxu0 0.0
  %1977 = vmatpush2.xpose.msra.mxu0 0.0
  %1978 = vmatprep.subr.mxu0 0.0
  %1979 = vmatpush2.xpose.msra.mxu0 0.0
  %1980 = vmatprep.subr.mxu0 0.0
  %1981 = vmatpush2.xpose.msra.mxu0 0.0
  %1982 = vmatprep.subr.mxu0 0.0
  %1983 = vmatpush2.xpose.msra.mxu0 0.0
  %1984 = vmatprep.mubr.f32.mxu0 0.0
  %1985 = vmatmul.mubr.f32.gmra.mxu0 %v1916
  %v1986 = vpop.f32.mrf.mxu0
  %v1987 = vadd.f32 0.0, %v1986
  %v1988 = vpop.f32.mrf.mxu0
  %1989 = vdwg.mxu0
  %v1990 = vsel %vm199, %v1786, 0
  %v1992 = vsel %vm199, %v1877, 0
  %1994 = vmatprep.subr.mxu0 0.0
  %1995 = vmatpush1.xpose.msra.mxu0 0.0
  %1996 = vmatprep.subr.mxu0 0.0
  %1997 = vmatpush1.xpose.msra.mxu0 0.0
  %1998 = vmatprep.subr.mxu0 0.0
  %1999 = vmatpush1.xpose.msra.mxu0 0.0
  %2000 = vmatprep.subr.mxu0 0.0
  %2001 = vmatpush1.xpose.msra.mxu0 0.0
  %2002 = vmatprep.subr.mxu0 0.0
  %2003 = vmatpush1.xpose.msra.mxu0 0.0
  %2004 = vmatprep.subr.mxu0 0.0
  %2005 = vmatpush1.xpose.msra.mxu0 0.0
  %2006 = vmatprep.subr.mxu0 0.0
  %2007 = vmatpush1.xpose.msra.mxu0 0.0
  %2008 = vmatprep.subr.mxu0 0.0
  %2009 = vmatpush1.xpose.msra.mxu0 0.0
  %2010 = vmatprep.subr.mxu0 0.0
  %2011 = vmatpush1.xpose.msra.mxu0 0.0
  %2012 = vmatprep.subr.mxu0 0.0
  %2013 = vmatpush1.xpose.msra.mxu0 0.0
  %2014 = vmatprep.subr.mxu0 0.0
  %2015 = vmatpush1.xpose.msra.mxu0 0.0
  %2016 = vmatprep.subr.mxu0 0.0
  %2017 = vmatpush1.xpose.msra.mxu0 0.0
  %2018 = vmatprep.subr.mxu0 0.0
  %2019 = vmatpush1.xpose.msra.mxu0 0.0
  %2020 = vmatprep.subr.mxu0 0.0
  %2021 = vmatpush1.xpose.msra.mxu0 0.0
  %2022 = vmatprep.subr.mxu0 0.0
  %2023 = vmatpush1.xpose.msra.mxu0 0.0
  %2024 = vmatprep.subr.mxu0 0.0
  %2025 = vmatpush1.xpose.msra.mxu0 %v1992
  %2026 = vmatprep.subr.mxu0 0.0
  %2027 = vmatpush2.xpose.msra.mxu0 0.0
  %2028 = vmatprep.subr.mxu0 0.0
  %2029 = vmatpush2.xpose.msra.mxu0 0.0
  %2030 = vmatprep.subr.mxu0 0.0
  %2031 = vmatpush2.xpose.msra.mxu0 0.0
  %2032 = vmatprep.subr.mxu0 0.0
  %2033 = vmatpush2.xpose.msra.mxu0 0.0
  %2034 = vmatprep.subr.mxu0 0.0
  %2035 = vmatpush2.xpose.msra.mxu0 0.0
  %2036 = vmatprep.subr.mxu0 0.0
  %2037 = vmatpush2.xpose.msra.mxu0 0.0
  %2038 = vmatprep.subr.mxu0 0.0
  %2039 = vmatpush2.xpose.msra.mxu0 0.0
  %2040 = vmatprep.subr.mxu0 0.0
  %2041 = vmatpush2.xpose.msra.mxu0 0.0
  %2042 = vmatprep.subr.mxu0 0.0
  %2043 = vmatpush2.xpose.msra.mxu0 0.0
  %2044 = vmatprep.subr.mxu0 0.0
  %2045 = vmatpush2.xpose.msra.mxu0 0.0
  %2046 = vmatprep.subr.mxu0 0.0
  %2047 = vmatpush2.xpose.msra.mxu0 0.0
  %2048 = vmatprep.subr.mxu0 0.0
  %2049 = vmatpush2.xpose.msra.mxu0 0.0
  %2050 = vmatprep.subr.mxu0 0.0
  %2051 = vmatpush2.xpose.msra.mxu0 0.0
  %2052 = vmatprep.subr.mxu0 0.0
  %2053 = vmatpush2.xpose.msra.mxu0 0.0
  %2054 = vmatprep.subr.mxu0 0.0
  %2055 = vmatpush2.xpose.msra.mxu0 0.0
  %2056 = vmatprep.subr.mxu0 0.0
  %2057 = vmatpush2.xpose.msra.mxu0 0.0
  %2058 = vmatprep.mubr.f32.mxu0 0.0
  %2059 = vmatmul.mubr.f32.gmra.mxu0 %v1990
  %v2060 = vpop.f32.mrf.mxu0
  %v2061 = vadd.f32 0.0, %v2060
  %v2062 = vpop.f32.mrf.mxu0
  %2063 = vdwg.mxu0
  %v2064 = vsel %vm199, %v1883, 0
  %v2066 = vsel %vm199, %v1897, 0
  %2068 = vmatprep.subr.mxu0 0.0
  %2069 = vmatpush1.xpose.msra.mxu0 0.0
  %2070 = vmatprep.subr.mxu0 0.0
  %2071 = vmatpush1.xpose.msra.mxu0 0.0
  %2072 = vmatprep.subr.mxu0 0.0
  %2073 = vmatpush1.xpose.msra.mxu0 0.0
  %2074 = vmatprep.subr.mxu0 0.0
  %2075 = vmatpush1.xpose.msra.mxu0 0.0
  %2076 = vmatprep.subr.mxu0 0.0
  %2077 = vmatpush1.xpose.msra.mxu0 0.0
  %2078 = vmatprep.subr.mxu0 0.0
  %2079 = vmatpush1.xpose.msra.mxu0 0.0
  %2080 = vmatprep.subr.mxu0 0.0
  %2081 = vmatpush1.xpose.msra.mxu0 0.0
  %2082 = vmatprep.subr.mxu0 0.0
  %2083 = vmatpush1.xpose.msra.mxu0 0.0
  %2084 = vmatprep.subr.mxu0 0.0
  %2085 = vmatpush1.xpose.msra.mxu0 0.0
  %2086 = vmatprep.subr.mxu0 0.0
  %2087 = vmatpush1.xpose.msra.mxu0 0.0
  %2088 = vmatprep.subr.mxu0 0.0
  %2089 = vmatpush1.xpose.msra.mxu0 0.0
  %2090 = vmatprep.subr.mxu0 0.0
  %2091 = vmatpush1.xpose.msra.mxu0 0.0
  %2092 = vmatprep.subr.mxu0 0.0
  %2093 = vmatpush1.xpose.msra.mxu0 0.0
  %2094 = vmatprep.subr.mxu0 0.0
  %2095 = vmatpush1.xpose.msra.mxu0 0.0
  %2096 = vmatprep.subr.mxu0 0.0
  %2097 = vmatpush1.xpose.msra.mxu0 0.0
  %2098 = vmatprep.subr.mxu0 0.0
  %2099 = vmatpush1.xpose.msra.mxu0 %v2066
  %2100 = vmatprep.subr.mxu0 0.0
  %2101 = vmatpush2.xpose.msra.mxu0 0.0
  %2102 = vmatprep.subr.mxu0 0.0
  %2103 = vmatpush2.xpose.msra.mxu0 0.0
  %2104 = vmatprep.subr.mxu0 0.0
  %2105 = vmatpush2.xpose.msra.mxu0 0.0
  %2106 = vmatprep.subr.mxu0 0.0
  %2107 = vmatpush2.xpose.msra.mxu0 0.0
  %2108 = vmatprep.subr.mxu0 0.0
  %2109 = vmatpush2.xpose.msra.mxu0 0.0
  %2110 = vmatprep.subr.mxu0 0.0
  %2111 = vmatpush2.xpose.msra.mxu0 0.0
  %2112 = vmatprep.subr.mxu0 0.0
  %2113 = vmatpush2.xpose.msra.mxu0 0.0
  %2114 = vmatprep.subr.mxu0 0.0
  %2115 = vmatpush2.xpose.msra.mxu0 0.0
  %2116 = vmatprep.subr.mxu0 0.0
  %2117 = vmatpush2.xpose.msra.mxu0 0.0
  %2118 = vmatprep.subr.mxu0 0.0
  %2119 = vmatpush2.xpose.msra.mxu0 0.0
  %2120 = vmatprep.subr.mxu0 0.0
  %2121 = vmatpush2.xpose.msra.mxu0 0.0
  %2122 = vmatprep.subr.mxu0 0.0
  %2123 = vmatpush2.xpose.msra.mxu0 0.0
  %2124 = vmatprep.subr.mxu0 0.0
  %2125 = vmatpush2.xpose.msra.mxu0 0.0
  %2126 = vmatprep.subr.mxu0 0.0
  %2127 = vmatpush2.xpose.msra.mxu0 0.0
  %2128 = vmatprep.subr.mxu0 0.0
  %2129 = vmatpush2.xpose.msra.mxu0 0.0
  %2130 = vmatprep.subr.mxu0 0.0
  %2131 = vmatpush2.xpose.msra.mxu0 0.0
  %2132 = vmatprep.mubr.f32.mxu0 0.0
  %2133 = vmatmul.mubr.f32.gmra.mxu0 %v2064
  %v2134 = vpop.f32.mrf.mxu0
  %v2135 = vadd.f32 0.0, %v2134
  %v2136 = vpop.f32.mrf.mxu0
  %2137 = vdwg.mxu0
  %v2138 = vsel %vm199, %v1885, 0
  %v2140 = vsel %vm199, %v1899, 0
  %2142 = vmatprep.subr.mxu0 0.0
  %2143 = vmatpush1.xpose.msra.mxu0 0.0
  %2144 = vmatprep.subr.mxu0 0.0
  %2145 = vmatpush1.xpose.msra.mxu0 0.0
  %2146 = vmatprep.subr.mxu0 0.0
  %2147 = vmatpush1.xpose.msra.mxu0 0.0
  %2148 = vmatprep.subr.mxu0 0.0
  %2149 = vmatpush1.xpose.msra.mxu0 0.0
  %2150 = vmatprep.subr.mxu0 0.0
  %2151 = vmatpush1.xpose.msra.mxu0 0.0
  %2152 = vmatprep.subr.mxu0 0.0
  %2153 = vmatpush1.xpose.msra.mxu0 0.0
  %2154 = vmatprep.subr.mxu0 0.0
  %2155 = vmatpush1.xpose.msra.mxu0 0.0
  %2156 = vmatprep.subr.mxu0 0.0
  %2157 = vmatpush1.xpose.msra.mxu0 0.0
  %2158 = vmatprep.subr.mxu0 0.0
  %2159 = vmatpush1.xpose.msra.mxu0 0.0
  %2160 = vmatprep.subr.mxu0 0.0
  %2161 = vmatpush1.xpose.msra.mxu0 0.0
  %2162 = vmatprep.subr.mxu0 0.0
  %2163 = vmatpush1.xpose.msra.mxu0 0.0
  %2164 = vmatprep.subr.mxu0 0.0
  %2165 = vmatpush1.xpose.msra.mxu0 0.0
  %2166 = vmatprep.subr.mxu0 0.0
  %2167 = vmatpush1.xpose.msra.mxu0 0.0
  %2168 = vmatprep.subr.mxu0 0.0
  %2169 = vmatpush1.xpose.msra.mxu0 0.0
  %2170 = vmatprep.subr.mxu0 0.0
  %2171 = vmatpush1.xpose.msra.mxu0 0.0
  %2172 = vmatprep.subr.mxu0 0.0
  %2173 = vmatpush1.xpose.msra.mxu0 %v2140
  %2174 = vmatprep.subr.mxu0 0.0
  %2175 = vmatpush2.xpose.msra.mxu0 0.0
  %2176 = vmatprep.subr.mxu0 0.0
  %2177 = vmatpush2.xpose.msra.mxu0 0.0
  %2178 = vmatprep.subr.mxu0 0.0
  %2179 = vmatpush2.xpose.msra.mxu0 0.0
  %2180 = vmatprep.subr.mxu0 0.0
  %2181 = vmatpush2.xpose.msra.mxu0 0.0
  %2182 = vmatprep.subr.mxu0 0.0
  %2183 = vmatpush2.xpose.msra.mxu0 0.0
  %2184 = vmatprep.subr.mxu0 0.0
  %2185 = vmatpush2.xpose.msra.mxu0 0.0
  %2186 = vmatprep.subr.mxu0 0.0
  %2187 = vmatpush2.xpose.msra.mxu0 0.0
  %2188 = vmatprep.subr.mxu0 0.0
  %2189 = vmatpush2.xpose.msra.mxu0 0.0
  %2190 = vmatprep.subr.mxu0 0.0
  %2191 = vmatpush2.xpose.msra.mxu0 0.0
  %2192 = vmatprep.subr.mxu0 0.0
  %2193 = vmatpush2.xpose.msra.mxu0 0.0
  %2194 = vmatprep.subr.mxu0 0.0
  %2195 = vmatpush2.xpose.msra.mxu0 0.0
  %2196 = vmatprep.subr.mxu0 0.0
  %2197 = vmatpush2.xpose.msra.mxu0 0.0
  %2198 = vmatprep.subr.mxu0 0.0
  %2199 = vmatpush2.xpose.msra.mxu0 0.0
  %2200 = vmatprep.subr.mxu0 0.0
  %2201 = vmatpush2.xpose.msra.mxu0 0.0
  %2202 = vmatprep.subr.mxu0 0.0
  %2203 = vmatpush2.xpose.msra.mxu0 0.0
  %2204 = vmatprep.subr.mxu0 0.0
  %2205 = vmatpush2.xpose.msra.mxu0 0.0
  %2206 = vmatprep.mubr.f32.mxu0 0.0
  %2207 = vmatmul.mubr.f32.gmra.mxu0 %v2138
  %v2208 = vpop.f32.mrf.mxu0
  %v2209 = vadd.f32 0.0, %v2208
  %v2210 = vpop.f32.mrf.mxu0
  %2211 = vdwg.mxu0
  %v2212 = vsel %vm199, %v1887, 0
  %v2214 = vsel %vm199, %v1901, 0
  %2216 = vmatprep.subr.mxu0 0.0
  %2217 = vmatpush1.xpose.msra.mxu0 0.0
  %2218 = vmatprep.subr.mxu0 0.0
  %2219 = vmatpush1.xpose.msra.mxu0 0.0
  %2220 = vmatprep.subr.mxu0 0.0
  %2221 = vmatpush1.xpose.msra.mxu0 0.0
  %2222 = vmatprep.subr.mxu0 0.0
  %2223 = vmatpush1.xpose.msra.mxu0 0.0
  %2224 = vmatprep.subr.mxu0 0.0
  %2225 = vmatpush1.xpose.msra.mxu0 0.0
  %2226 = vmatprep.subr.mxu0 0.0
  %2227 = vmatpush1.xpose.msra.mxu0 0.0
  %2228 = vmatprep.subr.mxu0 0.0
  %2229 = vmatpush1.xpose.msra.mxu0 0.0
  %2230 = vmatprep.subr.mxu0 0.0
  %2231 = vmatpush1.xpose.msra.mxu0 0.0
  %2232 = vmatprep.subr.mxu0 0.0
  %2233 = vmatpush1.xpose.msra.mxu0 0.0
  %2234 = vmatprep.subr.mxu0 0.0
  %2235 = vmatpush1.xpose.msra.mxu0 0.0
  %2236 = vmatprep.subr.mxu0 0.0
  %2237 = vmatpush1.xpose.msra.mxu0 0.0
  %2238 = vmatprep.subr.mxu0 0.0
  %2239 = vmatpush1.xpose.msra.mxu0 0.0
  %2240 = vmatprep.subr.mxu0 0.0
  %2241 = vmatpush1.xpose.msra.mxu0 0.0
  %2242 = vmatprep.subr.mxu0 0.0
  %2243 = vmatpush1.xpose.msra.mxu0 0.0
  %2244 = vmatprep.subr.mxu0 0.0
  %2245 = vmatpush1.xpose.msra.mxu0 0.0
  %2246 = vmatprep.subr.mxu0 0.0
  %2247 = vmatpush1.xpose.msra.mxu0 %v2214
  %2248 = vmatprep.subr.mxu0 0.0
  %2249 = vmatpush2.xpose.msra.mxu0 0.0
  %2250 = vmatprep.subr.mxu0 0.0
  %2251 = vmatpush2.xpose.msra.mxu0 0.0
  %2252 = vmatprep.subr.mxu0 0.0
  %2253 = vmatpush2.xpose.msra.mxu0 0.0
  %2254 = vmatprep.subr.mxu0 0.0
  %2255 = vmatpush2.xpose.msra.mxu0 0.0
  %2256 = vmatprep.subr.mxu0 0.0
  %2257 = vmatpush2.xpose.msra.mxu0 0.0
  %2258 = vmatprep.subr.mxu0 0.0
  %2259 = vmatpush2.xpose.msra.mxu0 0.0
  %2260 = vmatprep.subr.mxu0 0.0
  %2261 = vmatpush2.xpose.msra.mxu0 0.0
  %2262 = vmatprep.subr.mxu0 0.0
  %2263 = vmatpush2.xpose.msra.mxu0 0.0
  %2264 = vmatprep.subr.mxu0 0.0
  %2265 = vmatpush2.xpose.msra.mxu0 0.0
  %2266 = vmatprep.subr.mxu0 0.0
  %2267 = vmatpush2.xpose.msra.mxu0 0.0
  %2268 = vmatprep.subr.mxu0 0.0
  %2269 = vmatpush2.xpose.msra.mxu0 0.0
  %2270 = vmatprep.subr.mxu0 0.0
  %2271 = vmatpush2.xpose.msra.mxu0 0.0
  %2272 = vmatprep.subr.mxu0 0.0
  %2273 = vmatpush2.xpose.msra.mxu0 0.0
  %2274 = vmatprep.subr.mxu0 0.0
  %2275 = vmatpush2.xpose.msra.mxu0 0.0
  %2276 = vmatprep.subr.mxu0 0.0
  %2277 = vmatpush2.xpose.msra.mxu0 0.0
  %2278 = vmatprep.subr.mxu0 0.0
  %2279 = vmatpush2.xpose.msra.mxu0 0.0
  %2280 = vmatprep.mubr.f32.mxu0 0.0
  %2281 = vmatmul.mubr.f32.gmra.mxu0 %v2212
  %v2282 = vpop.f32.mrf.mxu0
  %v2283 = vadd.f32 0.0, %v2282
  %v2284 = vpop.f32.mrf.mxu0
  %2285 = vdwg.mxu0
  %v2286 = vsel %vm199, %v1889, 0
  %v2288 = vsel %vm199, %v1903, 0
  %2290 = vmatprep.subr.mxu0 0.0
  %2291 = vmatpush1.xpose.msra.mxu0 0.0
  %2292 = vmatprep.subr.mxu0 0.0
  %2293 = vmatpush1.xpose.msra.mxu0 0.0
  %2294 = vmatprep.subr.mxu0 0.0
  %2295 = vmatpush1.xpose.msra.mxu0 0.0
  %2296 = vmatprep.subr.mxu0 0.0
  %2297 = vmatpush1.xpose.msra.mxu0 0.0
  %2298 = vmatprep.subr.mxu0 0.0
  %2299 = vmatpush1.xpose.msra.mxu0 0.0
  %2300 = vmatprep.subr.mxu0 0.0
  %2301 = vmatpush1.xpose.msra.mxu0 0.0
  %2302 = vmatprep.subr.mxu0 0.0
  %2303 = vmatpush1.xpose.msra.mxu0 0.0
  %2304 = vmatprep.subr.mxu0 0.0
  %2305 = vmatpush1.xpose.msra.mxu0 0.0
  %2306 = vmatprep.subr.mxu0 0.0
  %2307 = vmatpush1.xpose.msra.mxu0 0.0
  %2308 = vmatprep.subr.mxu0 0.0
  %2309 = vmatpush1.xpose.msra.mxu0 0.0
  %2310 = vmatprep.subr.mxu0 0.0
  %2311 = vmatpush1.xpose.msra.mxu0 0.0
  %2312 = vmatprep.subr.mxu0 0.0
  %2313 = vmatpush1.xpose.msra.mxu0 0.0
  %2314 = vmatprep.subr.mxu0 0.0
  %2315 = vmatpush1.xpose.msra.mxu0 0.0
  %2316 = vmatprep.subr.mxu0 0.0
  %2317 = vmatpush1.xpose.msra.mxu0 0.0
  %2318 = vmatprep.subr.mxu0 0.0
  %2319 = vmatpush1.xpose.msra.mxu0 0.0
  %2320 = vmatprep.subr.mxu0 0.0
  %2321 = vmatpush1.xpose.msra.mxu0 %v2288
  %2322 = vmatprep.subr.mxu0 0.0
  %2323 = vmatpush2.xpose.msra.mxu0 0.0
  %2324 = vmatprep.subr.mxu0 0.0
  %2325 = vmatpush2.xpose.msra.mxu0 0.0
  %2326 = vmatprep.subr.mxu0 0.0
  %2327 = vmatpush2.xpose.msra.mxu0 0.0
  %2328 = vmatprep.subr.mxu0 0.0
  %2329 = vmatpush2.xpose.msra.mxu0 0.0
  %2330 = vmatprep.subr.mxu0 0.0
  %2331 = vmatpush2.xpose.msra.mxu0 0.0
  %2332 = vmatprep.subr.mxu0 0.0
  %2333 = vmatpush2.xpose.msra.mxu0 0.0
  %2334 = vmatprep.subr.mxu0 0.0
  %2335 = vmatpush2.xpose.msra.mxu0 0.0
  %2336 = vmatprep.subr.mxu0 0.0
  %2337 = vmatpush2.xpose.msra.mxu0 0.0
  %2338 = vmatprep.subr.mxu0 0.0
  %2339 = vmatpush2.xpose.msra.mxu0 0.0
  %2340 = vmatprep.subr.mxu0 0.0
  %2341 = vmatpush2.xpose.msra.mxu0 0.0
  %2342 = vmatprep.subr.mxu0 0.0
  %2343 = vmatpush2.xpose.msra.mxu0 0.0
  %2344 = vmatprep.subr.mxu0 0.0
  %2345 = vmatpush2.xpose.msra.mxu0 0.0
  %2346 = vmatprep.subr.mxu0 0.0
  %2347 = vmatpush2.xpose.msra.mxu0 0.0
  %2348 = vmatprep.subr.mxu0 0.0
  %2349 = vmatpush2.xpose.msra.mxu0 0.0
  %2350 = vmatprep.subr.mxu0 0.0
  %2351 = vmatpush2.xpose.msra.mxu0 0.0
  %2352 = vmatprep.subr.mxu0 0.0
  %2353 = vmatpush2.xpose.msra.mxu0 0.0
  %2354 = vmatprep.mubr.f32.mxu0 0.0
  %2355 = vmatmul.mubr.f32.gmra.mxu0 %v2286
  %v2356 = vpop.f32.mrf.mxu0
  %v2357 = vadd.f32 0.0, %v2356
  %v2358 = vpop.f32.mrf.mxu0
  %2359 = vdwg.mxu0
  %v2360 = vsel %vm199, %v1891, 0
  %v2362 = vsel %vm199, %v1905, 0
  %2364 = vmatprep.subr.mxu0 0.0
  %2365 = vmatpush1.xpose.msra.mxu0 0.0
  %2366 = vmatprep.subr.mxu0 0.0
  %2367 = vmatpush1.xpose.msra.mxu0 0.0
  %2368 = vmatprep.subr.mxu0 0.0
  %2369 = vmatpush1.xpose.msra.mxu0 0.0
  %2370 = vmatprep.subr.mxu0 0.0
  %2371 = vmatpush1.xpose.msra.mxu0 0.0
  %2372 = vmatprep.subr.mxu0 0.0
  %2373 = vmatpush1.xpose.msra.mxu0 0.0
  %2374 = vmatprep.subr.mxu0 0.0
  %2375 = vmatpush1.xpose.msra.mxu0 0.0
  %2376 = vmatprep.subr.mxu0 0.0
  %2377 = vmatpush1.xpose.msra.mxu0 0.0
  %2378 = vmatprep.subr.mxu0 0.0
  %2379 = vmatpush1.xpose.msra.mxu0 0.0
  %2380 = vmatprep.subr.mxu0 0.0
  %2381 = vmatpush1.xpose.msra.mxu0 0.0
  %2382 = vmatprep.subr.mxu0 0.0
  %2383 = vmatpush1.xpose.msra.mxu0 0.0
  %2384 = vmatprep.subr.mxu0 0.0
  %2385 = vmatpush1.xpose.msra.mxu0 0.0
  %2386 = vmatprep.subr.mxu0 0.0
  %2387 = vmatpush1.xpose.msra.mxu0 0.0
  %2388 = vmatprep.subr.mxu0 0.0
  %2389 = vmatpush1.xpose.msra.mxu0 0.0
  %2390 = vmatprep.subr.mxu0 0.0
  %2391 = vmatpush1.xpose.msra.mxu0 0.0
  %2392 = vmatprep.subr.mxu0 0.0
  %2393 = vmatpush1.xpose.msra.mxu0 0.0
  %2394 = vmatprep.subr.mxu0 0.0
  %2395 = vmatpush1.xpose.msra.mxu0 %v2362
  %2396 = vmatprep.subr.mxu0 0.0
  %2397 = vmatpush2.xpose.msra.mxu0 0.0
  %2398 = vmatprep.subr.mxu0 0.0
  %2399 = vmatpush2.xpose.msra.mxu0 0.0
  %2400 = vmatprep.subr.mxu0 0.0
  %2401 = vmatpush2.xpose.msra.mxu0 0.0
  %2402 = vmatprep.subr.mxu0 0.0
  %2403 = vmatpush2.xpose.msra.mxu0 0.0
  %2404 = vmatprep.subr.mxu0 0.0
  %2405 = vmatpush2.xpose.msra.mxu0 0.0
  %2406 = vmatprep.subr.mxu0 0.0
  %2407 = vmatpush2.xpose.msra.mxu0 0.0
  %2408 = vmatprep.subr.mxu0 0.0
  %2409 = vmatpush2.xpose.msra.mxu0 0.0
  %2410 = vmatprep.subr.mxu0 0.0
  %2411 = vmatpush2.xpose.msra.mxu0 0.0
  %2412 = vmatprep.subr.mxu0 0.0
  %2413 = vmatpush2.xpose.msra.mxu0 0.0
  %2414 = vmatprep.subr.mxu0 0.0
  %2415 = vmatpush2.xpose.msra.mxu0 0.0
  %2416 = vmatprep.subr.mxu0 0.0
  %2417 = vmatpush2.xpose.msra.mxu0 0.0
  %2418 = vmatprep.subr.mxu0 0.0
  %2419 = vmatpush2.xpose.msra.mxu0 0.0
  %2420 = vmatprep.subr.mxu0 0.0
  %2421 = vmatpush2.xpose.msra.mxu0 0.0
  %2422 = vmatprep.subr.mxu0 0.0
  %2423 = vmatpush2.xpose.msra.mxu0 0.0
  %2424 = vmatprep.subr.mxu0 0.0
  %2425 = vmatpush2.xpose.msra.mxu0 0.0
  %2426 = vmatprep.subr.mxu0 0.0
  %2427 = vmatpush2.xpose.msra.mxu0 0.0
  %2428 = vmatprep.mubr.f32.mxu0 0.0
  %2429 = vmatmul.mubr.f32.gmra.mxu0 %v2360
  %v2430 = vpop.f32.mrf.mxu0
  %v2431 = vadd.f32 0.0, %v2430
  %v2432 = vpop.f32.mrf.mxu0
  %2433 = vdwg.mxu0
  %v2434 = vsel %vm199, %v1893, 0
  %v2436 = vsel %vm199, %v1907, 0
  %2438 = vmatprep.subr.mxu0 0.0
  %2439 = vmatpush1.xpose.msra.mxu0 0.0
  %2440 = vmatprep.subr.mxu0 0.0
  %2441 = vmatpush1.xpose.msra.mxu0 0.0
  %2442 = vmatprep.subr.mxu0 0.0
  %2443 = vmatpush1.xpose.msra.mxu0 0.0
  %2444 = vmatprep.subr.mxu0 0.0
  %2445 = vmatpush1.xpose.msra.mxu0 0.0
  %2446 = vmatprep.subr.mxu0 0.0
  %2447 = vmatpush1.xpose.msra.mxu0 0.0
  %2448 = vmatprep.subr.mxu0 0.0
  %2449 = vmatpush1.xpose.msra.mxu0 0.0
  %2450 = vmatprep.subr.mxu0 0.0
  %2451 = vmatpush1.xpose.msra.mxu0 0.0
  %2452 = vmatprep.subr.mxu0 0.0
  %2453 = vmatpush1.xpose.msra.mxu0 0.0
  %2454 = vmatprep.subr.mxu0 0.0
  %2455 = vmatpush1.xpose.msra.mxu0 0.0
  %2456 = vmatprep.subr.mxu0 0.0
  %2457 = vmatpush1.xpose.msra.mxu0 0.0
  %2458 = vmatprep.subr.mxu0 0.0
  %2459 = vmatpush1.xpose.msra.mxu0 0.0
  %2460 = vmatprep.subr.mxu0 0.0
  %2461 = vmatpush1.xpose.msra.mxu0 0.0
  %2462 = vmatprep.subr.mxu0 0.0
  %2463 = vmatpush1.xpose.msra.mxu0 0.0
  %2464 = vmatprep.subr.mxu0 0.0
  %2465 = vmatpush1.xpose.msra.mxu0 0.0
  %2466 = vmatprep.subr.mxu0 0.0
  %2467 = vmatpush1.xpose.msra.mxu0 0.0
  %2468 = vmatprep.subr.mxu0 0.0
  %2469 = vmatpush1.xpose.msra.mxu0 %v2436
  %2470 = vmatprep.subr.mxu0 0.0
  %2471 = vmatpush2.xpose.msra.mxu0 0.0
  %2472 = vmatprep.subr.mxu0 0.0
  %2473 = vmatpush2.xpose.msra.mxu0 0.0
  %2474 = vmatprep.subr.mxu0 0.0
  %2475 = vmatpush2.xpose.msra.mxu0 0.0
  %2476 = vmatprep.subr.mxu0 0.0
  %2477 = vmatpush2.xpose.msra.mxu0 0.0
  %2478 = vmatprep.subr.mxu0 0.0
  %2479 = vmatpush2.xpose.msra.mxu0 0.0
  %2480 = vmatprep.subr.mxu0 0.0
  %2481 = vmatpush2.xpose.msra.mxu0 0.0
  %2482 = vmatprep.subr.mxu0 0.0
  %2483 = vmatpush2.xpose.msra.mxu0 0.0
  %2484 = vmatprep.subr.mxu0 0.0
  %2485 = vmatpush2.xpose.msra.mxu0 0.0
  %2486 = vmatprep.subr.mxu0 0.0
  %2487 = vmatpush2.xpose.msra.mxu0 0.0
  %2488 = vmatprep.subr.mxu0 0.0
  %2489 = vmatpush2.xpose.msra.mxu0 0.0
  %2490 = vmatprep.subr.mxu0 0.0
  %2491 = vmatpush2.xpose.msra.mxu0 0.0
  %2492 = vmatprep.subr.mxu0 0.0
  %2493 = vmatpush2.xpose.msra.mxu0 0.0
  %2494 = vmatprep.subr.mxu0 0.0
  %2495 = vmatpush2.xpose.msra.mxu0 0.0
  %2496 = vmatprep.subr.mxu0 0.0
  %2497 = vmatpush2.xpose.msra.mxu0 0.0
  %2498 = vmatprep.subr.mxu0 0.0
  %2499 = vmatpush2.xpose.msra.mxu0 0.0
  %2500 = vmatprep.subr.mxu0 0.0
  %2501 = vmatpush2.xpose.msra.mxu0 0.0
  %2502 = vmatprep.mubr.f32.mxu0 0.0
  %2503 = vmatmul.mubr.f32.gmra.mxu0 %v2434
  %v2504 = vpop.f32.mrf.mxu0
  %v2505 = vadd.f32 0.0, %v2504
  %v2506 = vpop.f32.mrf.mxu0
  %2507 = vdwg.mxu0
  %v2508 = vmul.f32 %v1987, 0.35355338
  %v2509 = vmul.f32 %v2061, 0.35355338
  %v2510 = vmul.f32 %v2135, 0.35355338
  %v2511 = vmul.f32 %v2209, 0.35355338
  %v2512 = vmul.f32 %v2283, 0.35355338
  %v2513 = vmul.f32 %v2357, 0.35355338
  %v2514 = vmul.f32 %v2431, 0.35355338
  %v2515 = vmul.f32 %v2505, 0.35355338
  %v2516 = vadd.f32 %v2508, %v1908
  %v2517 = vadd.f32 %v2509, %v1909
  %v2518 = vadd.f32 %v2510, %v1910
  %v2519 = vadd.f32 %v2511, %v1911
  %v2520 = vadd.f32 %v2512, %v1912
  %v2521 = vadd.f32 %v2513, %v1913
  %v2522 = vadd.f32 %v2514, %v1914
  %v2523 = vadd.f32 %v2515, %v1915
  %v2524 = vsel %vm199, %v2516, -inf
  %2525 = vmax.xlane.f32.xlu0 %v2524
  %v2526 = vpop.xlane.xlu0 %2525
  %v2527 = vsel %vm199, %v2517, -inf
  %2528 = vmax.xlane.f32.xlu0 %v2527
  %v2529 = vpop.xlane.xlu0 %2528
  %v2530 = vsel %vm199, %v2518, -inf
  %2531 = vmax.xlane.f32.xlu0 %v2530
  %v2532 = vpop.xlane.xlu0 %2531
  %v2533 = vsel %vm199, %v2519, -inf
  %2534 = vmax.xlane.f32.xlu0 %v2533
  %v2535 = vpop.xlane.xlu0 %2534
  %v2536 = vsel %vm199, %v2520, -inf
  %2537 = vmax.xlane.f32.xlu0 %v2536
  %v2538 = vpop.xlane.xlu0 %2537
  %v2539 = vsel %vm199, %v2521, -inf
  %2540 = vmax.xlane.f32.xlu0 %v2539
  %v2541 = vpop.xlane.xlu0 %2540
  %v2542 = vsel %vm199, %v2522, -inf
  %2543 = vmax.xlane.f32.xlu0 %v2542
  %v2544 = vpop.xlane.xlu0 %2543
  %v2545 = vsel %vm199, %v2523, -inf
  %2546 = vmax.xlane.f32.xlu0 %v2545
  %v2547 = vpop.xlane.xlu0 %2546
  %v2548 = vsub.f32 %v2516, %v2526
  %v2549 = vsub.f32 %v2517, %v2529
  %v2550 = vsub.f32 %v2518, %v2532
  %v2551 = vsub.f32 %v2519, %v2535
  %v2552 = vsub.f32 %v2520, %v2538
  %v2553 = vsub.f32 %v2521, %v2541
  %v2554 = vsub.f32 %v2522, %v2544
  %v2555 = vsub.f32 %v2523, %v2547
  %v2556 = vmul.f32 %v2548, 1.442695
  %v2557 = vpow.pop %v2556
  %v2558 = vmul.f32 %v2549, 1.442695
  %v2559 = vpow.pop %v2558
  %v2560 = vmul.f32 %v2550, 1.442695
  %v2561 = vpow.pop %v2560
  %v2562 = vmul.f32 %v2551, 1.442695
  %v2563 = vpow.pop %v2562
  %v2564 = vmul.f32 %v2552, 1.442695
  %v2565 = vpow.pop %v2564
  %v2566 = vmul.f32 %v2553, 1.442695
  %v2567 = vpow.pop %v2566
  %v2568 = vmul.f32 %v2554, 1.442695
  %v2569 = vpow.pop %v2568
  %v2570 = vmul.f32 %v2555, 1.442695
  %v2571 = vpow.pop %v2570
  %v2572 = vsel %vm199, %v2557, 0.0
  %2573 = vadd.xlane.f32.xlu0 %v2572
  %v2574 = vpop.xlane.xlu0 %2573
  %v2575 = vsel %vm199, %v2559, 0.0
  %2576 = vadd.xlane.f32.xlu0 %v2575
  %v2577 = vpop.xlane.xlu0 %2576
  %v2578 = vsel %vm199, %v2561, 0.0
  %2579 = vadd.xlane.f32.xlu0 %v2578
  %v2580 = vpop.xlane.xlu0 %2579
  %v2581 = vsel %vm199, %v2563, 0.0
  %2582 = vadd.xlane.f32.xlu0 %v2581
  %v2583 = vpop.xlane.xlu0 %2582
  %v2584 = vsel %vm199, %v2565, 0.0
  %2585 = vadd.xlane.f32.xlu0 %v2584
  %v2586 = vpop.xlane.xlu0 %2585
  %v2587 = vsel %vm199, %v2567, 0.0
  %2588 = vadd.xlane.f32.xlu0 %v2587
  %v2589 = vpop.xlane.xlu0 %2588
  %v2590 = vsel %vm199, %v2569, 0.0
  %2591 = vadd.xlane.f32.xlu0 %v2590
  %v2592 = vpop.xlane.xlu0 %2591
  %v2593 = vsel %vm199, %v2571, 0.0
  %2594 = vadd.xlane.f32.xlu0 %v2593
  %v2595 = vpop.xlane.xlu0 %2594
  %v2596 = vrcp.pop %v2574
  %v2597 = vrcp.pop %v2577
  %v2598 = vrcp.pop %v2580
  %v2599 = vrcp.pop %v2583
  %v2600 = vrcp.pop %v2586
  %v2601 = vrcp.pop %v2589
  %v2602 = vrcp.pop %v2592
  %v2603 = vrcp.pop %v2595
  %v2604 = vmul.f32 %v2557, %v2596
  %v2605 = vmul.f32 %v2559, %v2597
  %v2606 = vmul.f32 %v2561, %v2598
  %v2607 = vmul.f32 %v2563, %v2599
  %v2608 = vmul.f32 %v2565, %v2600
  %v2609 = vmul.f32 %v2567, %v2601
  %v2610 = vmul.f32 %v2569, %v2602
  %v2611 = vmul.f32 %v2571, %v2603
  %2612 = vrot.lane.b32.xlu0 %v1872, 96
  %v2613 = vpop.permute.xlu0 %2612
  %v2616 = vsel %vm199, %v2604, 0
  %2618 = vmatprep.subr.mxu0 0.0
  %2619 = vmatpush1.msra.mxu0 0.0
  %2620 = vmatprep.subr.mxu0 0.0
  %2621 = vmatpush1.msra.mxu0 0.0
  %2622 = vmatprep.subr.mxu0 0.0
  %2623 = vmatpush1.msra.mxu0 0.0
  %2624 = vmatprep.subr.mxu0 0.0
  %2625 = vmatpush1.msra.mxu0 0.0
  %2626 = vmatprep.subr.mxu0 0.0
  %2627 = vmatpush1.msra.mxu0 0.0
  %2628 = vmatprep.subr.mxu0 0.0
  %2629 = vmatpush1.msra.mxu0 0.0
  %2630 = vmatprep.subr.mxu0 0.0
  %2631 = vmatpush1.msra.mxu0 0.0
  %2632 = vmatprep.subr.mxu0 0.0
  %2633 = vmatpush1.msra.mxu0 0.0
  %2634 = vmatprep.subr.mxu0 0.0
  %2635 = vmatpush1.msra.mxu0 0.0
  %2636 = vmatprep.subr.mxu0 0.0
  %2637 = vmatpush1.msra.mxu0 0.0
  %2638 = vmatprep.subr.mxu0 0.0
  %2639 = vmatpush1.msra.mxu0 0.0
  %2640 = vmatprep.subr.mxu0 0.0
  %2641 = vmatpush1.msra.mxu0 0.0
  %2642 = vmatprep.subr.mxu0 0.0
  %2643 = vmatpush1.msra.mxu0 0.0
  %2644 = vmatprep.subr.mxu0 0.0
  %2645 = vmatpush1.msra.mxu0 0.0
  %2646 = vmatprep.subr.mxu0 0.0
  %2647 = vmatpush1.msra.mxu0 0.0
  %2648 = vmatprep.subr.mxu0 0.0
  %2649 = vmatpush1.msra.mxu0 %v2613
  %2650 = vmatprep.subr.mxu0 0.0
  %2651 = vmatpush2.msra.mxu0 0.0
  %2652 = vmatprep.subr.mxu0 0.0
  %2653 = vmatpush2.msra.mxu0 0.0
  %2654 = vmatprep.subr.mxu0 0.0
  %2655 = vmatpush2.msra.mxu0 0.0
  %2656 = vmatprep.subr.mxu0 0.0
  %2657 = vmatpush2.msra.mxu0 0.0
  %2658 = vmatprep.subr.mxu0 0.0
  %2659 = vmatpush2.msra.mxu0 0.0
  %2660 = vmatprep.subr.mxu0 0.0
  %2661 = vmatpush2.msra.mxu0 0.0
  %2662 = vmatprep.subr.mxu0 0.0
  %2663 = vmatpush2.msra.mxu0 0.0
  %2664 = vmatprep.subr.mxu0 0.0
  %2665 = vmatpush2.msra.mxu0 0.0
  %2666 = vmatprep.subr.mxu0 0.0
  %2667 = vmatpush2.msra.mxu0 0.0
  %2668 = vmatprep.subr.mxu0 0.0
  %2669 = vmatpush2.msra.mxu0 0.0
  %2670 = vmatprep.subr.mxu0 0.0
  %2671 = vmatpush2.msra.mxu0 0.0
  %2672 = vmatprep.subr.mxu0 0.0
  %2673 = vmatpush2.msra.mxu0 0.0
  %2674 = vmatprep.subr.mxu0 0.0
  %2675 = vmatpush2.msra.mxu0 0.0
  %2676 = vmatprep.subr.mxu0 0.0
  %2677 = vmatpush2.msra.mxu0 0.0
  %2678 = vmatprep.subr.mxu0 0.0
  %2679 = vmatpush2.msra.mxu0 0.0
  %2680 = vmatprep.subr.mxu0 0.0
  %2681 = vmatpush2.msra.mxu0 0.0
  %2682 = vmatprep.mubr.f32.mxu0 0.0
  %2683 = vmatmul.mubr.f32.gmra.mxu0 %v2616
  %v2684 = vpop.f32.mrf.mxu0
  %v2685 = vadd.f32 0.0, %v2684
  %v2686 = vpop.f32.mrf.mxu0
  %2687 = vdwg.mxu0
  %2688 = vrot.lane.b32.xlu0 %v1877, 96
  %v2689 = vpop.permute.xlu0 %2688
  %v2692 = vsel %vm199, %v2605, 0
  %2694 = vmatprep.subr.mxu0 0.0
  %2695 = vmatpush1.msra.mxu0 0.0
  %2696 = vmatprep.subr.mxu0 0.0
  %2697 = vmatpush1.msra.mxu0 0.0
  %2698 = vmatprep.subr.mxu0 0.0
  %2699 = vmatpush1.msra.mxu0 0.0
  %2700 = vmatprep.subr.mxu0 0.0
  %2701 = vmatpush1.msra.mxu0 0.0
  %2702 = vmatprep.subr.mxu0 0.0
  %2703 = vmatpush1.msra.mxu0 0.0
  %2704 = vmatprep.subr.mxu0 0.0
  %2705 = vmatpush1.msra.mxu0 0.0
  %2706 = vmatprep.subr.mxu0 0.0
  %2707 = vmatpush1.msra.mxu0 0.0
  %2708 = vmatprep.subr.mxu0 0.0
  %2709 = vmatpush1.msra.mxu0 0.0
  %2710 = vmatprep.subr.mxu0 0.0
  %2711 = vmatpush1.msra.mxu0 0.0
  %2712 = vmatprep.subr.mxu0 0.0
  %2713 = vmatpush1.msra.mxu0 0.0
  %2714 = vmatprep.subr.mxu0 0.0
  %2715 = vmatpush1.msra.mxu0 0.0
  %2716 = vmatprep.subr.mxu0 0.0
  %2717 = vmatpush1.msra.mxu0 0.0
  %2718 = vmatprep.subr.mxu0 0.0
  %2719 = vmatpush1.msra.mxu0 0.0
  %2720 = vmatprep.subr.mxu0 0.0
  %2721 = vmatpush1.msra.mxu0 0.0
  %2722 = vmatprep.subr.mxu0 0.0
  %2723 = vmatpush1.msra.mxu0 0.0
  %2724 = vmatprep.subr.mxu0 0.0
  %2725 = vmatpush1.msra.mxu0 %v2689
  %2726 = vmatprep.subr.mxu0 0.0
  %2727 = vmatpush2.msra.mxu0 0.0
  %2728 = vmatprep.subr.mxu0 0.0
  %2729 = vmatpush2.msra.mxu0 0.0
  %2730 = vmatprep.subr.mxu0 0.0
  %2731 = vmatpush2.msra.mxu0 0.0
  %2732 = vmatprep.subr.mxu0 0.0
  %2733 = vmatpush2.msra.mxu0 0.0
  %2734 = vmatprep.subr.mxu0 0.0
  %2735 = vmatpush2.msra.mxu0 0.0
  %2736 = vmatprep.subr.mxu0 0.0
  %2737 = vmatpush2.msra.mxu0 0.0
  %2738 = vmatprep.subr.mxu0 0.0
  %2739 = vmatpush2.msra.mxu0 0.0
  %2740 = vmatprep.subr.mxu0 0.0
  %2741 = vmatpush2.msra.mxu0 0.0
  %2742 = vmatprep.subr.mxu0 0.0
  %2743 = vmatpush2.msra.mxu0 0.0
  %2744 = vmatprep.subr.mxu0 0.0
  %2745 = vmatpush2.msra.mxu0 0.0
  %2746 = vmatprep.subr.mxu0 0.0
  %2747 = vmatpush2.msra.mxu0 0.0
  %2748 = vmatprep.subr.mxu0 0.0
  %2749 = vmatpush2.msra.mxu0 0.0
  %2750 = vmatprep.subr.mxu0 0.0
  %2751 = vmatpush2.msra.mxu0 0.0
  %2752 = vmatprep.subr.mxu0 0.0
  %2753 = vmatpush2.msra.mxu0 0.0
  %2754 = vmatprep.subr.mxu0 0.0
  %2755 = vmatpush2.msra.mxu0 0.0
  %2756 = vmatprep.subr.mxu0 0.0
  %2757 = vmatpush2.msra.mxu0 0.0
  %2758 = vmatprep.mubr.f32.mxu0 0.0
  %2759 = vmatmul.mubr.f32.gmra.mxu0 %v2692
  %v2760 = vpop.f32.mrf.mxu0
  %v2761 = vadd.f32 0.0, %v2760
  %v2762 = vpop.f32.mrf.mxu0
  %2763 = vdwg.mxu0
  %2764 = vrot.lane.b32.xlu0 %v1897, 96
  %v2765 = vpop.permute.xlu0 %2764
  %v2768 = vsel %vm199, %v2606, 0
  %2770 = vmatprep.subr.mxu0 0.0
  %2771 = vmatpush1.msra.mxu0 0.0
  %2772 = vmatprep.subr.mxu0 0.0
  %2773 = vmatpush1.msra.mxu0 0.0
  %2774 = vmatprep.subr.mxu0 0.0
  %2775 = vmatpush1.msra.mxu0 0.0
  %2776 = vmatprep.subr.mxu0 0.0
  %2777 = vmatpush1.msra.mxu0 0.0
  %2778 = vmatprep.subr.mxu0 0.0
  %2779 = vmatpush1.msra.mxu0 0.0
  %2780 = vmatprep.subr.mxu0 0.0
  %2781 = vmatpush1.msra.mxu0 0.0
  %2782 = vmatprep.subr.mxu0 0.0
  %2783 = vmatpush1.msra.mxu0 0.0
  %2784 = vmatprep.subr.mxu0 0.0
  %2785 = vmatpush1.msra.mxu0 0.0
  %2786 = vmatprep.subr.mxu0 0.0
  %2787 = vmatpush1.msra.mxu0 0.0
  %2788 = vmatprep.subr.mxu0 0.0
  %2789 = vmatpush1.msra.mxu0 0.0
  %2790 = vmatprep.subr.mxu0 0.0
  %2791 = vmatpush1.msra.mxu0 0.0
  %2792 = vmatprep.subr.mxu0 0.0
  %2793 = vmatpush1.msra.mxu0 0.0
  %2794 = vmatprep.subr.mxu0 0.0
  %2795 = vmatpush1.msra.mxu0 0.0
  %2796 = vmatprep.subr.mxu0 0.0
  %2797 = vmatpush1.msra.mxu0 0.0
  %2798 = vmatprep.subr.mxu0 0.0
  %2799 = vmatpush1.msra.mxu0 0.0
  %2800 = vmatprep.subr.mxu0 0.0
  %2801 = vmatpush1.msra.mxu0 %v2765
  %2802 = vmatprep.subr.mxu0 0.0
  %2803 = vmatpush2.msra.mxu0 0.0
  %2804 = vmatprep.subr.mxu0 0.0
  %2805 = vmatpush2.msra.mxu0 0.0
  %2806 = vmatprep.subr.mxu0 0.0
  %2807 = vmatpush2.msra.mxu0 0.0
  %2808 = vmatprep.subr.mxu0 0.0
  %2809 = vmatpush2.msra.mxu0 0.0
  %2810 = vmatprep.subr.mxu0 0.0
  %2811 = vmatpush2.msra.mxu0 0.0
  %2812 = vmatprep.subr.mxu0 0.0
  %2813 = vmatpush2.msra.mxu0 0.0
  %2814 = vmatprep.subr.mxu0 0.0
  %2815 = vmatpush2.msra.mxu0 0.0
  %2816 = vmatprep.subr.mxu0 0.0
  %2817 = vmatpush2.msra.mxu0 0.0
  %2818 = vmatprep.subr.mxu0 0.0
  %2819 = vmatpush2.msra.mxu0 0.0
  %2820 = vmatprep.subr.mxu0 0.0
  %2821 = vmatpush2.msra.mxu0 0.0
  %2822 = vmatprep.subr.mxu0 0.0
  %2823 = vmatpush2.msra.mxu0 0.0
  %2824 = vmatprep.subr.mxu0 0.0
  %2825 = vmatpush2.msra.mxu0 0.0
  %2826 = vmatprep.subr.mxu0 0.0
  %2827 = vmatpush2.msra.mxu0 0.0
  %2828 = vmatprep.subr.mxu0 0.0
  %2829 = vmatpush2.msra.mxu0 0.0
  %2830 = vmatprep.subr.mxu0 0.0
  %2831 = vmatpush2.msra.mxu0 0.0
  %2832 = vmatprep.subr.mxu0 0.0
  %2833 = vmatpush2.msra.mxu0 0.0
  %2834 = vmatprep.mubr.f32.mxu0 0.0
  %2835 = vmatmul.mubr.f32.gmra.mxu0 %v2768
  %v2836 = vpop.f32.mrf.mxu0
  %v2837 = vadd.f32 0.0, %v2836
  %v2838 = vpop.f32.mrf.mxu0
  %2839 = vdwg.mxu0
  %2840 = vrot.lane.b32.xlu0 %v1899, 96
  %v2841 = vpop.permute.xlu0 %2840
  %v2844 = vsel %vm199, %v2607, 0
  %2846 = vmatprep.subr.mxu0 0.0
  %2847 = vmatpush1.msra.mxu0 0.0
  %2848 = vmatprep.subr.mxu0 0.0
  %2849 = vmatpush1.msra.mxu0 0.0
  %2850 = vmatprep.subr.mxu0 0.0
  %2851 = vmatpush1.msra.mxu0 0.0
  %2852 = vmatprep.subr.mxu0 0.0
  %2853 = vmatpush1.msra.mxu0 0.0
  %2854 = vmatprep.subr.mxu0 0.0
  %2855 = vmatpush1.msra.mxu0 0.0
  %2856 = vmatprep.subr.mxu0 0.0
  %2857 = vmatpush1.msra.mxu0 0.0
  %2858 = vmatprep.subr.mxu0 0.0
  %2859 = vmatpush1.msra.mxu0 0.0
  %2860 = vmatprep.subr.mxu0 0.0
  %2861 = vmatpush1.msra.mxu0 0.0
  %2862 = vmatprep.subr.mxu0 0.0
  %2863 = vmatpush1.msra.mxu0 0.0
  %2864 = vmatprep.subr.mxu0 0.0
  %2865 = vmatpush1.msra.mxu0 0.0
  %2866 = vmatprep.subr.mxu0 0.0
  %2867 = vmatpush1.msra.mxu0 0.0
  %2868 = vmatprep.subr.mxu0 0.0
  %2869 = vmatpush1.msra.mxu0 0.0
  %2870 = vmatprep.subr.mxu0 0.0
  %2871 = vmatpush1.msra.mxu0 0.0
  %2872 = vmatprep.subr.mxu0 0.0
  %2873 = vmatpush1.msra.mxu0 0.0
  %2874 = vmatprep.subr.mxu0 0.0
  %2875 = vmatpush1.msra.mxu0 0.0
  %2876 = vmatprep.subr.mxu0 0.0
  %2877 = vmatpush1.msra.mxu0 %v2841
  %2878 = vmatprep.subr.mxu0 0.0
  %2879 = vmatpush2.msra.mxu0 0.0
  %2880 = vmatprep.subr.mxu0 0.0
  %2881 = vmatpush2.msra.mxu0 0.0
  %2882 = vmatprep.subr.mxu0 0.0
  %2883 = vmatpush2.msra.mxu0 0.0
  %2884 = vmatprep.subr.mxu0 0.0
  %2885 = vmatpush2.msra.mxu0 0.0
  %2886 = vmatprep.subr.mxu0 0.0
  %2887 = vmatpush2.msra.mxu0 0.0
  %2888 = vmatprep.subr.mxu0 0.0
  %2889 = vmatpush2.msra.mxu0 0.0
  %2890 = vmatprep.subr.mxu0 0.0
  %2891 = vmatpush2.msra.mxu0 0.0
  %2892 = vmatprep.subr.mxu0 0.0
  %2893 = vmatpush2.msra.mxu0 0.0
  %2894 = vmatprep.subr.mxu0 0.0
  %2895 = vmatpush2.msra.mxu0 0.0
  %2896 = vmatprep.subr.mxu0 0.0
  %2897 = vmatpush2.msra.mxu0 0.0
  %2898 = vmatprep.subr.mxu0 0.0
  %2899 = vmatpush2.msra.mxu0 0.0
  %2900 = vmatprep.subr.mxu0 0.0
  %2901 = vmatpush2.msra.mxu0 0.0
  %2902 = vmatprep.subr.mxu0 0.0
  %2903 = vmatpush2.msra.mxu0 0.0
  %2904 = vmatprep.subr.mxu0 0.0
  %2905 = vmatpush2.msra.mxu0 0.0
  %2906 = vmatprep.subr.mxu0 0.0
  %2907 = vmatpush2.msra.mxu0 0.0
  %2908 = vmatprep.subr.mxu0 0.0
  %2909 = vmatpush2.msra.mxu0 0.0
  %2910 = vmatprep.mubr.f32.mxu0 0.0
  %2911 = vmatmul.mubr.f32.gmra.mxu0 %v2844
  %v2912 = vpop.f32.mrf.mxu0
  %v2913 = vadd.f32 0.0, %v2912
  %v2914 = vpop.f32.mrf.mxu0
  %2915 = vdwg.mxu0
  %2916 = vrot.lane.b32.xlu0 %v1901, 96
  %v2917 = vpop.permute.xlu0 %2916
  %v2920 = vsel %vm199, %v2608, 0
  %2922 = vmatprep.subr.mxu0 0.0
  %2923 = vmatpush1.msra.mxu0 0.0
  %2924 = vmatprep.subr.mxu0 0.0
  %2925 = vmatpush1.msra.mxu0 0.0
  %2926 = vmatprep.subr.mxu0 0.0
  %2927 = vmatpush1.msra.mxu0 0.0
  %2928 = vmatprep.subr.mxu0 0.0
  %2929 = vmatpush1.msra.mxu0 0.0
  %2930 = vmatprep.subr.mxu0 0.0
  %2931 = vmatpush1.msra.mxu0 0.0
  %2932 = vmatprep.subr.mxu0 0.0
  %2933 = vmatpush1.msra.mxu0 0.0
  %2934 = vmatprep.subr.mxu0 0.0
  %2935 = vmatpush1.msra.mxu0 0.0
  %2936 = vmatprep.subr.mxu0 0.0
  %2937 = vmatpush1.msra.mxu0 0.0
  %2938 = vmatprep.subr.mxu0 0.0
  %2939 = vmatpush1.msra.mxu0 0.0
  %2940 = vmatprep.subr.mxu0 0.0
  %2941 = vmatpush1.msra.mxu0 0.0
  %2942 = vmatprep.subr.mxu0 0.0
  %2943 = vmatpush1.msra.mxu0 0.0
  %2944 = vmatprep.subr.mxu0 0.0
  %2945 = vmatpush1.msra.mxu0 0.0
  %2946 = vmatprep.subr.mxu0 0.0
  %2947 = vmatpush1.msra.mxu0 0.0
  %2948 = vmatprep.subr.mxu0 0.0
  %2949 = vmatpush1.msra.mxu0 0.0
  %2950 = vmatprep.subr.mxu0 0.0
  %2951 = vmatpush1.msra.mxu0 0.0
  %2952 = vmatprep.subr.mxu0 0.0
  %2953 = vmatpush1.msra.mxu0 %v2917
  %2954 = vmatprep.subr.mxu0 0.0
  %2955 = vmatpush2.msra.mxu0 0.0
  %2956 = vmatprep.subr.mxu0 0.0
  %2957 = vmatpush2.msra.mxu0 0.0
  %2958 = vmatprep.subr.mxu0 0.0
  %2959 = vmatpush2.msra.mxu0 0.0
  %2960 = vmatprep.subr.mxu0 0.0
  %2961 = vmatpush2.msra.mxu0 0.0
  %2962 = vmatprep.subr.mxu0 0.0
  %2963 = vmatpush2.msra.mxu0 0.0
  %2964 = vmatprep.subr.mxu0 0.0
  %2965 = vmatpush2.msra.mxu0 0.0
  %2966 = vmatprep.subr.mxu0 0.0
  %2967 = vmatpush2.msra.mxu0 0.0
  %2968 = vmatprep.subr.mxu0 0.0
  %2969 = vmatpush2.msra.mxu0 0.0
  %2970 = vmatprep.subr.mxu0 0.0
  %2971 = vmatpush2.msra.mxu0 0.0
  %2972 = vmatprep.subr.mxu0 0.0
  %2973 = vmatpush2.msra.mxu0 0.0
  %2974 = vmatprep.subr.mxu0 0.0
  %2975 = vmatpush2.msra.mxu0 0.0
  %2976 = vmatprep.subr.mxu0 0.0
  %2977 = vmatpush2.msra.mxu0 0.0
  %2978 = vmatprep.subr.mxu0 0.0
  %2979 = vmatpush2.msra.mxu0 0.0
  %2980 = vmatprep.subr.mxu0 0.0
  %2981 = vmatpush2.msra.mxu0 0.0
  %2982 = vmatprep.subr.mxu0 0.0
  %2983 = vmatpush2.msra.mxu0 0.0
  %2984 = vmatprep.subr.mxu0 0.0
  %2985 = vmatpush2.msra.mxu0 0.0
  %2986 = vmatprep.mubr.f32.mxu0 0.0
  %2987 = vmatmul.mubr.f32.gmra.mxu0 %v2920
  %v2988 = vpop.f32.mrf.mxu0
  %v2989 = vadd.f32 0.0, %v2988
  %v2990 = vpop.f32.mrf.mxu0
  %2991 = vdwg.mxu0
  %2992 = vrot.lane.b32.xlu0 %v1903, 96
  %v2993 = vpop.permute.xlu0 %2992
  %v2996 = vsel %vm199, %v2609, 0
  %2998 = vmatprep.subr.mxu0 0.0
  %2999 = vmatpush1.msra.mxu0 0.0
  %3000 = vmatprep.subr.mxu0 0.0
  %3001 = vmatpush1.msra.mxu0 0.0
  %3002 = vmatprep.subr.mxu0 0.0
  %3003 = vmatpush1.msra.mxu0 0.0
  %3004 = vmatprep.subr.mxu0 0.0
  %3005 = vmatpush1.msra.mxu0 0.0
  %3006 = vmatprep.subr.mxu0 0.0
  %3007 = vmatpush1.msra.mxu0 0.0
  %3008 = vmatprep.subr.mxu0 0.0
  %3009 = vmatpush1.msra.mxu0 0.0
  %3010 = vmatprep.subr.mxu0 0.0
  %3011 = vmatpush1.msra.mxu0 0.0
  %3012 = vmatprep.subr.mxu0 0.0
  %3013 = vmatpush1.msra.mxu0 0.0
  %3014 = vmatprep.subr.mxu0 0.0
  %3015 = vmatpush1.msra.mxu0 0.0
  %3016 = vmatprep.subr.mxu0 0.0
  %3017 = vmatpush1.msra.mxu0 0.0
  %3018 = vmatprep.subr.mxu0 0.0
  %3019 = vmatpush1.msra.mxu0 0.0
  %3020 = vmatprep.subr.mxu0 0.0
  %3021 = vmatpush1.msra.mxu0 0.0
  %3022 = vmatprep.subr.mxu0 0.0
  %3023 = vmatpush1.msra.mxu0 0.0
  %3024 = vmatprep.subr.mxu0 0.0
  %3025 = vmatpush1.msra.mxu0 0.0
  %3026 = vmatprep.subr.mxu0 0.0
  %3027 = vmatpush1.msra.mxu0 0.0
  %3028 = vmatprep.subr.mxu0 0.0
  %3029 = vmatpush1.msra.mxu0 %v2993
  %3030 = vmatprep.subr.mxu0 0.0
  %3031 = vmatpush2.msra.mxu0 0.0
  %3032 = vmatprep.subr.mxu0 0.0
  %3033 = vmatpush2.msra.mxu0 0.0
  %3034 = vmatprep.subr.mxu0 0.0
  %3035 = vmatpush2.msra.mxu0 0.0
  %3036 = vmatprep.subr.mxu0 0.0
  %3037 = vmatpush2.msra.mxu0 0.0
  %3038 = vmatprep.subr.mxu0 0.0
  %3039 = vmatpush2.msra.mxu0 0.0
  %3040 = vmatprep.subr.mxu0 0.0
  %3041 = vmatpush2.msra.mxu0 0.0
  %3042 = vmatprep.subr.mxu0 0.0
  %3043 = vmatpush2.msra.mxu0 0.0
  %3044 = vmatprep.subr.mxu0 0.0
  %3045 = vmatpush2.msra.mxu0 0.0
  %3046 = vmatprep.subr.mxu0 0.0
  %3047 = vmatpush2.msra.mxu0 0.0
  %3048 = vmatprep.subr.mxu0 0.0
  %3049 = vmatpush2.msra.mxu0 0.0
  %3050 = vmatprep.subr.mxu0 0.0
  %3051 = vmatpush2.msra.mxu0 0.0
  %3052 = vmatprep.subr.mxu0 0.0
  %3053 = vmatpush2.msra.mxu0 0.0
  %3054 = vmatprep.subr.mxu0 0.0
  %3055 = vmatpush2.msra.mxu0 0.0
  %3056 = vmatprep.subr.mxu0 0.0
  %3057 = vmatpush2.msra.mxu0 0.0
  %3058 = vmatprep.subr.mxu0 0.0
  %3059 = vmatpush2.msra.mxu0 0.0
  %3060 = vmatprep.subr.mxu0 0.0
  %3061 = vmatpush2.msra.mxu0 0.0
  %3062 = vmatprep.mubr.f32.mxu0 0.0
  %3063 = vmatmul.mubr.f32.gmra.mxu0 %v2996
  %v3064 = vpop.f32.mrf.mxu0
  %v3065 = vadd.f32 0.0, %v3064
  %v3066 = vpop.f32.mrf.mxu0
  %3067 = vdwg.mxu0
  %3068 = vrot.lane.b32.xlu0 %v1905, 96
  %v3069 = vpop.permute.xlu0 %3068
  %v3072 = vsel %vm199, %v2610, 0
  %3074 = vmatprep.subr.mxu0 0.0
  %3075 = vmatpush1.msra.mxu0 0.0
  %3076 = vmatprep.subr.mxu0 0.0
  %3077 = vmatpush1.msra.mxu0 0.0
  %3078 = vmatprep.subr.mxu0 0.0
  %3079 = vmatpush1.msra.mxu0 0.0
  %3080 = vmatprep.subr.mxu0 0.0
  %3081 = vmatpush1.msra.mxu0 0.0
  %3082 = vmatprep.subr.mxu0 0.0
  %3083 = vmatpush1.msra.mxu0 0.0
  %3084 = vmatprep.subr.mxu0 0.0
  %3085 = vmatpush1.msra.mxu0 0.0
  %3086 = vmatprep.subr.mxu0 0.0
  %3087 = vmatpush1.msra.mxu0 0.0
  %3088 = vmatprep.subr.mxu0 0.0
  %3089 = vmatpush1.msra.mxu0 0.0
  %3090 = vmatprep.subr.mxu0 0.0
  %3091 = vmatpush1.msra.mxu0 0.0
  %3092 = vmatprep.subr.mxu0 0.0
  %3093 = vmatpush1.msra.mxu0 0.0
  %3094 = vmatprep.subr.mxu0 0.0
  %3095 = vmatpush1.msra.mxu0 0.0
  %3096 = vmatprep.subr.mxu0 0.0
  %3097 = vmatpush1.msra.mxu0 0.0
  %3098 = vmatprep.subr.mxu0 0.0
  %3099 = vmatpush1.msra.mxu0 0.0
  %3100 = vmatprep.subr.mxu0 0.0
  %3101 = vmatpush1.msra.mxu0 0.0
  %3102 = vmatprep.subr.mxu0 0.0
  %3103 = vmatpush1.msra.mxu0 0.0
  %3104 = vmatprep.subr.mxu0 0.0
  %3105 = vmatpush1.msra.mxu0 %v3069
  %3106 = vmatprep.subr.mxu0 0.0
  %3107 = vmatpush2.msra.mxu0 0.0
  %3108 = vmatprep.subr.mxu0 0.0
  %3109 = vmatpush2.msra.mxu0 0.0
  %3110 = vmatprep.subr.mxu0 0.0
  %3111 = vmatpush2.msra.mxu0 0.0
  %3112 = vmatprep.subr.mxu0 0.0
  %3113 = vmatpush2.msra.mxu0 0.0
  %3114 = vmatprep.subr.mxu0 0.0
  %3115 = vmatpush2.msra.mxu0 0.0
  %3116 = vmatprep.subr.mxu0 0.0
  %3117 = vmatpush2.msra.mxu0 0.0
  %3118 = vmatprep.subr.mxu0 0.0
  %3119 = vmatpush2.msra.mxu0 0.0
  %3120 = vmatprep.subr.mxu0 0.0
  %3121 = vmatpush2.msra.mxu0 0.0
  %3122 = vmatprep.subr.mxu0 0.0
  %3123 = vmatpush2.msra.mxu0 0.0
  %3124 = vmatprep.subr.mxu0 0.0
  %3125 = vmatpush2.msra.mxu0 0.0
  %3126 = vmatprep.subr.mxu0 0.0
  %3127 = vmatpush2.msra.mxu0 0.0
  %3128 = vmatprep.subr.mxu0 0.0
  %3129 = vmatpush2.msra.mxu0 0.0
  %3130 = vmatprep.subr.mxu0 0.0
  %3131 = vmatpush2.msra.mxu0 0.0
  %3132 = vmatprep.subr.mxu0 0.0
  %3133 = vmatpush2.msra.mxu0 0.0
  %3134 = vmatprep.subr.mxu0 0.0
  %3135 = vmatpush2.msra.mxu0 0.0
  %3136 = vmatprep.subr.mxu0 0.0
  %3137 = vmatpush2.msra.mxu0 0.0
  %3138 = vmatprep.mubr.f32.mxu0 0.0
  %3139 = vmatmul.mubr.f32.gmra.mxu0 %v3072
  %v3140 = vpop.f32.mrf.mxu0
  %v3141 = vadd.f32 0.0, %v3140
  %v3142 = vpop.f32.mrf.mxu0
  %3143 = vdwg.mxu0
  %3144 = vrot.lane.b32.xlu0 %v1907, 96
  %v3145 = vpop.permute.xlu0 %3144
  %v3148 = vsel %vm199, %v2611, 0
  %3150 = vmatprep.subr.mxu0 0.0
  %3151 = vmatpush1.msra.mxu0 0.0
  %3152 = vmatprep.subr.mxu0 0.0
  %3153 = vmatpush1.msra.mxu0 0.0
  %3154 = vmatprep.subr.mxu0 0.0
  %3155 = vmatpush1.msra.mxu0 0.0
  %3156 = vmatprep.subr.mxu0 0.0
  %3157 = vmatpush1.msra.mxu0 0.0
  %3158 = vmatprep.subr.mxu0 0.0
  %3159 = vmatpush1.msra.mxu0 0.0
  %3160 = vmatprep.subr.mxu0 0.0
  %3161 = vmatpush1.msra.mxu0 0.0
  %3162 = vmatprep.subr.mxu0 0.0
  %3163 = vmatpush1.msra.mxu0 0.0
  %3164 = vmatprep.subr.mxu0 0.0
  %3165 = vmatpush1.msra.mxu0 0.0
  %3166 = vmatprep.subr.mxu0 0.0
  %3167 = vmatpush1.msra.mxu0 0.0
  %3168 = vmatprep.subr.mxu0 0.0
  %3169 = vmatpush1.msra.mxu0 0.0
  %3170 = vmatprep.subr.mxu0 0.0
  %3171 = vmatpush1.msra.mxu0 0.0
  %3172 = vmatprep.subr.mxu0 0.0
  %3173 = vmatpush1.msra.mxu0 0.0
  %3174 = vmatprep.subr.mxu0 0.0
  %3175 = vmatpush1.msra.mxu0 0.0
  %3176 = vmatprep.subr.mxu0 0.0
  %3177 = vmatpush1.msra.mxu0 0.0
  %3178 = vmatprep.subr.mxu0 0.0
  %3179 = vmatpush1.msra.mxu0 0.0
  %3180 = vmatprep.subr.mxu0 0.0
  %3181 = vmatpush1.msra.mxu0 %v3145
  %3182 = vmatprep.subr.mxu0 0.0
  %3183 = vmatpush2.msra.mxu0 0.0
  %3184 = vmatprep.subr.mxu0 0.0
  %3185 = vmatpush2.msra.mxu0 0.0
  %3186 = vmatprep.subr.mxu0 0.0
  %3187 = vmatpush2.msra.mxu0 0.0
  %3188 = vmatprep.subr.mxu0 0.0
  %3189 = vmatpush2.msra.mxu0 0.0
  %3190 = vmatprep.subr.mxu0 0.0
  %3191 = vmatpush2.msra.mxu0 0.0
  %3192 = vmatprep.subr.mxu0 0.0
  %3193 = vmatpush2.msra.mxu0 0.0
  %3194 = vmatprep.subr.mxu0 0.0
  %3195 = vmatpush2.msra.mxu0 0.0
  %3196 = vmatprep.subr.mxu0 0.0
  %3197 = vmatpush2.msra.mxu0 0.0
  %3198 = vmatprep.subr.mxu0 0.0
  %3199 = vmatpush2.msra.mxu0 0.0
  %3200 = vmatprep.subr.mxu0 0.0
  %3201 = vmatpush2.msra.mxu0 0.0
  %3202 = vmatprep.subr.mxu0 0.0
  %3203 = vmatpush2.msra.mxu0 0.0
  %3204 = vmatprep.subr.mxu0 0.0
  %3205 = vmatpush2.msra.mxu0 0.0
  %3206 = vmatprep.subr.mxu0 0.0
  %3207 = vmatpush2.msra.mxu0 0.0
  %3208 = vmatprep.subr.mxu0 0.0
  %3209 = vmatpush2.msra.mxu0 0.0
  %3210 = vmatprep.subr.mxu0 0.0
  %3211 = vmatpush2.msra.mxu0 0.0
  %3212 = vmatprep.subr.mxu0 0.0
  %3213 = vmatpush2.msra.mxu0 0.0
  %3214 = vmatprep.mubr.f32.mxu0 0.0
  %3215 = vmatmul.mubr.f32.gmra.mxu0 %v3148
  %v3216 = vpop.f32.mrf.mxu0
  %v3217 = vadd.f32 0.0, %v3216
  %v3218 = vpop.f32.mrf.mxu0
  %3219 = vdwg.mxu0
  %3222 = vrot.lane.b32.xlu0 %v2837, 8
  %v3223 = vpop.permute.xlu0 %3222
  %3224 = vrot.lane.b32.xlu0 %v2913, 8
  %v3225 = vpop.permute.xlu0 %3224
  %3230 = vrot.lane.b32.xlu0 %v2989, 16
  %v3231 = vpop.permute.xlu0 %3230
  %3232 = vrot.lane.b32.xlu0 %v3065, 16
  %v3233 = vpop.permute.xlu0 %3232
  %3238 = vrot.lane.b32.xlu0 %v3141, 24
  %v3239 = vpop.permute.xlu0 %3238
  %3240 = vrot.lane.b32.xlu0 %v3217, 24
  %v3241 = vpop.permute.xlu0 %3240
  %v3244 = vsel %vm199, %v2685, %v3223
  %v3245 = vsel %vm199, %v2761, %v3225
  %v3246 = vsel %vm1544, %v3244, %v3231
  %v3247 = vsel %vm1544, %v3245, %v3233
  %v3248 = vsel %vm1547, %v3246, %v3239
  %v3249 = vsel %vm1547, %v3247, %v3241
  %v3250 = vsel %vm1550, %v3248, 0.0
  %v3251 = vsel %vm1550, %v3249, 0.0
  %v3252 = vld [vmem:[%s4 + $0x20] sm:$0xff]
  %v3253 = vld [vmem:[%s4 + $0x58] sm:$0xff]
  %v3254 = vld [vmem:[%s4 + $0x90] sm:$0xff]
  %v3255 = vld [vmem:[%s4 + $0xc8] sm:$0xff]
  %v3256 = vld [vmem:[%s4 + $0x100] sm:$0xff]
  %v3257 = vld [vmem:[%s4 + $0x138] sm:$0xff]
  %v3258 = vld [vmem:[%s4 + $0x170] sm:$0xff]
  %v3259 = vld [vmem:[%s4 + $0x1a8] sm:$0xff]
  %v3260 = vld [vmem:[%s4 + $0x1e0] sm:$0xff]
  %v3261 = vld [vmem:[%s4 + $0x218] sm:$0xff]
  %v3262 = vld [vmem:[%s4 + $0x250] sm:$0xff]
  %v3263 = vld [vmem:[%s4 + $0x288] sm:$0xff]
  %v3264 = vld [vmem:[%s4 + $0x2c0] sm:$0xff]
  %v3265 = vld [vmem:[%s4 + $0x2f8] sm:$0xff]
  %v3266 = vld [vmem:[%s4 + $0x330] sm:$0xff]
  %v3267 = vld [vmem:[%s4 + $0x368] sm:$0xff]
  %3268 = vmatprep.subr.mxu0 0.0
  %3269 = vmatpush1.msra.mxu0 %v3267
  %3270 = vmatprep.subr.mxu0 0.0
  %3271 = vmatpush1.msra.mxu0 %v3266
  %3272 = vmatprep.subr.mxu0 0.0
  %3273 = vmatpush1.msra.mxu0 %v3265
  %3274 = vmatprep.subr.mxu0 0.0
  %3275 = vmatpush1.msra.mxu0 %v3264
  %3276 = vmatprep.subr.mxu0 0.0
  %3277 = vmatpush1.msra.mxu0 %v3263
  %3278 = vmatprep.subr.mxu0 0.0
  %3279 = vmatpush1.msra.mxu0 %v3262
  %3280 = vmatprep.subr.mxu0 0.0
  %3281 = vmatpush1.msra.mxu0 %v3261
  %3282 = vmatprep.subr.mxu0 0.0
  %3283 = vmatpush1.msra.mxu0 %v3260
  %3284 = vmatprep.subr.mxu0 0.0
  %3285 = vmatpush1.msra.mxu0 %v3259
  %3286 = vmatprep.subr.mxu0 0.0
  %3287 = vmatpush1.msra.mxu0 %v3258
  %3288 = vmatprep.subr.mxu0 0.0
  %3289 = vmatpush1.msra.mxu0 %v3257
  %3290 = vmatprep.subr.mxu0 0.0
  %3291 = vmatpush1.msra.mxu0 %v3256
  %3292 = vmatprep.subr.mxu0 0.0
  %3293 = vmatpush1.msra.mxu0 %v3255
  %3294 = vmatprep.subr.mxu0 0.0
  %3295 = vmatpush1.msra.mxu0 %v3254
  %3296 = vmatprep.subr.mxu0 0.0
  %3297 = vmatpush1.msra.mxu0 %v3253
  %3298 = vmatprep.subr.mxu0 0.0
  %3299 = vmatpush1.msra.mxu0 %v3252
  %3300 = vmatprep.subr.mxu0 0.0
  %3301 = vmatpush2.msra.mxu0 0.0
  %3302 = vmatprep.subr.mxu0 0.0
  %3303 = vmatpush2.msra.mxu0 0.0
  %3304 = vmatprep.subr.mxu0 0.0
  %3305 = vmatpush2.msra.mxu0 0.0
  %3306 = vmatprep.subr.mxu0 0.0
  %3307 = vmatpush2.msra.mxu0 0.0
  %3308 = vmatprep.subr.mxu0 0.0
  %3309 = vmatpush2.msra.mxu0 0.0
  %3310 = vmatprep.subr.mxu0 0.0
  %3311 = vmatpush2.msra.mxu0 0.0
  %3312 = vmatprep.subr.mxu0 0.0
  %3313 = vmatpush2.msra.mxu0 0.0
  %3314 = vmatprep.subr.mxu0 0.0
  %3315 = vmatpush2.msra.mxu0 0.0
  %3316 = vmatprep.subr.mxu0 0.0
  %3317 = vmatpush2.msra.mxu0 0.0
  %3318 = vmatprep.subr.mxu0 0.0
  %3319 = vmatpush2.msra.mxu0 0.0
  %3320 = vmatprep.subr.mxu0 0.0
  %3321 = vmatpush2.msra.mxu0 0.0
  %3322 = vmatprep.subr.mxu0 0.0
  %3323 = vmatpush2.msra.mxu0 0.0
  %3324 = vmatprep.subr.mxu0 0.0
  %3325 = vmatpush2.msra.mxu0 0.0
  %3326 = vmatprep.subr.mxu0 0.0
  %3327 = vmatpush2.msra.mxu0 0.0
  %3328 = vmatprep.subr.mxu0 0.0
  %3329 = vmatpush2.msra.mxu0 0.0
  %3330 = vmatprep.subr.mxu0 0.0
  %3331 = vmatpush2.msra.mxu0 0.0
  %3332 = vmatprep.mubr.f32.mxu0 0.0
  %3333 = vmatmul.mubr.f32.gmra.mxu0 %v3250
  %v3334 = vpop.f32.mrf.mxu0
  %v3335 = vadd.f32 0.0, %v3334
  %v3336 = vpop.f32.mrf.mxu0
  %3337 = vmatprep.mubr.f32.mxu0 0.0
  %3338 = vmatmul.mubr.f32.gmra.mxu0 %v3251
  %v3339 = vpop.f32.mrf.mxu0
  %v3340 = vadd.f32 0.0, %v3339
  %v3341 = vpop.f32.mrf.mxu0
  %3342 = vdwg.mxu0
  %v3343 = vadd.f32 %v1644, %v3335
  %v3344 = vadd.f32 %v1645, %v3340
  %v3345 = vld [vmem:[%s5 + $0x4] sm:$0x1]
  %v3346 = vld [vmem:[%s5 + $0x5] sm:$0x1]
  %3347 = vadd.xlane.f32.xlu0 %v3343
  %v3348 = vpop.xlane.xlu0 %3347
  %3349 = vadd.xlane.f32.xlu0 %v3344
  %v3350 = vpop.xlane.xlu0 %3349
  %v3351 = vmul.f32 %v3348, 0.03125
  %v3352 = vmul.f32 %v3350, 0.03125
  %v3353 = vsub.f32 %v3343, %v3351
  %v3354 = vsub.f32 %v3344, %v3352
  %v3355 = vmul.f32 %v3353, %v41
  %v3356 = vmul.f32 %v3354, %v41
  %v3357 = vmul.f32 %v3355, %v3355
  %v3358 = vmul.f32 %v3356, %v3356
  %3359 = vadd.xlane.f32.xlu0 %v3357
  %v3360 = vpop.xlane.xlu0 %3359
  %3361 = vadd.xlane.f32.xlu0 %v3358
  %v3362 = vpop.xlane.xlu0 %3361
  %v3363 = vmul.f32 %v3360, 0.032258064
  %v3364 = vmul.f32 %v3362, 0.032258064
  %v3365 = vrsqrt.pop %v3363
  %v3366 = vmul.f32 %v3363, %v3365
  %vm3367 = vcmp.eq.f32.partialorder %v3363, inf
  %v3368 = vsel %vm3367, %v3363, %v3366
  %vm3369 = vcmp.eq.f32.partialorder %v3363, 0.0
  %v3370 = vand.u32 %v3363, 2147483648
  %v3371 = vsel %vm3369, %v3370, %v3368
  %v3372 = vrsqrt.pop %v3364
  %v3373 = vmul.f32 %v3364, %v3372
  %vm3374 = vcmp.eq.f32.partialorder %v3364, inf
  %v3375 = vsel %vm3374, %v3364, %v3373
  %vm3376 = vcmp.eq.f32.partialorder %v3364, 0.0
  %v3377 = vand.u32 %v3364, 2147483648
  %v3378 = vsel %vm3376, %v3377, %v3375
  %v3379 = vadd.f32 %v3371, 1e-06
  %v3380 = vadd.f32 %v3378, 1e-06
  %v3381 = vrcp.pop %v3379
  %v3382 = vrcp.pop %v3380
  %v3383 = vmul.f32 %v3355, %v3381
  %v3384 = vmul.f32 %v3356, %v3382
  %v3385 = vlaneseq
  %v3386 = vshrl.u32 %v3385, 7
  %v3387 = vsub.s32 0, %v3386
  %v3388 = vrot.slane %v3345, %v3387
  %v3389 = vmul.f32 %v3388, %v3383
  %v3390 = vmul.f32 %v3388, %v3384
  %v3391 = vlaneseq
  %v3392 = vshrl.u32 %v3391, 7
  %v3393 = vsub.s32 0, %v3392
  %v3394 = vrot.slane %v3346, %v3393
  %v3395 = vadd.f32 %v3389, %v3394
  %v3396 = vadd.f32 %v3390, %v3394
  %v3397 = vld [vmem:[%s4 + $0x28] sm:$0xff]
  %v3398 = vld [vmem:[%s4 + $0x60] sm:$0xff]
  %v3399 = vld [vmem:[%s4 + $0x98] sm:$0xff]
  %v3400 = vld [vmem:[%s4 + $0xd0] sm:$0xff]
  %v3401 = vld [vmem:[%s4 + $0x108] sm:$0xff]
  %v3402 = vld [vmem:[%s4 + $0x140] sm:$0xff]
  %v3403 = vld [vmem:[%s4 + $0x178] sm:$0xff]
  %v3404 = vld [vmem:[%s4 + $0x1b0] sm:$0xff]
  %v3405 = vld [vmem:[%s4 + $0x1e8] sm:$0xff]
  %v3406 = vld [vmem:[%s4 + $0x220] sm:$0xff]
  %v3407 = vld [vmem:[%s4 + $0x258] sm:$0xff]
  %v3408 = vld [vmem:[%s4 + $0x290] sm:$0xff]
  %v3409 = vld [vmem:[%s4 + $0x2c8] sm:$0xff]
  %v3410 = vld [vmem:[%s4 + $0x300] sm:$0xff]
  %v3411 = vld [vmem:[%s4 + $0x338] sm:$0xff]
  %v3412 = vld [vmem:[%s4 + $0x370] sm:$0xff]
  %v3413 = vld [vmem:[%s5 + $0x6] sm:$0x1]
  %v3414 = vlaneseq
  %v3415 = vshrl.u32 %v3414, 7
  %v3416 = vsub.s32 0, %v3415
  %v3417 = vrot.slane %v3413, %v3416
  %3418 = vmatprep.subr.mxu0 0.0
  %3419 = vmatpush1.msra.mxu0 %v3412
  %3420 = vmatprep.subr.mxu0 0.0
  %3421 = vmatpush1.msra.mxu0 %v3411
  %3422 = vmatprep.subr.mxu0 0.0
  %3423 = vmatpush1.msra.mxu0 %v3410
  %3424 = vmatprep.subr.mxu0 0.0
  %3425 = vmatpush1.msra.mxu0 %v3409
  %3426 = vmatprep.subr.mxu0 0.0
  %3427 = vmatpush1.msra.mxu0 %v3408
  %3428 = vmatprep.subr.mxu0 0.0
  %3429 = vmatpush1.msra.mxu0 %v3407
  %3430 = vmatprep.subr.mxu0 0.0
  %3431 = vmatpush1.msra.mxu0 %v3406
  %3432 = vmatprep.subr.mxu0 0.0
  %3433 = vmatpush1.msra.mxu0 %v3405
  %3434 = vmatprep.subr.mxu0 0.0
  %3435 = vmatpush1.msra.mxu0 %v3404
  %3436 = vmatprep.subr.mxu0 0.0
  %3437 = vmatpush1.msra.mxu0 %v3403
  %3438 = vmatprep.subr.mxu0 0.0
  %3439 = vmatpush1.msra.mxu0 %v3402
  %3440 = vmatprep.subr.mxu0 0.0
  %3441 = vmatpush1.msra.mxu0 %v3401
  %3442 = vmatprep.subr.mxu0 0.0
  %3443 = vmatpush1.msra.mxu0 %v3400
  %3444 = vmatprep.subr.mxu0 0.0
  %3445 = vmatpush1.msra.mxu0 %v3399
  %3446 = vmatprep.subr.mxu0 0.0
  %3447 = vmatpush1.msra.mxu0 %v3398
  %3448 = vmatprep.subr.mxu0 0.0
  %3449 = vmatpush1.msra.mxu0 %v3397
  %3450 = vmatprep.subr.mxu0 0.0
  %3451 = vmatpush2.msra.mxu0 0.0
  %3452 = vmatprep.subr.mxu0 0.0
  %3453 = vmatpush2.msra.mxu0 0.0
  %3454 = vmatprep.subr.mxu0 0.0
  %3455 = vmatpush2.msra.mxu0 0.0
  %3456 = vmatprep.subr.mxu0 0.0
  %3457 = vmatpush2.msra.mxu0 0.0
  %3458 = vmatprep.subr.mxu0 0.0
  %3459 = vmatpush2.msra.mxu0 0.0
  %3460 = vmatprep.subr.mxu0 0.0
  %3461 = vmatpush2.msra.mxu0 0.0
  %3462 = vmatprep.subr.mxu0 0.0
  %3463 = vmatpush2.msra.mxu0 0.0
  %3464 = vmatprep.subr.mxu0 0.0
  %3465 = vmatpush2.msra.mxu0 0.0
  %3466 = vmatprep.subr.mxu0 0.0
  %3467 = vmatpush2.msra.mxu0 0.0
  %3468 = vmatprep.subr.mxu0 0.0
  %3469 = vmatpush2.msra.mxu0 0.0
  %3470 = vmatprep.subr.mxu0 0.0
  %3471 = vmatpush2.msra.mxu0 0.0
  %3472 = vmatprep.subr.mxu0 0.0
  %3473 = vmatpush2.msra.mxu0 0.0
  %3474 = vmatprep.subr.mxu0 0.0
  %3475 = vmatpush2.msra.mxu0 0.0
  %3476 = vmatprep.subr.mxu0 0.0
  %3477 = vmatpush2.msra.mxu0 0.0
  %3478 = vmatprep.subr.mxu0 0.0
  %3479 = vmatpush2.msra.mxu0 0.0
  %3480 = vmatprep.subr.mxu0 0.0
  %3481 = vmatpush2.msra.mxu0 0.0
  %3482 = vmatprep.mubr.f32.mxu0 0.0
  %3483 = vmatmul.mubr.f32.gmra.mxu0 %v3395
  %v3484 = vpop.f32.mrf.mxu0
  %v3485 = vadd.f32 %v3417, %v3484
  %v3486 = vpop.f32.mrf.mxu0
  %3487 = vmatprep.mubr.f32.mxu0 0.0
  %3488 = vmatmul.mubr.f32.gmra.mxu0 %v3396
  %v3489 = vpop.f32.mrf.mxu0
  %v3490 = vadd.f32 %v3417, %v3489
  %v3491 = vpop.f32.mrf.mxu0
  %3492 = vdwg.mxu0
  %v3493 = vmax.f32 %v3485, 0.0
  %v3494 = vmax.f32 %v3490, 0.0
  %v3495 = vld [vmem:[%s4 + $0x30] sm:$0xff]
  %v3496 = vld [vmem:[%s4 + $0x68] sm:$0xff]
  %v3497 = vld [vmem:[%s4 + $0xa0] sm:$0xff]
  %v3498 = vld [vmem:[%s4 + $0xd8] sm:$0xff]
  %v3499 = vld [vmem:[%s4 + $0x110] sm:$0xff]
  %v3500 = vld [vmem:[%s4 + $0x148] sm:$0xff]
  %v3501 = vld [vmem:[%s4 + $0x180] sm:$0xff]
  %v3502 = vld [vmem:[%s4 + $0x1b8] sm:$0xff]
  %v3503 = vld [vmem:[%s4 + $0x1f0] sm:$0xff]
  %v3504 = vld [vmem:[%s4 + $0x228] sm:$0xff]
  %v3505 = vld [vmem:[%s4 + $0x260] sm:$0xff]
  %v3506 = vld [vmem:[%s4 + $0x298] sm:$0xff]
  %v3507 = vld [vmem:[%s4 + $0x2d0] sm:$0xff]
  %v3508 = vld [vmem:[%s4 + $0x308] sm:$0xff]
  %v3509 = vld [vmem:[%s4 + $0x340] sm:$0xff]
  %v3510 = vld [vmem:[%s4 + $0x378] sm:$0xff]
  %3511 = vmatprep.subr.mxu0 0.0
  %3512 = vmatpush1.msra.mxu0 %v3510
  %3513 = vmatprep.subr.mxu0 0.0
  %3514 = vmatpush1.msra.mxu0 %v3509
  %3515 = vmatprep.subr.mxu0 0.0
  %3516 = vmatpush1.msra.mxu0 %v3508
  %3517 = vmatprep.subr.mxu0 0.0
  %3518 = vmatpush1.msra.mxu0 %v3507
  %3519 = vmatprep.subr.mxu0 0.0
  %3520 = vmatpush1.msra.mxu0 %v3506
  %3521 = vmatprep.subr.mxu0 0.0
  %3522 = vmatpush1.msra.mxu0 %v3505
  %3523 = vmatprep.subr.mxu0 0.0
  %3524 = vmatpush1.msra.mxu0 %v3504
  %3525 = vmatprep.subr.mxu0 0.0
  %3526 = vmatpush1.msra.mxu0 %v3503
  %3527 = vmatprep.subr.mxu0 0.0
  %3528 = vmatpush1.msra.mxu0 %v3502
  %3529 = vmatprep.subr.mxu0 0.0
  %3530 = vmatpush1.msra.mxu0 %v3501
  %3531 = vmatprep.subr.mxu0 0.0
  %3532 = vmatpush1.msra.mxu0 %v3500
  %3533 = vmatprep.subr.mxu0 0.0
  %3534 = vmatpush1.msra.mxu0 %v3499
  %3535 = vmatprep.subr.mxu0 0.0
  %3536 = vmatpush1.msra.mxu0 %v3498
  %3537 = vmatprep.subr.mxu0 0.0
  %3538 = vmatpush1.msra.mxu0 %v3497
  %3539 = vmatprep.subr.mxu0 0.0
  %3540 = vmatpush1.msra.mxu0 %v3496
  %3541 = vmatprep.subr.mxu0 0.0
  %3542 = vmatpush1.msra.mxu0 %v3495
  %3543 = vmatprep.subr.mxu0 0.0
  %3544 = vmatpush2.msra.mxu0 0.0
  %3545 = vmatprep.subr.mxu0 0.0
  %3546 = vmatpush2.msra.mxu0 0.0
  %3547 = vmatprep.subr.mxu0 0.0
  %3548 = vmatpush2.msra.mxu0 0.0
  %3549 = vmatprep.subr.mxu0 0.0
  %3550 = vmatpush2.msra.mxu0 0.0
  %3551 = vmatprep.subr.mxu0 0.0
  %3552 = vmatpush2.msra.mxu0 0.0
  %3553 = vmatprep.subr.mxu0 0.0
  %3554 = vmatpush2.msra.mxu0 0.0
  %3555 = vmatprep.subr.mxu0 0.0
  %3556 = vmatpush2.msra.mxu0 0.0
  %3557 = vmatprep.subr.mxu0 0.0
  %3558 = vmatpush2.msra.mxu0 0.0
  %3559 = vmatprep.subr.mxu0 0.0
  %3560 = vmatpush2.msra.mxu0 0.0
  %3561 = vmatprep.subr.mxu0 0.0
  %3562 = vmatpush2.msra.mxu0 0.0
  %3563 = vmatprep.subr.mxu0 0.0
  %3564 = vmatpush2.msra.mxu0 0.0
  %3565 = vmatprep.subr.mxu0 0.0
  %3566 = vmatpush2.msra.mxu0 0.0
  %3567 = vmatprep.subr.mxu0 0.0
  %3568 = vmatpush2.msra.mxu0 0.0
  %3569 = vmatprep.subr.mxu0 0.0
  %3570 = vmatpush2.msra.mxu0 0.0
  %3571 = vmatprep.subr.mxu0 0.0
  %3572 = vmatpush2.msra.mxu0 0.0
  %3573 = vmatprep.subr.mxu0 0.0
  %3574 = vmatpush2.msra.mxu0 0.0
  %3575 = vmatprep.mubr.f32.mxu0 0.0
  %3576 = vmatmul.mubr.f32.gmra.mxu0 %v3493
  %v3577 = vpop.f32.mrf.mxu0
  %v3578 = vadd.f32 0.0, %v3577
  %v3579 = vpop.f32.mrf.mxu0
  %3580 = vmatprep.mubr.f32.mxu0 0.0
  %3581 = vmatmul.mubr.f32.gmra.mxu0 %v3494
  %v3582 = vpop.f32.mrf.mxu0
  %v3583 = vadd.f32 0.0, %v3582
  %v3584 = vpop.f32.mrf.mxu0
  %3585 = vdwg.mxu0
  %v3586 = vadd.f32 %v3343, %v3578
  %v3587 = vadd.f32 %v3344, %v3583
  %v3588 = vld [vmem:[%s5 + $0x7] sm:$0x1]
  %v3589 = vlaneseq
  %v3590 = vshrl.u32 %v3589, 7
  %v3591 = vsub.s32 0, %v3590
  %v3592 = vrot.slane %v3588, %v3591
  %v3593 = vadd.f32 %v3586, %v3592
  %v3594 = vadd.f32 %v3587, %v3592
  %3595 = vst [vmem:[%s6] sm:$0xff] %v3593
  %3596 = vst [vmem:[%s6 + $0x8] sm:$0xff] %v3594
  // Predicated region
  $region26: #{decoder_block.1} parent=0 // pred_check
    _
  $region27: #{decoder_block.1} parent=0 // pred_check_branch
    %3598 = sbr.rel (0) target = $region29
  $region28: #{decoder_block.1} parent=0 // pred_region
    _
  $region29: #{decoder_block.1} parent=0 // pred_fallthru
    _
  // Predicated region
  $region30: #{decoder_block.1} parent=0 // pred_check
    _
  $region31: #{decoder_block.1} parent=0 // pred_check_branch
    %3600 = sbr.rel (0) target = $region33
  $region32: #{decoder_block.1} parent=0 // pred_region
    _
  $region33: #{decoder_block.1} parent=0 // pred_fallthru
    _

</llo_original>
